<compile_context>
chip_gen: v7x
topology: tpu7x:2x2x1
jax: 0.10.0
libtpu: 0.0.40
codegen_flags: <defaults>
</compile_context>

<pallas_src>
import math

import jax
import jax.numpy as jnp
import numpy as np
from jax.experimental import pallas as pl
from jax.experimental.pallas import tpu as pltpu

_LEAKY_SLOPE = 0.01        # nn.LeakyReLU() default negative slope
_LANES = 128               # TPU vreg lane count
_WROW_ALIGN = 16           # bf16 sublane tile height: packed matrices start tile-aligned
_TCN_CHANNELS = (10, 16, 32, 64)
_TCN_K = 3


def _conv_is_im2col(cin, k):
    """A K-tap conv is packed/executed as ONE im2col matmul only when each shifted
    view is a whole number of 128-lane tiles (the lane concat is then free)."""
    return k > 1 and cin % _LANES == 0


# ---------------------------------------------------------------------------
# Parameters (PyTorch layouts) and host-side packing
# ---------------------------------------------------------------------------
def init_params(key):
    """Deterministic synthetic parameters in PyTorch layouts:
    Conv1d -> (Cout, Cin, K) + (Cout,), Linear -> (Cout, Cin) + (Cout,)."""
    keys = iter(jax.random.split(key, 64))

    def conv(cin, cout, k):
        s = 1.0 / math.sqrt(cin * k)
        return (jax.random.normal(next(keys), (cout, cin, k), jnp.float32) * s,
                jax.random.normal(next(keys), (cout,), jnp.float32) * s)

    def linear(cin, cout):
        s = 1.0 / math.sqrt(cin)
        return (jax.random.normal(next(keys), (cout, cin), jnp.float32) * s,
                jax.random.normal(next(keys), (cout,), jnp.float32) * s)

    p = {}
    for i in range(3):
        cin, cout = _TCN_CHANNELS[i], _TCN_CHANNELS[i + 1]
        p[f"tcn{i}.conv1"] = conv(cin, cout, _TCN_K)   # weight_norm folded in
        p[f"tcn{i}.conv2"] = conv(cout, cout, _TCN_K)
        p[f"tcn{i}.down"] = conv(cin, cout, 1)         # 1x1 downsample (cin != cout everywhere)
    p["conv1"] = conv(64, 128, 7)
    p["conv2"] = conv(128, 128, 5)
    p["conv3"] = conv(128, 128, 3)
    # conv_16 / conv_1 exist in CSEN.__init__ but are unused in forward() -> skipped.
    p["fc1"] = linear(128, 64)
    p["fc2"] = linear(64, 32)
    p["fc3"] = linear(32, 1)
    return p


def pack_params(params):
    """Packs all weights into ONE bf16 (R, 128) buffer and all biases into ONE f32
    (16, 128) buffer (3 kernel inputs / DMAs instead of 31) plus a static layout.

    Matrices are stored matmul-ready as (contraction, Cout):
      * Cin==128 convs  -> one (K*Cin, Cout) im2col matrix, rows k-major / cin-minor
      * narrower convs  -> K per-tap (Cin, Cout) matrices
      * 1x1 conv/Linear -> one (Cin, Cout) matrix
    Every matrix starts on a 16-row boundary so every in-kernel slice of the packed
    bf16 buffer is sublane-tile aligned.
    """
    entries = []

    def add_conv(key, w):                                 # torch Conv1d: (Cout, Cin, K)
        w = np.asarray(w, np.float32)
        cout, cin, kk = w.shape
        if kk == 1:
            entries.append((key, w[:, :, 0].T))
        elif _conv_is_im2col(cin, kk):
            entries.append((key, np.transpose(w, (2, 1, 0)).reshape(kk * cin, cout)))
        else:
            for k in range(kk):
                entries.append((f"{key}.k{k}", w[:, :, k].T))

    def add_linear(key, w):                               # torch Linear: (Cout, Cin)
        entries.append((key, np.asarray(w, np.float32).T))

    for i in range(3):
        add_conv(f"tcn{i}.conv1", params[f"tcn{i}.conv1"][0])
        add_conv(f"tcn{i}.conv2", params[f"tcn{i}.conv2"][0])
        add_conv(f"tcn{i}.down", params[f"tcn{i}.down"][0])
    for name in ("conv1", "conv2", "conv3"):
        add_conv(name, params[name][0])
    for name in ("fc1", "fc2", "fc3"):
        add_linear(name, params[name][0])

    w_layout, off = {}, 0
    for key, m in entries:
        w_layout[key] = (off, m.shape[0], m.shape[1])
        off += -(-m.shape[0] // _WROW_ALIGN) * _WROW_ALIGN
    wbuf = np.zeros((off, _LANES), np.float32)
    for key, m in entries:
        o, r, c = w_layout[key]
        wbuf[o:o + r, :c] = m

    bias_names = ([f"tcn{i}.{n}" for i in range(3) for n in ("conv1", "conv2", "down")]
                  + ["conv1", "conv2", "conv3", "fc1", "fc2", "fc3"])
    b_layout = {}
    bbuf = np.zeros((-(-len(bias_names) // 8) * 8, _LANES), np.float32)
    for i, name in enumerate(bias_names):
        b = np.asarray(params[name][1], np.float32)
        b_layout[name] = (i, b.shape[0])
        bbuf[i, :b.shape[0]] = b

    layout = {"w": w_layout, "b": b_layout}
    return jnp.asarray(wbuf, dtype=jnp.bfloat16), jnp.asarray(bbuf), layout


# ---------------------------------------------------------------------------
# The fused kernel
# ---------------------------------------------------------------------------
def _make_csen_kernel(B, T, layout):
    BT = B * T
    w_layout, b_layout = layout["w"], layout["b"]

    def kernel(x_ref, w_ref, b_ref, o_ref):
        # ---- static parameter slicing (all offsets are Python constants) ----
        def wmat(key):
            off, r, c = w_layout[key]
            return w_ref[off:off + r, :c]                 # bf16 (r, c), tile-aligned slice

        def bias(key):
            i, c = b_layout[key]
            return b_ref[i:i + 1, :c]                     # f32 (1, c)

        def mm(h, key):
            # Activations cast to bf16 at the dot, f32 accumulation on the MXU.
            return jnp.dot(h.astype(jnp.bfloat16), wmat(key),
                           preferred_element_type=jnp.float32)

        def dense(h, key):                                # 1x1 conv / nn.Linear
            return mm(h, key) + bias(key)

        relu = lambda v: jnp.maximum(v, 0.0)
        leaky = lambda v: jnp.where(v > 0.0, v, _LEAKY_SLOPE * v)

        # Row / time-within-batch indices, computed once (not re-broadcast per conv).
        row = jax.lax.broadcasted_iota(jnp.int32, (BT, 1), 0)
        t_in = row % T

        def edge_rows(h, last):
            # (BT, C) array whose every row of batch b equals h[b*T] (last=False)
            # or h[b*T + T - 1] (last=True); built from B-1 selects.
            base = (T - 1) if last else 0
            out = h[base:base + 1, :]
            for b in range(1, B):
                out = jnp.where(row >= b * T, h[b * T + base:b * T + base + 1, :], out)
            return out

        def shift_rows(h, s, fill=None):
            # view[b*T + t, :] = h[b*T + t + s, :]; rows whose t+s falls outside
            # [0, T) take `fill` (replicate pad) or 0 (zero pad).  One XLU roll +
            # one VPU select; no VMEM staging round-trip, no cross-batch leakage.
            if s == 0:
                return h
            rolled = pltpu.roll(h, (-s) % BT, 0)          # rolled[r, :] = h[(r + s) % BT, :]
            keep = (t_in < T - s) if s > 0 else (t_in >= -s)
            return jnp.where(keep, rolled, 0.0 if fill is None else fill)

        def conv(h, key, K, dilation, mode):
            # mode: "causal" (left zero pad + Chomp1d), "zero" (same, zero pad),
            #       "replicate" (same, replicate pad).
            cin = h.shape[-1]
            if mode == "causal":
                shifts = [(k - (K - 1)) * dilation for k in range(K)]
            else:
                shifts = [(k - (K - 1) // 2) * dilation for k in range(K)]
            lo = hi = None
            if mode == "replicate":
                lo, hi = edge_rows(h, last=False), edge_rows(h, last=True)
            views = [shift_rows(h, s, (hi if s > 0 else lo) if mode == "replicate" else None)
                     for s in shifts]
            if _conv_is_im2col(cin, K):
                # Lane-tile-aligned im2col: ONE deep matmul instead of K shallow ones.
                out = mm(jnp.concatenate(views, axis=-1), key)
            else:
                out = mm(views[0], f"{key}.k0")
                for k in range(1, K):
                    out = out + mm(views[k], f"{key}.k{k}")
            return out + bias(key)

        def tcn_block(h, idx, dilation):
            # TemporalBlock (dropout == identity at inference).
            p = f"tcn{idx}"
            a = relu(conv(h, f"{p}.conv1", _TCN_K, dilation, "causal"))
            a = relu(conv(a, f"{p}.conv2", _TCN_K, dilation, "causal"))
            return relu(a + dense(h, f"{p}.down"))        # 1x1 downsample residual

        # ---- forward graph: everything below stays in vregs / VMEM ----------
        h = x_ref[...]                                    # (B*T, 10) f32
        h = tcn_block(h, 0, 1)
        h = tcn_block(h, 1, 2)
        h = tcn_block(h, 2, 4)
        h = leaky(conv(h, "conv1", 7, 1, "replicate"))
        h = leaky(conv(h, "conv2", 5, 1, "zero"))
        h = leaky(conv(h, "conv3", 3, 1, "zero"))
        h = leaky(dense(h, "fc1"))
        h = leaky(dense(h, "fc2"))
        o_ref[...] = jax.nn.sigmoid(dense(h, "fc3"))      # (B*T, 1)

    return kernel


# ---------------------------------------------------------------------------
# Forward wrapper (single fused pallas_call)
# ---------------------------------------------------------------------------
def make_csen_forward(B, T, layout):
    kernel = _make_csen_kernel(B, T, layout)

    @jax.jit
    def forward(x, wbuf, bbuf):
        # Grid-less pallas_call: 3 input DMAs (activation + 2 packed parameter
        # buffers), 1 output DMA, 1 launch for the whole network.
        # (v7x alternative: grid=(B,), dimension_semantics=("parallel",) to put one
        #  batch row per TensorCore — only worth it if xprof shows the split beating
        #  the duplicated weight-DMA / launch fixed cost.)
        cas = pl.pallas_call(
            kernel,
            out_shape=jax.ShapeDtypeStruct((B * T, 1), jnp.float32),
        )(x.reshape(B * T, x.shape[-1]), wbuf, bbuf)
        cas = cas.reshape(B, T)                           # 128-byte XLA reshape
        # TODO(synk): process_cas / calculate_res are not defined in the reference
        # source; stand-ins: 0.5-threshold pseudo labels, top-k mean for p_class.
        pseudo_label = (cas >= 0.5).astype(jnp.float32)
        k = max(1, T // 8)
        p_class = jnp.mean(jax.lax.top_k(cas, k)[0], axis=1)
        return pseudo_label, p_class, cas

    return forward


# ---------------------------------------------------------------------------
# Pure-JAX reference (independent formulation: jnp.pad + windowed taps)
# ---------------------------------------------------------------------------
def _ref_forward(params, x):
    q = lambda w: w.astype(jnp.bfloat16).astype(jnp.float32)   # match kernel weight precision

    def conv1d(h, name, dilation, causal, replicate=False):
        w, b = params[name]
        w = q(w)
        _, _, K = w.shape
        if causal:
            pad_l, pad_r = (K - 1) * dilation, 0
        else:
            pad_l = pad_r = (K - 1) // 2 * dilation
        hp = jnp.pad(h, ((0, 0), (pad_l, pad_r), (0, 0)),
                     mode="edge" if replicate else "constant")
        T_ = h.shape[1]
        out = jnp.zeros(h.shape[:2] + (w.shape[0],), jnp.float32) + b
        for k in range(K):
            out = out + jnp.einsum("btc,oc->bto",
                                   hp[:, k * dilation:k * dilation + T_, :], w[:, :, k])
        return out

    def dense(h, name):
        w, b = params[name]
        w = q(w)
        if w.ndim == 3:
            w = w[:, :, 0]
        return jnp.einsum("btc,oc->bto", h, w) + b

    relu = lambda v: jnp.maximum(v, 0.0)
    leaky = lambda v: jnp.where(v > 0.0, v, _LEAKY_SLOPE * v)

    h = x
    for i, d in enumerate((1, 2, 4)):
        a = relu(conv1d(h, f"tcn{i}.conv1", d, causal=True))
        a = relu(conv1d(a, f"tcn{i}.conv2", d, causal=True))
        h = relu(a + dense(h, f"tcn{i}.down"))
    h = leaky(conv1d(h, "conv1", 1, causal=False, replicate=True))
    h = leaky(conv1d(h, "conv2", 1, causal=False))
    h = leaky(conv1d(h, "conv3", 1, causal=False))
    h = leaky(dense(h, "fc1"))
    h = leaky(dense(h, "fc2"))
    return jax.nn.sigmoid(dense(h, "fc3"))[..., 0]        # (B, T)


if __name__ == "__main__":
    key = jax.random.PRNGKey(0)
    pkey, xkey = jax.random.split(key)
    params = init_params(pkey)
    wbuf, bbuf, layout = pack_params(params)

    B, T, C = 2, 16, 10
    x = jax.random.normal(xkey, (B, T, C), jnp.float32)   # module input (b, t, c)

    forward = make_csen_forward(B, T, layout)
    pseudo_label, p_class, cas = forward(x, wbuf, bbuf)
    jax.block_until_ready((pseudo_label, p_class, cas))

    assert pseudo_label.shape == (B, T)
    assert p_class.shape == (B,)
    assert cas.shape == (B, T)

    # Correctness check against an independent pure-JAX reference (same bf16-rounded
    # weights, f32 activations): loose tolerance covers the kernel's bf16 dot inputs.
    cas_ref = _ref_forward(params, x)
    max_err = float(jnp.max(jnp.abs(cas - cas_ref)))
    assert max_err < 5e-2, f"kernel vs reference mismatch: max|diff|={max_err}"

    print("KERNEL_OK")
</pallas_src>

<mosaic_0001>
module attributes {stable_mosaic.version = 11 : i64} {
  func.func @kernel(%arg0: memref<32x10xf32, #tpu.memory_space<vmem>>, %arg1: memref<2288x128xbf16, #tpu.memory_space<vmem>>, %arg2: memref<16x128xf32, #tpu.memory_space<vmem>>, %arg3: memref<32x1xf32, #tpu.memory_space<vmem>>) attributes {dimension_semantics = [], scalar_prefetch = 0 : i64, scratch_operands = 0 : i64, tpu.core_type = #tpu.core_type<tc>} {
    %0 = tpu.iota {dimensions = array<i32: 0>} : vector<32x1xi32>
    %c16_i32 = arith.constant 16 : i32
    %c0_i32 = arith.constant 0 : i32
    %1 = arith.cmpi eq, %c16_i32, %c0_i32 : i32
    %c1_i32 = arith.constant 1 : i32
    %2 = arith.select %1, %c1_i32, %c16_i32 : i32
    %3 = vector.broadcast %2 : i32 to vector<32x1xi32>
    %4 = arith.remsi %0, %3 : vector<32x1xi32>
    %c0_i32_0 = arith.constant 0 : i32
    %5 = vector.broadcast %c0_i32_0 : i32 to vector<32x1xi32>
    %6 = arith.cmpi ne, %4, %5 : vector<32x1xi32>
    %c0_i32_1 = arith.constant 0 : i32
    %7 = vector.broadcast %c0_i32_1 : i32 to vector<32x1xi32>
    %8 = arith.cmpi slt, %4, %7 : vector<32x1xi32>
    %c0_i32_2 = arith.constant 0 : i32
    %9 = arith.cmpi slt, %2, %c0_i32_2 : i32
    %10 = vector.broadcast %9 : i1 to vector<32x1xi1>
    %11 = vector.broadcast %10 : vector<32x1xi1> to vector<32x1xi1>
    %12 = arith.xori %8, %11 : vector<32x1xi1>
    %13 = arith.andi %12, %6 : vector<32x1xi1>
    %14 = vector.broadcast %2 : i32 to vector<32x1xi32>
    %15 = arith.addi %4, %14 : vector<32x1xi32>
    %16 = arith.select %13, %15, %4 : vector<32x1xi1>, vector<32x1xi32>
    %c0 = arith.constant 0 : index
    %c0_3 = arith.constant 0 : index
    %17 = vector.load %arg0[%c0, %c0_3] : memref<32x10xf32, #tpu.memory_space<vmem>>, vector<32x10xf32>
    %c2_i32 = arith.constant 2 : i32
    %18 = tpu.dynamic_rotate %17 by %c2_i32 dim 0 : vector<32x10xf32>, i32 -> vector<32x10xf32>
    %c2_i32_4 = arith.constant 2 : i32
    %19 = vector.broadcast %c2_i32_4 : i32 to vector<32x1xi32>
    %20 = arith.cmpi sge, %16, %19 : vector<32x1xi32>
    %cst = arith.constant 0.000000e+00 : f32
    %21 = vector.shape_cast %20 : vector<32x1xi1> to vector<32x1xi1>
    %22 = vector.broadcast %21 : vector<32x1xi1> to vector<32x10xi1>
    %23 = vector.broadcast %cst : f32 to vector<32x10xf32>
    %24 = arith.select %22, %18, %23 : vector<32x10xi1>, vector<32x10xf32>
    %c1_i32_5 = arith.constant 1 : i32
    %25 = tpu.dynamic_rotate %17 by %c1_i32_5 dim 0 : vector<32x10xf32>, i32 -> vector<32x10xf32>
    %c1_i32_6 = arith.constant 1 : i32
    %26 = vector.broadcast %c1_i32_6 : i32 to vector<32x1xi32>
    %27 = arith.cmpi sge, %16, %26 : vector<32x1xi32>
    %cst_7 = arith.constant 0.000000e+00 : f32
    %28 = vector.shape_cast %27 : vector<32x1xi1> to vector<32x1xi1>
    %29 = vector.broadcast %28 : vector<32x1xi1> to vector<32x10xi1>
    %30 = vector.broadcast %cst_7 : f32 to vector<32x10xf32>
    %31 = arith.select %29, %25, %30 : vector<32x10xi1>, vector<32x10xf32>
    %32 = arith.truncf %24 : vector<32x10xf32> to vector<32x10xbf16>
    %c0_8 = arith.constant 0 : index
    %c0_9 = arith.constant 0 : index
    %33 = vector.load %arg1[%c0_8, %c0_9] : memref<2288x128xbf16, #tpu.memory_space<vmem>>, vector<10x16xbf16>
    %cst_10 = arith.constant dense<0.000000e+00> : vector<32x16xf32>
    %34 = tpu.matmul %32, %33, %cst_10 {dimension_numbers = #tpu.dot_dimension_numbers<[1], [0], [0], [1], [0, 0, 1, 1], [], []>} : vector<32x10xbf16>, vector<10x16xbf16>, vector<32x16xf32> -> vector<32x16xf32>
    %35 = arith.truncf %31 : vector<32x10xf32> to vector<32x10xbf16>
    %c16 = arith.constant 16 : index
    %c0_11 = arith.constant 0 : index
    %36 = vector.load %arg1[%c16, %c0_11] : memref<2288x128xbf16, #tpu.memory_space<vmem>>, vector<10x16xbf16>
    %cst_12 = arith.constant dense<0.000000e+00> : vector<32x16xf32>
    %37 = tpu.matmul %35, %36, %cst_12 {dimension_numbers = #tpu.dot_dimension_numbers<[1], [0], [0], [1], [0, 0, 1, 1], [], []>} : vector<32x10xbf16>, vector<10x16xbf16>, vector<32x16xf32> -> vector<32x16xf32>
    %38 = arith.addf %34, %37 : vector<32x16xf32>
    %39 = arith.truncf %17 : vector<32x10xf32> to vector<32x10xbf16>
    %c32 = arith.constant 32 : index
    %c0_13 = arith.constant 0 : index
    %40 = vector.load %arg1[%c32, %c0_13] : memref<2288x128xbf16, #tpu.memory_space<vmem>>, vector<10x16xbf16>
    %cst_14 = arith.constant dense<0.000000e+00> : vector<32x16xf32>
    %41 = tpu.matmul %39, %40, %cst_14 {dimension_numbers = #tpu.dot_dimension_numbers<[1], [0], [0], [1], [0, 0, 1, 1], [], []>} : vector<32x10xbf16>, vector<10x16xbf16>, vector<32x16xf32> -> vector<32x16xf32>
    %42 = arith.addf %38, %41 : vector<32x16xf32>
    %c0_15 = arith.constant 0 : index
    %c0_16 = arith.constant 0 : index
    %43 = vector.load %arg2[%c0_15, %c0_16] : memref<16x128xf32, #tpu.memory_space<vmem>>, vector<1x16xf32>
    %44 = vector.broadcast %43 : vector<1x16xf32> to vector<32x16xf32>
    %45 = arith.addf %42, %44 : vector<32x16xf32>
    %cst_17 = arith.constant 0.000000e+00 : f32
    %46 = vector.broadcast %cst_17 : f32 to vector<32x16xf32>
    %47 = arith.maximumf %45, %46 : vector<32x16xf32>
    %c2_i32_18 = arith.constant 2 : i32
    %48 = tpu.dynamic_rotate %47 by %c2_i32_18 dim 0 : vector<32x16xf32>, i32 -> vector<32x16xf32>
    %c2_i32_19 = arith.constant 2 : i32
    %49 = vector.broadcast %c2_i32_19 : i32 to vector<32x1xi32>
    %50 = arith.cmpi sge, %16, %49 : vector<32x1xi32>
    %cst_20 = arith.constant 0.000000e+00 : f32
    %51 = vector.shape_cast %50 : vector<32x1xi1> to vector<32x1xi1>
    %52 = vector.broadcast %51 : vector<32x1xi1> to vector<32x16xi1>
    %53 = vector.broadcast %cst_20 : f32 to vector<32x16xf32>
    %54 = arith.select %52, %48, %53 : vector<32x16xi1>, vector<32x16xf32>
    %c1_i32_21 = arith.constant 1 : i32
    %55 = tpu.dynamic_rotate %47 by %c1_i32_21 dim 0 : vector<32x16xf32>, i32 -> vector<32x16xf32>
    %c1_i32_22 = arith.constant 1 : i32
    %56 = vector.broadcast %c1_i32_22 : i32 to vector<32x1xi32>
    %57 = arith.cmpi sge, %16, %56 : vector<32x1xi32>
    %cst_23 = arith.constant 0.000000e+00 : f32
    %58 = vector.shape_cast %57 : vector<32x1xi1> to vector<32x1xi1>
    %59 = vector.broadcast %58 : vector<32x1xi1> to vector<32x16xi1>
    %60 = vector.broadcast %cst_23 : f32 to vector<32x16xf32>
    %61 = arith.select %59, %55, %60 : vector<32x16xi1>, vector<32x16xf32>
    %62 = arith.truncf %54 : vector<32x16xf32> to vector<32x16xbf16>
    %c48 = arith.constant 48 : index
    %c0_24 = arith.constant 0 : index
    %63 = vector.load %arg1[%c48, %c0_24] : memref<2288x128xbf16, #tpu.memory_space<vmem>>, vector<16x16xbf16>
    %cst_25 = arith.constant dense<0.000000e+00> : vector<32x16xf32>
    %64 = tpu.matmul %62, %63, %cst_25 {dimension_numbers = #tpu.dot_dimension_numbers<[1], [0], [0], [1], [0, 0, 1, 1], [], []>} : vector<32x16xbf16>, vector<16x16xbf16>, vector<32x16xf32> -> vector<32x16xf32>
    %65 = arith.truncf %61 : vector<32x16xf32> to vector<32x16xbf16>
    %c64 = arith.constant 64 : index
    %c0_26 = arith.constant 0 : index
    %66 = vector.load %arg1[%c64, %c0_26] : memref<2288x128xbf16, #tpu.memory_space<vmem>>, vector<16x16xbf16>
    %cst_27 = arith.constant dense<0.000000e+00> : vector<32x16xf32>
    %67 = tpu.matmul %65, %66, %cst_27 {dimension_numbers = #tpu.dot_dimension_numbers<[1], [0], [0], [1], [0, 0, 1, 1], [], []>} : vector<32x16xbf16>, vector<16x16xbf16>, vector<32x16xf32> -> vector<32x16xf32>
    %68 = arith.addf %64, %67 : vector<32x16xf32>
    %69 = arith.truncf %47 : vector<32x16xf32> to vector<32x16xbf16>
    %c80 = arith.constant 80 : index
    %c0_28 = arith.constant 0 : index
    %70 = vector.load %arg1[%c80, %c0_28] : memref<2288x128xbf16, #tpu.memory_space<vmem>>, vector<16x16xbf16>
    %cst_29 = arith.constant dense<0.000000e+00> : vector<32x16xf32>
    %71 = tpu.matmul %69, %70, %cst_29 {dimension_numbers = #tpu.dot_dimension_numbers<[1], [0], [0], [1], [0, 0, 1, 1], [], []>} : vector<32x16xbf16>, vector<16x16xbf16>, vector<32x16xf32> -> vector<32x16xf32>
    %72 = arith.addf %68, %71 : vector<32x16xf32>
    %c1 = arith.constant 1 : index
    %c0_30 = arith.constant 0 : index
    %73 = vector.load %arg2[%c1, %c0_30] : memref<16x128xf32, #tpu.memory_space<vmem>>, vector<1x16xf32>
    %74 = vector.broadcast %73 : vector<1x16xf32> to vector<32x16xf32>
    %75 = arith.addf %72, %74 : vector<32x16xf32>
    %cst_31 = arith.constant 0.000000e+00 : f32
    %76 = vector.broadcast %cst_31 : f32 to vector<32x16xf32>
    %77 = arith.maximumf %75, %76 : vector<32x16xf32>
    %78 = arith.truncf %17 : vector<32x10xf32> to vector<32x10xbf16>
    %c96 = arith.constant 96 : index
    %c0_32 = arith.constant 0 : index
    %79 = vector.load %arg1[%c96, %c0_32] : memref<2288x128xbf16, #tpu.memory_space<vmem>>, vector<10x16xbf16>
    %cst_33 = arith.constant dense<0.000000e+00> : vector<32x16xf32>
    %80 = tpu.matmul %78, %79, %cst_33 {dimension_numbers = #tpu.dot_dimension_numbers<[1], [0], [0], [1], [0, 0, 1, 1], [], []>} : vector<32x10xbf16>, vector<10x16xbf16>, vector<32x16xf32> -> vector<32x16xf32>
    %c2 = arith.constant 2 : index
    %c0_34 = arith.constant 0 : index
    %81 = vector.load %arg2[%c2, %c0_34] : memref<16x128xf32, #tpu.memory_space<vmem>>, vector<1x16xf32>
    %82 = vector.broadcast %81 : vector<1x16xf32> to vector<32x16xf32>
    %83 = arith.addf %80, %82 : vector<32x16xf32>
    %84 = arith.addf %77, %83 : vector<32x16xf32>
    %cst_35 = arith.constant 0.000000e+00 : f32
    %85 = vector.broadcast %cst_35 : f32 to vector<32x16xf32>
    %86 = arith.maximumf %84, %85 : vector<32x16xf32>
    %c4_i32 = arith.constant 4 : i32
    %87 = tpu.dynamic_rotate %86 by %c4_i32 dim 0 : vector<32x16xf32>, i32 -> vector<32x16xf32>
    %c4_i32_36 = arith.constant 4 : i32
    %88 = vector.broadcast %c4_i32_36 : i32 to vector<32x1xi32>
    %89 = arith.cmpi sge, %16, %88 : vector<32x1xi32>
    %cst_37 = arith.constant 0.000000e+00 : f32
    %90 = vector.shape_cast %89 : vector<32x1xi1> to vector<32x1xi1>
    %91 = vector.broadcast %90 : vector<32x1xi1> to vector<32x16xi1>
    %92 = vector.broadcast %cst_37 : f32 to vector<32x16xf32>
    %93 = arith.select %91, %87, %92 : vector<32x16xi1>, vector<32x16xf32>
    %c2_i32_38 = arith.constant 2 : i32
    %94 = tpu.dynamic_rotate %86 by %c2_i32_38 dim 0 : vector<32x16xf32>, i32 -> vector<32x16xf32>
    %c2_i32_39 = arith.constant 2 : i32
    %95 = vector.broadcast %c2_i32_39 : i32 to vector<32x1xi32>
    %96 = arith.cmpi sge, %16, %95 : vector<32x1xi32>
    %cst_40 = arith.constant 0.000000e+00 : f32
    %97 = vector.shape_cast %96 : vector<32x1xi1> to vector<32x1xi1>
    %98 = vector.broadcast %97 : vector<32x1xi1> to vector<32x16xi1>
    %99 = vector.broadcast %cst_40 : f32 to vector<32x16xf32>
    %100 = arith.select %98, %94, %99 : vector<32x16xi1>, vector<32x16xf32>
    %101 = arith.truncf %93 : vector<32x16xf32> to vector<32x16xbf16>
    %c112 = arith.constant 112 : index
    %c0_41 = arith.constant 0 : index
    %102 = vector.load %arg1[%c112, %c0_41] : memref<2288x128xbf16, #tpu.memory_space<vmem>>, vector<16x32xbf16>
    %cst_42 = arith.constant dense<0.000000e+00> : vector<32x32xf32>
    %103 = tpu.matmul %101, %102, %cst_42 {dimension_numbers = #tpu.dot_dimension_numbers<[1], [0], [0], [1], [0, 0, 1, 1], [], []>} : vector<32x16xbf16>, vector<16x32xbf16>, vector<32x32xf32> -> vector<32x32xf32>
    %104 = arith.truncf %100 : vector<32x16xf32> to vector<32x16xbf16>
    %c128 = arith.constant 128 : index
    %c0_43 = arith.constant 0 : index
    %105 = vector.load %arg1[%c128, %c0_43] : memref<2288x128xbf16, #tpu.memory_space<vmem>>, vector<16x32xbf16>
    %cst_44 = arith.constant dense<0.000000e+00> : vector<32x32xf32>
    %106 = tpu.matmul %104, %105, %cst_44 {dimension_numbers = #tpu.dot_dimension_numbers<[1], [0], [0], [1], [0, 0, 1, 1], [], []>} : vector<32x16xbf16>, vector<16x32xbf16>, vector<32x32xf32> -> vector<32x32xf32>
    %107 = arith.addf %103, %106 : vector<32x32xf32>
    %108 = arith.truncf %86 : vector<32x16xf32> to vector<32x16xbf16>
    %c144 = arith.constant 144 : index
    %c0_45 = arith.constant 0 : index
    %109 = vector.load %arg1[%c144, %c0_45] : memref<2288x128xbf16, #tpu.memory_space<vmem>>, vector<16x32xbf16>
    %cst_46 = arith.constant dense<0.000000e+00> : vector<32x32xf32>
    %110 = tpu.matmul %108, %109, %cst_46 {dimension_numbers = #tpu.dot_dimension_numbers<[1], [0], [0], [1], [0, 0, 1, 1], [], []>} : vector<32x16xbf16>, vector<16x32xbf16>, vector<32x32xf32> -> vector<32x32xf32>
    %111 = arith.addf %107, %110 : vector<32x32xf32>
    %c3 = arith.constant 3 : index
    %c0_47 = arith.constant 0 : index
    %112 = vector.load %arg2[%c3, %c0_47] : memref<16x128xf32, #tpu.memory_space<vmem>>, vector<1x32xf32>
    %113 = vector.broadcast %112 : vector<1x32xf32> to vector<32x32xf32>
    %114 = arith.addf %111, %113 : vector<32x32xf32>
    %cst_48 = arith.constant 0.000000e+00 : f32
    %115 = vector.broadcast %cst_48 : f32 to vector<32x32xf32>
    %116 = arith.maximumf %114, %115 : vector<32x32xf32>
    %c4_i32_49 = arith.constant 4 : i32
    %117 = tpu.dynamic_rotate %116 by %c4_i32_49 dim 0 : vector<32x32xf32>, i32 -> vector<32x32xf32>
    %c4_i32_50 = arith.constant 4 : i32
    %118 = vector.broadcast %c4_i32_50 : i32 to vector<32x1xi32>
    %119 = arith.cmpi sge, %16, %118 : vector<32x1xi32>
    %cst_51 = arith.constant 0.000000e+00 : f32
    %120 = vector.shape_cast %119 : vector<32x1xi1> to vector<32x1xi1>
    %121 = vector.broadcast %120 : vector<32x1xi1> to vector<32x32xi1>
    %122 = vector.broadcast %cst_51 : f32 to vector<32x32xf32>
    %123 = arith.select %121, %117, %122 : vector<32x32xi1>, vector<32x32xf32>
    %c2_i32_52 = arith.constant 2 : i32
    %124 = tpu.dynamic_rotate %116 by %c2_i32_52 dim 0 : vector<32x32xf32>, i32 -> vector<32x32xf32>
    %c2_i32_53 = arith.constant 2 : i32
    %125 = vector.broadcast %c2_i32_53 : i32 to vector<32x1xi32>
    %126 = arith.cmpi sge, %16, %125 : vector<32x1xi32>
    %cst_54 = arith.constant 0.000000e+00 : f32
    %127 = vector.shape_cast %126 : vector<32x1xi1> to vector<32x1xi1>
    %128 = vector.broadcast %127 : vector<32x1xi1> to vector<32x32xi1>
    %129 = vector.broadcast %cst_54 : f32 to vector<32x32xf32>
    %130 = arith.select %128, %124, %129 : vector<32x32xi1>, vector<32x32xf32>
    %131 = arith.truncf %123 : vector<32x32xf32> to vector<32x32xbf16>
    %c160 = arith.constant 160 : index
    %c0_55 = arith.constant 0 : index
    %132 = vector.load %arg1[%c160, %c0_55] : memref<2288x128xbf16, #tpu.memory_space<vmem>>, vector<32x32xbf16>
    %cst_56 = arith.constant dense<0.000000e+00> : vector<32x32xf32>
    %133 = tpu.matmul %131, %132, %cst_56 {dimension_numbers = #tpu.dot_dimension_numbers<[1], [0], [0], [1], [0, 0, 1, 1], [], []>} : vector<32x32xbf16>, vector<32x32xbf16>, vector<32x32xf32> -> vector<32x32xf32>
    %134 = arith.truncf %130 : vector<32x32xf32> to vector<32x32xbf16>
    %c192 = arith.constant 192 : index
    %c0_57 = arith.constant 0 : index
    %135 = vector.load %arg1[%c192, %c0_57] : memref<2288x128xbf16, #tpu.memory_space<vmem>>, vector<32x32xbf16>
    %cst_58 = arith.constant dense<0.000000e+00> : vector<32x32xf32>
    %136 = tpu.matmul %134, %135, %cst_58 {dimension_numbers = #tpu.dot_dimension_numbers<[1], [0], [0], [1], [0, 0, 1, 1], [], []>} : vector<32x32xbf16>, vector<32x32xbf16>, vector<32x32xf32> -> vector<32x32xf32>
    %137 = arith.addf %133, %136 : vector<32x32xf32>
    %138 = arith.truncf %116 : vector<32x32xf32> to vector<32x32xbf16>
    %c224 = arith.constant 224 : index
    %c0_59 = arith.constant 0 : index
    %139 = vector.load %arg1[%c224, %c0_59] : memref<2288x128xbf16, #tpu.memory_space<vmem>>, vector<32x32xbf16>
    %cst_60 = arith.constant dense<0.000000e+00> : vector<32x32xf32>
    %140 = tpu.matmul %138, %139, %cst_60 {dimension_numbers = #tpu.dot_dimension_numbers<[1], [0], [0], [1], [0, 0, 1, 1], [], []>} : vector<32x32xbf16>, vector<32x32xbf16>, vector<32x32xf32> -> vector<32x32xf32>
    %141 = arith.addf %137, %140 : vector<32x32xf32>
    %c4 = arith.constant 4 : index
    %c0_61 = arith.constant 0 : index
    %142 = vector.load %arg2[%c4, %c0_61] : memref<16x128xf32, #tpu.memory_space<vmem>>, vector<1x32xf32>
    %143 = vector.broadcast %142 : vector<1x32xf32> to vector<32x32xf32>
    %144 = arith.addf %141, %143 : vector<32x32xf32>
    %cst_62 = arith.constant 0.000000e+00 : f32
    %145 = vector.broadcast %cst_62 : f32 to vector<32x32xf32>
    %146 = arith.maximumf %144, %145 : vector<32x32xf32>
    %147 = arith.truncf %86 : vector<32x16xf32> to vector<32x16xbf16>
    %c256 = arith.constant 256 : index
    %c0_63 = arith.constant 0 : index
    %148 = vector.load %arg1[%c256, %c0_63] : memref<2288x128xbf16, #tpu.memory_space<vmem>>, vector<16x32xbf16>
    %cst_64 = arith.constant dense<0.000000e+00> : vector<32x32xf32>
    %149 = tpu.matmul %147, %148, %cst_64 {dimension_numbers = #tpu.dot_dimension_numbers<[1], [0], [0], [1], [0, 0, 1, 1], [], []>} : vector<32x16xbf16>, vector<16x32xbf16>, vector<32x32xf32> -> vector<32x32xf32>
    %c5 = arith.constant 5 : index
    %c0_65 = arith.constant 0 : index
    %150 = vector.load %arg2[%c5, %c0_65] : memref<16x128xf32, #tpu.memory_space<vmem>>, vector<1x32xf32>
    %151 = vector.broadcast %150 : vector<1x32xf32> to vector<32x32xf32>
    %152 = arith.addf %149, %151 : vector<32x32xf32>
    %153 = arith.addf %146, %152 : vector<32x32xf32>
    %cst_66 = arith.constant 0.000000e+00 : f32
    %154 = vector.broadcast %cst_66 : f32 to vector<32x32xf32>
    %155 = arith.maximumf %153, %154 : vector<32x32xf32>
    %c8_i32 = arith.constant 8 : i32
    %156 = tpu.dynamic_rotate %155 by %c8_i32 dim 0 : vector<32x32xf32>, i32 -> vector<32x32xf32>
    %c8_i32_67 = arith.constant 8 : i32
    %157 = vector.broadcast %c8_i32_67 : i32 to vector<32x1xi32>
    %158 = arith.cmpi sge, %16, %157 : vector<32x1xi32>
    %cst_68 = arith.constant 0.000000e+00 : f32
    %159 = vector.shape_cast %158 : vector<32x1xi1> to vector<32x1xi1>
    %160 = vector.broadcast %159 : vector<32x1xi1> to vector<32x32xi1>
    %161 = vector.broadcast %cst_68 : f32 to vector<32x32xf32>
    %162 = arith.select %160, %156, %161 : vector<32x32xi1>, vector<32x32xf32>
    %c4_i32_69 = arith.constant 4 : i32
    %163 = tpu.dynamic_rotate %155 by %c4_i32_69 dim 0 : vector<32x32xf32>, i32 -> vector<32x32xf32>
    %c4_i32_70 = arith.constant 4 : i32
    %164 = vector.broadcast %c4_i32_70 : i32 to vector<32x1xi32>
    %165 = arith.cmpi sge, %16, %164 : vector<32x1xi32>
    %cst_71 = arith.constant 0.000000e+00 : f32
    %166 = vector.shape_cast %165 : vector<32x1xi1> to vector<32x1xi1>
    %167 = vector.broadcast %166 : vector<32x1xi1> to vector<32x32xi1>
    %168 = vector.broadcast %cst_71 : f32 to vector<32x32xf32>
    %169 = arith.select %167, %163, %168 : vector<32x32xi1>, vector<32x32xf32>
    %170 = arith.truncf %162 : vector<32x32xf32> to vector<32x32xbf16>
    %c272 = arith.constant 272 : index
    %c0_72 = arith.constant 0 : index
    %171 = vector.load %arg1[%c272, %c0_72] : memref<2288x128xbf16, #tpu.memory_space<vmem>>, vector<32x64xbf16>
    %cst_73 = arith.constant dense<0.000000e+00> : vector<32x64xf32>
    %172 = tpu.matmul %170, %171, %cst_73 {dimension_numbers = #tpu.dot_dimension_numbers<[1], [0], [0], [1], [0, 0, 1, 1], [], []>} : vector<32x32xbf16>, vector<32x64xbf16>, vector<32x64xf32> -> vector<32x64xf32>
    %173 = arith.truncf %169 : vector<32x32xf32> to vector<32x32xbf16>
    %c304 = arith.constant 304 : index
    %c0_74 = arith.constant 0 : index
    %174 = vector.load %arg1[%c304, %c0_74] : memref<2288x128xbf16, #tpu.memory_space<vmem>>, vector<32x64xbf16>
    %cst_75 = arith.constant dense<0.000000e+00> : vector<32x64xf32>
    %175 = tpu.matmul %173, %174, %cst_75 {dimension_numbers = #tpu.dot_dimension_numbers<[1], [0], [0], [1], [0, 0, 1, 1], [], []>} : vector<32x32xbf16>, vector<32x64xbf16>, vector<32x64xf32> -> vector<32x64xf32>
    %176 = arith.addf %172, %175 : vector<32x64xf32>
    %177 = arith.truncf %155 : vector<32x32xf32> to vector<32x32xbf16>
    %c336 = arith.constant 336 : index
    %c0_76 = arith.constant 0 : index
    %178 = vector.load %arg1[%c336, %c0_76] : memref<2288x128xbf16, #tpu.memory_space<vmem>>, vector<32x64xbf16>
    %cst_77 = arith.constant dense<0.000000e+00> : vector<32x64xf32>
    %179 = tpu.matmul %177, %178, %cst_77 {dimension_numbers = #tpu.dot_dimension_numbers<[1], [0], [0], [1], [0, 0, 1, 1], [], []>} : vector<32x32xbf16>, vector<32x64xbf16>, vector<32x64xf32> -> vector<32x64xf32>
    %180 = arith.addf %176, %179 : vector<32x64xf32>
    %c6 = arith.constant 6 : index
    %c0_78 = arith.constant 0 : index
    %181 = vector.load %arg2[%c6, %c0_78] : memref<16x128xf32, #tpu.memory_space<vmem>>, vector<1x64xf32>
    %182 = vector.broadcast %181 : vector<1x64xf32> to vector<32x64xf32>
    %183 = arith.addf %180, %182 : vector<32x64xf32>
    %cst_79 = arith.constant 0.000000e+00 : f32
    %184 = vector.broadcast %cst_79 : f32 to vector<32x64xf32>
    %185 = arith.maximumf %183, %184 : vector<32x64xf32>
    %c8_i32_80 = arith.constant 8 : i32
    %186 = tpu.dynamic_rotate %185 by %c8_i32_80 dim 0 : vector<32x64xf32>, i32 -> vector<32x64xf32>
    %c8_i32_81 = arith.constant 8 : i32
    %187 = vector.broadcast %c8_i32_81 : i32 to vector<32x1xi32>
    %188 = arith.cmpi sge, %16, %187 : vector<32x1xi32>
    %cst_82 = arith.constant 0.000000e+00 : f32
    %189 = vector.shape_cast %188 : vector<32x1xi1> to vector<32x1xi1>
    %190 = vector.broadcast %189 : vector<32x1xi1> to vector<32x64xi1>
    %191 = vector.broadcast %cst_82 : f32 to vector<32x64xf32>
    %192 = arith.select %190, %186, %191 : vector<32x64xi1>, vector<32x64xf32>
    %c4_i32_83 = arith.constant 4 : i32
    %193 = tpu.dynamic_rotate %185 by %c4_i32_83 dim 0 : vector<32x64xf32>, i32 -> vector<32x64xf32>
    %c4_i32_84 = arith.constant 4 : i32
    %194 = vector.broadcast %c4_i32_84 : i32 to vector<32x1xi32>
    %195 = arith.cmpi sge, %16, %194 : vector<32x1xi32>
    %cst_85 = arith.constant 0.000000e+00 : f32
    %196 = vector.shape_cast %195 : vector<32x1xi1> to vector<32x1xi1>
    %197 = vector.broadcast %196 : vector<32x1xi1> to vector<32x64xi1>
    %198 = vector.broadcast %cst_85 : f32 to vector<32x64xf32>
    %199 = arith.select %197, %193, %198 : vector<32x64xi1>, vector<32x64xf32>
    %200 = arith.truncf %192 : vector<32x64xf32> to vector<32x64xbf16>
    %c368 = arith.constant 368 : index
    %c0_86 = arith.constant 0 : index
    %201 = vector.load %arg1[%c368, %c0_86] : memref<2288x128xbf16, #tpu.memory_space<vmem>>, vector<64x64xbf16>
    %cst_87 = arith.constant dense<0.000000e+00> : vector<32x64xf32>
    %202 = tpu.matmul %200, %201, %cst_87 {dimension_numbers = #tpu.dot_dimension_numbers<[1], [0], [0], [1], [0, 0, 1, 1], [], []>} : vector<32x64xbf16>, vector<64x64xbf16>, vector<32x64xf32> -> vector<32x64xf32>
    %203 = arith.truncf %199 : vector<32x64xf32> to vector<32x64xbf16>
    %c432 = arith.constant 432 : index
    %c0_88 = arith.constant 0 : index
    %204 = vector.load %arg1[%c432, %c0_88] : memref<2288x128xbf16, #tpu.memory_space<vmem>>, vector<64x64xbf16>
    %cst_89 = arith.constant dense<0.000000e+00> : vector<32x64xf32>
    %205 = tpu.matmul %203, %204, %cst_89 {dimension_numbers = #tpu.dot_dimension_numbers<[1], [0], [0], [1], [0, 0, 1, 1], [], []>} : vector<32x64xbf16>, vector<64x64xbf16>, vector<32x64xf32> -> vector<32x64xf32>
    %206 = arith.addf %202, %205 : vector<32x64xf32>
    %207 = arith.truncf %185 : vector<32x64xf32> to vector<32x64xbf16>
    %c496 = arith.constant 496 : index
    %c0_90 = arith.constant 0 : index
    %208 = vector.load %arg1[%c496, %c0_90] : memref<2288x128xbf16, #tpu.memory_space<vmem>>, vector<64x64xbf16>
    %cst_91 = arith.constant dense<0.000000e+00> : vector<32x64xf32>
    %209 = tpu.matmul %207, %208, %cst_91 {dimension_numbers = #tpu.dot_dimension_numbers<[1], [0], [0], [1], [0, 0, 1, 1], [], []>} : vector<32x64xbf16>, vector<64x64xbf16>, vector<32x64xf32> -> vector<32x64xf32>
    %210 = arith.addf %206, %209 : vector<32x64xf32>
    %c7 = arith.constant 7 : index
    %c0_92 = arith.constant 0 : index
    %211 = vector.load %arg2[%c7, %c0_92] : memref<16x128xf32, #tpu.memory_space<vmem>>, vector<1x64xf32>
    %212 = vector.broadcast %211 : vector<1x64xf32> to vector<32x64xf32>
    %213 = arith.addf %210, %212 : vector<32x64xf32>
    %cst_93 = arith.constant 0.000000e+00 : f32
    %214 = vector.broadcast %cst_93 : f32 to vector<32x64xf32>
    %215 = arith.maximumf %213, %214 : vector<32x64xf32>
    %216 = arith.truncf %155 : vector<32x32xf32> to vector<32x32xbf16>
    %c560 = arith.constant 560 : index
    %c0_94 = arith.constant 0 : index
    %217 = vector.load %arg1[%c560, %c0_94] : memref<2288x128xbf16, #tpu.memory_space<vmem>>, vector<32x64xbf16>
    %cst_95 = arith.constant dense<0.000000e+00> : vector<32x64xf32>
    %218 = tpu.matmul %216, %217, %cst_95 {dimension_numbers = #tpu.dot_dimension_numbers<[1], [0], [0], [1], [0, 0, 1, 1], [], []>} : vector<32x32xbf16>, vector<32x64xbf16>, vector<32x64xf32> -> vector<32x64xf32>
    %c8 = arith.constant 8 : index
    %c0_96 = arith.constant 0 : index
    %219 = vector.load %arg2[%c8, %c0_96] : memref<16x128xf32, #tpu.memory_space<vmem>>, vector<1x64xf32>
    %220 = vector.broadcast %219 : vector<1x64xf32> to vector<32x64xf32>
    %221 = arith.addf %218, %220 : vector<32x64xf32>
    %222 = arith.addf %215, %221 : vector<32x64xf32>
    %cst_97 = arith.constant 0.000000e+00 : f32
    %223 = vector.broadcast %cst_97 : f32 to vector<32x64xf32>
    %224 = arith.maximumf %222, %223 : vector<32x64xf32>
    %225 = vector.extract_strided_slice %224 {offsets = [0, 0], sizes = [1, 64], strides = [1, 1]} : vector<32x64xf32> to vector<1x64xf32>
    %c16_i32_98 = arith.constant 16 : i32
    %226 = vector.broadcast %c16_i32_98 : i32 to vector<32x1xi32>
    %227 = arith.cmpi sge, %0, %226 : vector<32x1xi32>
    %228 = vector.extract_strided_slice %224 {offsets = [16, 0], sizes = [1, 64], strides = [1, 1]} : vector<32x64xf32> to vector<1x64xf32>
    %229 = vector.shape_cast %227 : vector<32x1xi1> to vector<32x1xi1>
    %230 = vector.broadcast %229 : vector<32x1xi1> to vector<32x64xi1>
    %231 = vector.shape_cast %228 : vector<1x64xf32> to vector<1x64xf32>
    %232 = vector.broadcast %231 : vector<1x64xf32> to vector<32x64xf32>
    %233 = vector.shape_cast %225 : vector<1x64xf32> to vector<1x64xf32>
    %234 = vector.broadcast %233 : vector<1x64xf32> to vector<32x64xf32>
    %235 = arith.select %230, %232, %234 : vector<32x64xi1>, vector<32x64xf32>
    %236 = vector.extract_strided_slice %224 {offsets = [15, 0], sizes = [1, 64], strides = [1, 1]} : vector<32x64xf32> to vector<1x64xf32>
    %c16_i32_99 = arith.constant 16 : i32
    %237 = vector.broadcast %c16_i32_99 : i32 to vector<32x1xi32>
    %238 = arith.cmpi sge, %0, %237 : vector<32x1xi32>
    %239 = vector.extract_strided_slice %224 {offsets = [31, 0], sizes = [1, 64], strides = [1, 1]} : vector<32x64xf32> to vector<1x64xf32>
    %240 = vector.shape_cast %238 : vector<32x1xi1> to vector<32x1xi1>
    %241 = vector.broadcast %240 : vector<32x1xi1> to vector<32x64xi1>
    %242 = vector.shape_cast %239 : vector<1x64xf32> to vector<1x64xf32>
    %243 = vector.broadcast %242 : vector<1x64xf32> to vector<32x64xf32>
    %244 = vector.shape_cast %236 : vector<1x64xf32> to vector<1x64xf32>
    %245 = vector.broadcast %244 : vector<1x64xf32> to vector<32x64xf32>
    %246 = arith.select %241, %243, %245 : vector<32x64xi1>, vector<32x64xf32>
    %c3_i32 = arith.constant 3 : i32
    %247 = tpu.dynamic_rotate %224 by %c3_i32 dim 0 : vector<32x64xf32>, i32 -> vector<32x64xf32>
    %c3_i32_100 = arith.constant 3 : i32
    %248 = vector.broadcast %c3_i32_100 : i32 to vector<32x1xi32>
    %249 = arith.cmpi sge, %16, %248 : vector<32x1xi32>
    %250 = vector.shape_cast %249 : vector<32x1xi1> to vector<32x1xi1>
    %251 = vector.broadcast %250 : vector<32x1xi1> to vector<32x64xi1>
    %252 = arith.select %251, %247, %235 : vector<32x64xi1>, vector<32x64xf32>
    %c2_i32_101 = arith.constant 2 : i32
    %253 = tpu.dynamic_rotate %224 by %c2_i32_101 dim 0 : vector<32x64xf32>, i32 -> vector<32x64xf32>
    %c2_i32_102 = arith.constant 2 : i32
    %254 = vector.broadcast %c2_i32_102 : i32 to vector<32x1xi32>
    %255 = arith.cmpi sge, %16, %254 : vector<32x1xi32>
    %256 = vector.shape_cast %255 : vector<32x1xi1> to vector<32x1xi1>
    %257 = vector.broadcast %256 : vector<32x1xi1> to vector<32x64xi1>
    %258 = arith.select %257, %253, %235 : vector<32x64xi1>, vector<32x64xf32>
    %c1_i32_103 = arith.constant 1 : i32
    %259 = tpu.dynamic_rotate %224 by %c1_i32_103 dim 0 : vector<32x64xf32>, i32 -> vector<32x64xf32>
    %c1_i32_104 = arith.constant 1 : i32
    %260 = vector.broadcast %c1_i32_104 : i32 to vector<32x1xi32>
    %261 = arith.cmpi sge, %16, %260 : vector<32x1xi32>
    %262 = vector.shape_cast %261 : vector<32x1xi1> to vector<32x1xi1>
    %263 = vector.broadcast %262 : vector<32x1xi1> to vector<32x64xi1>
    %264 = arith.select %263, %259, %235 : vector<32x64xi1>, vector<32x64xf32>
    %c31_i32 = arith.constant 31 : i32
    %265 = tpu.dynamic_rotate %224 by %c31_i32 dim 0 : vector<32x64xf32>, i32 -> vector<32x64xf32>
    %c15_i32 = arith.constant 15 : i32
    %266 = vector.broadcast %c15_i32 : i32 to vector<32x1xi32>
    %267 = arith.cmpi slt, %16, %266 : vector<32x1xi32>
    %268 = vector.shape_cast %267 : vector<32x1xi1> to vector<32x1xi1>
    %269 = vector.broadcast %268 : vector<32x1xi1> to vector<32x64xi1>
    %270 = arith.select %269, %265, %246 : vector<32x64xi1>, vector<32x64xf32>
    %c30_i32 = arith.constant 30 : i32
    %271 = tpu.dynamic_rotate %224 by %c30_i32 dim 0 : vector<32x64xf32>, i32 -> vector<32x64xf32>
    %c14_i32 = arith.constant 14 : i32
    %272 = vector.broadcast %c14_i32 : i32 to vector<32x1xi32>
    %273 = arith.cmpi slt, %16, %272 : vector<32x1xi32>
    %274 = vector.shape_cast %273 : vector<32x1xi1> to vector<32x1xi1>
    %275 = vector.broadcast %274 : vector<32x1xi1> to vector<32x64xi1>
    %276 = arith.select %275, %271, %246 : vector<32x64xi1>, vector<32x64xf32>
    %c29_i32 = arith.constant 29 : i32
    %277 = tpu.dynamic_rotate %224 by %c29_i32 dim 0 : vector<32x64xf32>, i32 -> vector<32x64xf32>
    %c13_i32 = arith.constant 13 : i32
    %278 = vector.broadcast %c13_i32 : i32 to vector<32x1xi32>
    %279 = arith.cmpi slt, %16, %278 : vector<32x1xi32>
    %280 = vector.shape_cast %279 : vector<32x1xi1> to vector<32x1xi1>
    %281 = vector.broadcast %280 : vector<32x1xi1> to vector<32x64xi1>
    %282 = arith.select %281, %277, %246 : vector<32x64xi1>, vector<32x64xf32>
    %283 = arith.truncf %252 : vector<32x64xf32> to vector<32x64xbf16>
    %c592 = arith.constant 592 : index
    %c0_105 = arith.constant 0 : index
    %284 = vector.load %arg1[%c592, %c0_105] : memref<2288x128xbf16, #tpu.memory_space<vmem>>, vector<64x128xbf16>
    %cst_106 = arith.constant dense<0.000000e+00> : vector<32x128xf32>
    %285 = tpu.matmul %283, %284, %cst_106 {dimension_numbers = #tpu.dot_dimension_numbers<[1], [0], [0], [1], [0, 0, 1, 1], [], []>} : vector<32x64xbf16>, vector<64x128xbf16>, vector<32x128xf32> -> vector<32x128xf32>
    %286 = arith.truncf %258 : vector<32x64xf32> to vector<32x64xbf16>
    %c656 = arith.constant 656 : index
    %c0_107 = arith.constant 0 : index
    %287 = vector.load %arg1[%c656, %c0_107] : memref<2288x128xbf16, #tpu.memory_space<vmem>>, vector<64x128xbf16>
    %cst_108 = arith.constant dense<0.000000e+00> : vector<32x128xf32>
    %288 = tpu.matmul %286, %287, %cst_108 {dimension_numbers = #tpu.dot_dimension_numbers<[1], [0], [0], [1], [0, 0, 1, 1], [], []>} : vector<32x64xbf16>, vector<64x128xbf16>, vector<32x128xf32> -> vector<32x128xf32>
    %289 = arith.addf %285, %288 : vector<32x128xf32>
    %290 = arith.truncf %264 : vector<32x64xf32> to vector<32x64xbf16>
    %c720 = arith.constant 720 : index
    %c0_109 = arith.constant 0 : index
    %291 = vector.load %arg1[%c720, %c0_109] : memref<2288x128xbf16, #tpu.memory_space<vmem>>, vector<64x128xbf16>
    %cst_110 = arith.constant dense<0.000000e+00> : vector<32x128xf32>
    %292 = tpu.matmul %290, %291, %cst_110 {dimension_numbers = #tpu.dot_dimension_numbers<[1], [0], [0], [1], [0, 0, 1, 1], [], []>} : vector<32x64xbf16>, vector<64x128xbf16>, vector<32x128xf32> -> vector<32x128xf32>
    %293 = arith.addf %289, %292 : vector<32x128xf32>
    %294 = arith.truncf %224 : vector<32x64xf32> to vector<32x64xbf16>
    %c784 = arith.constant 784 : index
    %c0_111 = arith.constant 0 : index
    %295 = vector.load %arg1[%c784, %c0_111] : memref<2288x128xbf16, #tpu.memory_space<vmem>>, vector<64x128xbf16>
    %cst_112 = arith.constant dense<0.000000e+00> : vector<32x128xf32>
    %296 = tpu.matmul %294, %295, %cst_112 {dimension_numbers = #tpu.dot_dimension_numbers<[1], [0], [0], [1], [0, 0, 1, 1], [], []>} : vector<32x64xbf16>, vector<64x128xbf16>, vector<32x128xf32> -> vector<32x128xf32>
    %297 = arith.addf %293, %296 : vector<32x128xf32>
    %298 = arith.truncf %270 : vector<32x64xf32> to vector<32x64xbf16>
    %c848 = arith.constant 848 : index
    %c0_113 = arith.constant 0 : index
    %299 = vector.load %arg1[%c848, %c0_113] : memref<2288x128xbf16, #tpu.memory_space<vmem>>, vector<64x128xbf16>
    %cst_114 = arith.constant dense<0.000000e+00> : vector<32x128xf32>
    %300 = tpu.matmul %298, %299, %cst_114 {dimension_numbers = #tpu.dot_dimension_numbers<[1], [0], [0], [1], [0, 0, 1, 1], [], []>} : vector<32x64xbf16>, vector<64x128xbf16>, vector<32x128xf32> -> vector<32x128xf32>
    %301 = arith.addf %297, %300 : vector<32x128xf32>
    %302 = arith.truncf %276 : vector<32x64xf32> to vector<32x64xbf16>
    %c912 = arith.constant 912 : index
    %c0_115 = arith.constant 0 : index
    %303 = vector.load %arg1[%c912, %c0_115] : memref<2288x128xbf16, #tpu.memory_space<vmem>>, vector<64x128xbf16>
    %cst_116 = arith.constant dense<0.000000e+00> : vector<32x128xf32>
    %304 = tpu.matmul %302, %303, %cst_116 {dimension_numbers = #tpu.dot_dimension_numbers<[1], [0], [0], [1], [0, 0, 1, 1], [], []>} : vector<32x64xbf16>, vector<64x128xbf16>, vector<32x128xf32> -> vector<32x128xf32>
    %305 = arith.addf %301, %304 : vector<32x128xf32>
    %306 = arith.truncf %282 : vector<32x64xf32> to vector<32x64xbf16>
    %c976 = arith.constant 976 : index
    %c0_117 = arith.constant 0 : index
    %307 = vector.load %arg1[%c976, %c0_117] : memref<2288x128xbf16, #tpu.memory_space<vmem>>, vector<64x128xbf16>
    %cst_118 = arith.constant dense<0.000000e+00> : vector<32x128xf32>
    %308 = tpu.matmul %306, %307, %cst_118 {dimension_numbers = #tpu.dot_dimension_numbers<[1], [0], [0], [1], [0, 0, 1, 1], [], []>} : vector<32x64xbf16>, vector<64x128xbf16>, vector<32x128xf32> -> vector<32x128xf32>
    %309 = arith.addf %305, %308 : vector<32x128xf32>
    %c9 = arith.constant 9 : index
    %c0_119 = arith.constant 0 : index
    %310 = vector.load %arg2[%c9, %c0_119] : memref<16x128xf32, #tpu.memory_space<vmem>>, vector<1x128xf32>
    %311 = vector.broadcast %310 : vector<1x128xf32> to vector<32x128xf32>
    %312 = arith.addf %309, %311 : vector<32x128xf32>
    %cst_120 = arith.constant 0.000000e+00 : f32
    %313 = vector.broadcast %cst_120 : f32 to vector<32x128xf32>
    %314 = arith.cmpf ogt, %312, %313 : vector<32x128xf32>
    %cst_121 = arith.constant 0.00999999977 : f32
    %315 = vector.broadcast %cst_121 : f32 to vector<32x128xf32>
    %316 = arith.mulf %315, %312 : vector<32x128xf32>
    %317 = arith.select %314, %312, %316 : vector<32x128xi1>, vector<32x128xf32>
    %c2_i32_122 = arith.constant 2 : i32
    %318 = tpu.dynamic_rotate %317 by %c2_i32_122 dim 0 : vector<32x128xf32>, i32 -> vector<32x128xf32>
    %c2_i32_123 = arith.constant 2 : i32
    %319 = vector.broadcast %c2_i32_123 : i32 to vector<32x1xi32>
    %320 = arith.cmpi sge, %16, %319 : vector<32x1xi32>
    %cst_124 = arith.constant 0.000000e+00 : f32
    %321 = vector.shape_cast %320 : vector<32x1xi1> to vector<32x1xi1>
    %322 = vector.broadcast %321 : vector<32x1xi1> to vector<32x128xi1>
    %323 = vector.broadcast %cst_124 : f32 to vector<32x128xf32>
    %324 = arith.select %322, %318, %323 : vector<32x128xi1>, vector<32x128xf32>
    %c1_i32_125 = arith.constant 1 : i32
    %325 = tpu.dynamic_rotate %317 by %c1_i32_125 dim 0 : vector<32x128xf32>, i32 -> vector<32x128xf32>
    %c1_i32_126 = arith.constant 1 : i32
    %326 = vector.broadcast %c1_i32_126 : i32 to vector<32x1xi32>
    %327 = arith.cmpi sge, %16, %326 : vector<32x1xi32>
    %cst_127 = arith.constant 0.000000e+00 : f32
    %328 = vector.shape_cast %327 : vector<32x1xi1> to vector<32x1xi1>
    %329 = vector.broadcast %328 : vector<32x1xi1> to vector<32x128xi1>
    %330 = vector.broadcast %cst_127 : f32 to vector<32x128xf32>
    %331 = arith.select %329, %325, %330 : vector<32x128xi1>, vector<32x128xf32>
    %c31_i32_128 = arith.constant 31 : i32
    %332 = tpu.dynamic_rotate %317 by %c31_i32_128 dim 0 : vector<32x128xf32>, i32 -> vector<32x128xf32>
    %c15_i32_129 = arith.constant 15 : i32
    %333 = vector.broadcast %c15_i32_129 : i32 to vector<32x1xi32>
    %334 = arith.cmpi slt, %16, %333 : vector<32x1xi32>
    %cst_130 = arith.constant 0.000000e+00 : f32
    %335 = vector.shape_cast %334 : vector<32x1xi1> to vector<32x1xi1>
    %336 = vector.broadcast %335 : vector<32x1xi1> to vector<32x128xi1>
    %337 = vector.broadcast %cst_130 : f32 to vector<32x128xf32>
    %338 = arith.select %336, %332, %337 : vector<32x128xi1>, vector<32x128xf32>
    %c30_i32_131 = arith.constant 30 : i32
    %339 = tpu.dynamic_rotate %317 by %c30_i32_131 dim 0 : vector<32x128xf32>, i32 -> vector<32x128xf32>
    %c14_i32_132 = arith.constant 14 : i32
    %340 = vector.broadcast %c14_i32_132 : i32 to vector<32x1xi32>
    %341 = arith.cmpi slt, %16, %340 : vector<32x1xi32>
    %cst_133 = arith.constant 0.000000e+00 : f32
    %342 = vector.shape_cast %341 : vector<32x1xi1> to vector<32x1xi1>
    %343 = vector.broadcast %342 : vector<32x1xi1> to vector<32x128xi1>
    %344 = vector.broadcast %cst_133 : f32 to vector<32x128xf32>
    %345 = arith.select %343, %339, %344 : vector<32x128xi1>, vector<32x128xf32>
    %346 = tpu.concatenate %324, %331, %317, %338, %345 in 1 : vector<32x128xf32>, vector<32x128xf32>, vector<32x128xf32>, vector<32x128xf32>, vector<32x128xf32> -> vector<32x640xf32>
    %347 = arith.truncf %346 : vector<32x640xf32> to vector<32x640xbf16>
    %c1040 = arith.constant 1040 : index
    %c0_134 = arith.constant 0 : index
    %348 = vector.load %arg1[%c1040, %c0_134] : memref<2288x128xbf16, #tpu.memory_space<vmem>>, vector<640x128xbf16>
    %cst_135 = arith.constant dense<0.000000e+00> : vector<32x128xf32>
    %349 = tpu.matmul %347, %348, %cst_135 {dimension_numbers = #tpu.dot_dimension_numbers<[1], [0], [0], [1], [0, 0, 1, 1], [], []>} : vector<32x640xbf16>, vector<640x128xbf16>, vector<32x128xf32> -> vector<32x128xf32>
    %c10 = arith.constant 10 : index
    %c0_136 = arith.constant 0 : index
    %350 = vector.load %arg2[%c10, %c0_136] : memref<16x128xf32, #tpu.memory_space<vmem>>, vector<1x128xf32>
    %351 = vector.broadcast %350 : vector<1x128xf32> to vector<32x128xf32>
    %352 = arith.addf %349, %351 : vector<32x128xf32>
    %cst_137 = arith.constant 0.000000e+00 : f32
    %353 = vector.broadcast %cst_137 : f32 to vector<32x128xf32>
    %354 = arith.cmpf ogt, %352, %353 : vector<32x128xf32>
    %cst_138 = arith.constant 0.00999999977 : f32
    %355 = vector.broadcast %cst_138 : f32 to vector<32x128xf32>
    %356 = arith.mulf %355, %352 : vector<32x128xf32>
    %357 = arith.select %354, %352, %356 : vector<32x128xi1>, vector<32x128xf32>
    %c1_i32_139 = arith.constant 1 : i32
    %358 = tpu.dynamic_rotate %357 by %c1_i32_139 dim 0 : vector<32x128xf32>, i32 -> vector<32x128xf32>
    %c1_i32_140 = arith.constant 1 : i32
    %359 = vector.broadcast %c1_i32_140 : i32 to vector<32x1xi32>
    %360 = arith.cmpi sge, %16, %359 : vector<32x1xi32>
    %cst_141 = arith.constant 0.000000e+00 : f32
    %361 = vector.shape_cast %360 : vector<32x1xi1> to vector<32x1xi1>
    %362 = vector.broadcast %361 : vector<32x1xi1> to vector<32x128xi1>
    %363 = vector.broadcast %cst_141 : f32 to vector<32x128xf32>
    %364 = arith.select %362, %358, %363 : vector<32x128xi1>, vector<32x128xf32>
    %c31_i32_142 = arith.constant 31 : i32
    %365 = tpu.dynamic_rotate %357 by %c31_i32_142 dim 0 : vector<32x128xf32>, i32 -> vector<32x128xf32>
    %c15_i32_143 = arith.constant 15 : i32
    %366 = vector.broadcast %c15_i32_143 : i32 to vector<32x1xi32>
    %367 = arith.cmpi slt, %16, %366 : vector<32x1xi32>
    %cst_144 = arith.constant 0.000000e+00 : f32
    %368 = vector.shape_cast %367 : vector<32x1xi1> to vector<32x1xi1>
    %369 = vector.broadcast %368 : vector<32x1xi1> to vector<32x128xi1>
    %370 = vector.broadcast %cst_144 : f32 to vector<32x128xf32>
    %371 = arith.select %369, %365, %370 : vector<32x128xi1>, vector<32x128xf32>
    %372 = tpu.concatenate %364, %357, %371 in 1 : vector<32x128xf32>, vector<32x128xf32>, vector<32x128xf32> -> vector<32x384xf32>
    %373 = arith.truncf %372 : vector<32x384xf32> to vector<32x384xbf16>
    %c1680 = arith.constant 1680 : index
    %c0_145 = arith.constant 0 : index
    %374 = vector.load %arg1[%c1680, %c0_145] : memref<2288x128xbf16, #tpu.memory_space<vmem>>, vector<384x128xbf16>
    %cst_146 = arith.constant dense<0.000000e+00> : vector<32x128xf32>
    %375 = tpu.matmul %373, %374, %cst_146 {dimension_numbers = #tpu.dot_dimension_numbers<[1], [0], [0], [1], [0, 0, 1, 1], [], []>} : vector<32x384xbf16>, vector<384x128xbf16>, vector<32x128xf32> -> vector<32x128xf32>
    %c11 = arith.constant 11 : index
    %c0_147 = arith.constant 0 : index
    %376 = vector.load %arg2[%c11, %c0_147] : memref<16x128xf32, #tpu.memory_space<vmem>>, vector<1x128xf32>
    %377 = vector.broadcast %376 : vector<1x128xf32> to vector<32x128xf32>
    %378 = arith.addf %375, %377 : vector<32x128xf32>
    %cst_148 = arith.constant 0.000000e+00 : f32
    %379 = vector.broadcast %cst_148 : f32 to vector<32x128xf32>
    %380 = arith.cmpf ogt, %378, %379 : vector<32x128xf32>
    %cst_149 = arith.constant 0.00999999977 : f32
    %381 = vector.broadcast %cst_149 : f32 to vector<32x128xf32>
    %382 = arith.mulf %381, %378 : vector<32x128xf32>
    %383 = arith.select %380, %378, %382 : vector<32x128xi1>, vector<32x128xf32>
    %384 = arith.truncf %383 : vector<32x128xf32> to vector<32x128xbf16>
    %c2064 = arith.constant 2064 : index
    %c0_150 = arith.constant 0 : index
    %385 = vector.load %arg1[%c2064, %c0_150] : memref<2288x128xbf16, #tpu.memory_space<vmem>>, vector<128x64xbf16>
    %cst_151 = arith.constant dense<0.000000e+00> : vector<32x64xf32>
    %386 = tpu.matmul %384, %385, %cst_151 {dimension_numbers = #tpu.dot_dimension_numbers<[1], [0], [0], [1], [0, 0, 1, 1], [], []>} : vector<32x128xbf16>, vector<128x64xbf16>, vector<32x64xf32> -> vector<32x64xf32>
    %c12 = arith.constant 12 : index
    %c0_152 = arith.constant 0 : index
    %387 = vector.load %arg2[%c12, %c0_152] : memref<16x128xf32, #tpu.memory_space<vmem>>, vector<1x64xf32>
    %388 = vector.broadcast %387 : vector<1x64xf32> to vector<32x64xf32>
    %389 = arith.addf %386, %388 : vector<32x64xf32>
    %cst_153 = arith.constant 0.000000e+00 : f32
    %390 = vector.broadcast %cst_153 : f32 to vector<32x64xf32>
    %391 = arith.cmpf ogt, %389, %390 : vector<32x64xf32>
    %cst_154 = arith.constant 0.00999999977 : f32
    %392 = vector.broadcast %cst_154 : f32 to vector<32x64xf32>
    %393 = arith.mulf %392, %389 : vector<32x64xf32>
    %394 = arith.select %391, %389, %393 : vector<32x64xi1>, vector<32x64xf32>
    %395 = arith.truncf %394 : vector<32x64xf32> to vector<32x64xbf16>
    %c2192 = arith.constant 2192 : index
    %c0_155 = arith.constant 0 : index
    %396 = vector.load %arg1[%c2192, %c0_155] : memref<2288x128xbf16, #tpu.memory_space<vmem>>, vector<64x32xbf16>
    %cst_156 = arith.constant dense<0.000000e+00> : vector<32x32xf32>
    %397 = tpu.matmul %395, %396, %cst_156 {dimension_numbers = #tpu.dot_dimension_numbers<[1], [0], [0], [1], [0, 0, 1, 1], [], []>} : vector<32x64xbf16>, vector<64x32xbf16>, vector<32x32xf32> -> vector<32x32xf32>
    %c13 = arith.constant 13 : index
    %c0_157 = arith.constant 0 : index
    %398 = vector.load %arg2[%c13, %c0_157] : memref<16x128xf32, #tpu.memory_space<vmem>>, vector<1x32xf32>
    %399 = vector.broadcast %398 : vector<1x32xf32> to vector<32x32xf32>
    %400 = arith.addf %397, %399 : vector<32x32xf32>
    %cst_158 = arith.constant 0.000000e+00 : f32
    %401 = vector.broadcast %cst_158 : f32 to vector<32x32xf32>
    %402 = arith.cmpf ogt, %400, %401 : vector<32x32xf32>
    %cst_159 = arith.constant 0.00999999977 : f32
    %403 = vector.broadcast %cst_159 : f32 to vector<32x32xf32>
    %404 = arith.mulf %403, %400 : vector<32x32xf32>
    %405 = arith.select %402, %400, %404 : vector<32x32xi1>, vector<32x32xf32>
    %406 = arith.truncf %405 : vector<32x32xf32> to vector<32x32xbf16>
    %c2256 = arith.constant 2256 : index
    %c0_160 = arith.constant 0 : index
    %407 = vector.load %arg1[%c2256, %c0_160] : memref<2288x128xbf16, #tpu.memory_space<vmem>>, vector<32x1xbf16>
    %cst_161 = arith.constant dense<0.000000e+00> : vector<32x1xf32>
    %408 = tpu.matmul %406, %407, %cst_161 {dimension_numbers = #tpu.dot_dimension_numbers<[1], [0], [0], [1], [0, 0, 1, 1], [], []>} : vector<32x32xbf16>, vector<32x1xbf16>, vector<32x1xf32> -> vector<32x1xf32>
    %c14 = arith.constant 14 : index
    %c0_162 = arith.constant 0 : index
    %409 = vector.load %arg2[%c14, %c0_162] : memref<16x128xf32, #tpu.memory_space<vmem>>, vector<1x1xf32>
    %410 = vector.broadcast %409 : vector<1x1xf32> to vector<32x1xf32>
    %411 = arith.addf %408, %410 : vector<32x1xf32>
    %412 = arith.negf %411 : vector<32x1xf32>
    %413 = math.exp %412 : vector<32x1xf32>
    %cst_163 = arith.constant 1.000000e+00 : f32
    %414 = vector.broadcast %cst_163 : f32 to vector<32x1xf32>
    %415 = arith.addf %414, %413 : vector<32x1xf32>
    %416 = arith.divf %414, %415 : vector<32x1xf32>
    %c0_164 = arith.constant 0 : index
    %c0_165 = arith.constant 0 : index
    %417 = vector.load %arg3[%c0_164, %c0_165] : memref<32x1xf32, #tpu.memory_space<vmem>>, vector<32x1xf32>
    tpu.vector_store %arg3[%c0_164, %c0_165], %416 {strides = array<i32>} : memref<32x1xf32, #tpu.memory_space<vmem>>, vector<32x1xf32>,
    return
  }
}

</mosaic_0001>

<llo_original>
// kernel: forward.1
$region0: #{forward.1}
  #allocation0 [shape = 'u32[]', space=smem, size = 0x4, offset = 0x4, fixed_abs, tag = 'smem constant byte address 0x4 - core index']
  #allocation1 [shape = 'u32[144,128]{1,0:T(1,128)}', space=vmem, size = 0x12000, scoped, tag = 'internal scratch']
  %s0 = inlined_call_operand.vmem [shape: f32[32,10], index: 0, kind: input, shape index: {}]
  %s1 = inlined_call_operand.hbm [shape: bf16[2288,128], index: 1, kind: input, shape index: {}]
  %s2 = inlined_call_operand.vmem [shape: f32[16,128], index: 2, kind: input, shape index: {}]
  %s3 = inlined_call_operand.vmem [shape: f32[32,1], index: 3, kind: output, shape index: {}]
  %s4 = sld [smem:[#allocation0]]
  $region26: #{forward.1} parent=0
    _
  %s6 = ssub.s32 1, %s4
  %s7 = scalar_select 0, %s6, %s4
  $region1: #{forward.1} parent=0
    #allocation2 [shape = 'u8[585728]{0}', space=vmem, size = 0x8f000, scoped, tag = 'input window, operand 1, single buffered']
    #allocation3 [shape = 's32[1]{0}', space=sflag, size = 0x4, scoped, tag = 'scoped memory for forward.1']
    %8 = vsyncpa [#allocation3], 0
    // Predicated region
    $region2: #{forward.1} parent=1 // pred_check
      _
    $region3: #{forward.1} parent=1 // pred_check_branch
      %10 = sbr.rel (0) target = $region5
    $region4: #{forward.1} parent=1 // pred_region
      _
    $region5: #{forward.1} parent=1 // pred_fallthru
      _
    // Predicated region
    $region6: #{forward.1} parent=1 // pred_check
      _
    $region7: #{forward.1} parent=1 // pred_check_branch
      %12 = sbr.rel (0) target = $region9
    $region8: #{forward.1} parent=1 // pred_region
      %s14 = ssub.s32 18304, 18304
      %15 = vsyncadd [#allocation3], %s14
      %s16 = sshll.u32 [#allocation2], 4
      %s17 = int_to_ptr.vmem [resolvable:$true] %s16
      %22 = dma.hbm_to_vmem [thread:$0]  %s1, 18304, %s17, [#allocation3], 64, 64, 4
    $region9: #{forward.1} parent=1 // pred_fallthru
      _
    // Predicated region
    $region10: #{forward.1} parent=1 // pred_check
      _
    $region11: #{forward.1} parent=1 // pred_check_branch
      %24 = sbr.rel (0) target = $region13
    $region12: #{forward.1} parent=1 // pred_region
      _
    $region13: #{forward.1} parent=1 // pred_fallthru
      _
    // Predicated region
    $region14: #{forward.1} parent=1 // pred_check
      _
    $region15: #{forward.1} parent=1 // pred_check_branch
      %26 = sbr.rel (0) target = $region17
    $region16: #{forward.1} parent=1 // pred_region
      %27 = dma.done [#allocation3], 18304
    $region17: #{forward.1} parent=1 // pred_fallthru
      _
    %v29 = vlaneseq
    %v30 = vshrl.u32 %v29, 7
    %v31 = vadd.s32 %v30, 8
    %v32 = vadd.s32 %v30, 16
    %v33 = vadd.s32 %v30, 24
    %vm34 = vcmp.lt.s32.totalorder %v30, 0
    %v35 = vsub.s32 0, %v30
    %v36 = vsel %vm34, %v35, %v30
    %v37 = vshrl.u32 %v36, 4
    %v38 = vand.u32 %v36, 15
    %v39 = vsub.s32 0, %v38
    %v40 = vsel %vm34, %v39, %v38
    %vm41 = vcmp.lt.s32.totalorder %v31, 0
    %v42 = vsub.s32 0, %v31
    %v43 = vsel %vm41, %v42, %v31
    %v44 = vshrl.u32 %v43, 4
    %v45 = vand.u32 %v43, 15
    %v46 = vsub.s32 0, %v45
    %v47 = vsel %vm41, %v46, %v45
    %vm48 = vcmp.lt.s32.totalorder %v32, 0
    %v49 = vsub.s32 0, %v32
    %v50 = vsel %vm48, %v49, %v32
    %v51 = vshrl.u32 %v50, 4
    %v52 = vand.u32 %v50, 15
    %v53 = vsub.s32 0, %v52
    %v54 = vsel %vm48, %v53, %v52
    %vm55 = vcmp.lt.s32.totalorder %v33, 0
    %v56 = vsub.s32 0, %v33
    %v57 = vsel %vm55, %v56, %v33
    %v58 = vshrl.u32 %v57, 4
    %v59 = vand.u32 %v57, 15
    %v60 = vsub.s32 0, %v59
    %v61 = vsel %vm55, %v60, %v59
    %vm62 = vcmp.ne.s32.totalorder %v40, 0
    %vm63 = vcmp.ne.s32.totalorder %v47, 0
    %vm64 = vcmp.ne.s32.totalorder %v54, 0
    %vm65 = vcmp.ne.s32.totalorder %v61, 0
    %vm66 = vcmp.lt.s32.totalorder %v40, 0
    %vm67 = vcmp.lt.s32.totalorder %v47, 0
    %vm68 = vcmp.lt.s32.totalorder %v54, 0
    %vm69 = vcmp.lt.s32.totalorder %v61, 0
    %vm70 = vmand %vm66, %vm62
    %vm71 = vmand %vm67, %vm63
    %vm72 = vmand %vm68, %vm64
    %vm73 = vmand %vm69, %vm65
    %v74 = vadd.s32 %v40, 16
    %v75 = vadd.s32 %v47, 16
    %v76 = vadd.s32 %v54, 16
    %v77 = vadd.s32 %v61, 16
    %v78 = vsel %vm70, %v74, %v40
    %v79 = vsel %vm71, %v75, %v47
    %v80 = vsel %vm72, %v76, %v54
    %v81 = vsel %vm73, %v77, %v61
    %v82 = vld [vmem:[%s0] sm:$0xff]
    %v83 = vld [vmem:[%s0 + $0x8] sm:$0xff]
    %v84 = vld [vmem:[%s0 + $0x10] sm:$0xff]
    %v85 = vld [vmem:[%s0 + $0x18] sm:$0xff]
    %v86 = vrot.slane %v82, 6
    %v87 = vrot.slane %v83, 6
    %v88 = vrot.slane %v84, 6
    %v89 = vrot.slane %v85, 6
    %vm90 = vcmp.lt.s32.totalorder %v30, 2
    %v91 = vsel %vm90, %v88, %v89
    %v92 = vsel %vm90, %v87, %v88
    %v93 = vsel %vm90, %v86, %v87
    %v94 = vsel %vm90, %v89, %v86
    %vm95 = vcmp.ge.s32.totalorder %v78, 2
    %vm96 = vcmp.ge.s32.totalorder %v79, 2
    %vm97 = vcmp.ge.s32.totalorder %v80, 2
    %vm98 = vcmp.ge.s32.totalorder %v81, 2
    %v99 = vsel %vm95, 1, 0
    %v100 = vsel %vm96, 1, 0
    %v101 = vsel %vm97, 1, 0
    %v102 = vsel %vm98, 1, 0
    %vm103 = vcmp.eq.s32.totalorder %v99, 1
    %vm104 = vcmp.eq.s32.totalorder %v100, 1
    %vm105 = vcmp.eq.s32.totalorder %v101, 1
    %vm106 = vcmp.eq.s32.totalorder %v102, 1
    %v107 = vsel %vm103, %v94, 0.0
    %v108 = vsel %vm104, %v93, 0.0
    %v109 = vsel %vm105, %v92, 0.0
    %v110 = vsel %vm106, %v91, 0.0
    %v111 = vrot.slane %v82, 7
    %v112 = vrot.slane %v83, 7
    %v113 = vrot.slane %v84, 7
    %v114 = vrot.slane %v85, 7
    %vm115 = vcmp.lt.s32.totalorder %v30, 1
    %v116 = vsel %vm115, %v113, %v114
    %v117 = vsel %vm115, %v112, %v113
    %v118 = vsel %vm115, %v111, %v112
    %v119 = vsel %vm115, %v114, %v111
    %vm120 = vcmp.ge.s32.totalorder %v78, 1
    %vm121 = vcmp.ge.s32.totalorder %v79, 1
    %vm122 = vcmp.ge.s32.totalorder %v80, 1
    %vm123 = vcmp.ge.s32.totalorder %v81, 1
    %v124 = vsel %vm120, 1, 0
    %v125 = vsel %vm121, 1, 0
    %v126 = vsel %vm122, 1, 0
    %v127 = vsel %vm123, 1, 0
    %vm128 = vcmp.eq.s32.totalorder %v124, 1
    %vm129 = vcmp.eq.s32.totalorder %v125, 1
    %vm130 = vcmp.eq.s32.totalorder %v126, 1
    %vm131 = vcmp.eq.s32.totalorder %v127, 1
    %v132 = vsel %vm128, %v119, 0.0
    %v133 = vsel %vm129, %v118, 0.0
    %v134 = vsel %vm130, %v117, 0.0
    %v135 = vsel %vm131, %v116, 0.0
    %v136 = vpack.c.bf16 %v108, %v107
    %v137 = vpack.c.bf16 %v110, %v109
    %v138 = vld [vmem:[#allocation2] sm:$0xf]
    %v139 = vld [vmem:[#allocation2 + $0x4] sm:$0x1]
    %v140 = vpack.c.bf16 %v133, %v132
    %v141 = vpack.c.bf16 %v135, %v134
    %v142 = vld [vmem:[#allocation2 + $0x8] sm:$0xf]
    %v143 = vld [vmem:[#allocation2 + $0xc] sm:$0x1]
    %v146 = vunpack.c.l.b16 %v142
    %v147 = vunpack.c.l.b16 %v143
    %v148 = vpack.c.b16 %v147, %v146
    %vm149 = vcmask 80896
    %v151 = vsel %vm149, %v140, 0
    %v154 = vsel %vm149, %v141, 0
    %vm156 = vcmask 1044480
    %v158 = vsel %vm156, %v148, 0
    %160 = vmatprep.subr.bf16.mxu0 0
    %161 = vmatpush1.bf16.msra.mxu0 %v158
    %162 = vmatprep.subr.bf16.mxu0 0
    %163 = vmatpush1.bf16.msra.mxu0 0
    %164 = vmatprep.subr.bf16.mxu0 0
    %165 = vmatpush1.bf16.msra.mxu0 0
    %166 = vmatprep.subr.bf16.mxu0 0
    %167 = vmatpush1.bf16.msra.mxu0 0
    %168 = vmatprep.subr.bf16.mxu0 0
    %169 = vmatpush1.bf16.msra.mxu0 0
    %170 = vmatprep.subr.bf16.mxu0 0
    %171 = vmatpush1.bf16.msra.mxu0 0
    %172 = vmatprep.subr.bf16.mxu0 0
    %173 = vmatpush1.bf16.msra.mxu0 0
    %174 = vmatprep.subr.bf16.mxu0 0
    %175 = vmatpush1.bf16.msra.mxu0 0
    %176 = vmatprep.subr.bf16.mxu0 0
    %177 = vmatpush1.bf16.msra.mxu0 0
    %178 = vmatprep.subr.bf16.mxu0 0
    %179 = vmatpush1.bf16.msra.mxu0 0
    %180 = vmatprep.subr.bf16.mxu0 0
    %181 = vmatpush1.bf16.msra.mxu0 0
    %182 = vmatprep.subr.bf16.mxu0 0
    %183 = vmatpush1.bf16.msra.mxu0 0
    %184 = vmatprep.subr.bf16.mxu0 0
    %185 = vmatpush1.bf16.msra.mxu0 0
    %186 = vmatprep.subr.bf16.mxu0 0
    %187 = vmatpush1.bf16.msra.mxu0 0
    %188 = vmatprep.subr.bf16.mxu0 0
    %189 = vmatpush1.bf16.msra.mxu0 0
    %190 = vmatprep.subr.bf16.mxu0 0
    %191 = vmatpush1.bf16.msra.mxu0 0
    %192 = vmatprep.mubr.bf16.mxu0 0
    %193 = vmatmul.mubr.bf16.gmra.mrb[0].mxu0 %v151
    %v194 = vpop.f32.mrb[0].mxu0
    %v195 = vadd.f32 0.0, %v194
    %v196 = vpop.f32.mrb[0].mxu0
    %v197 = vpop.f32.mrb[0].mxu0
    %v198 = vadd.f32 0.0, %v197
    %v199 = vpop.f32.mrb[0].mxu0
    %200 = vmatprep.mubr.bf16.mxu0 0
    %201 = vmatmul.mubr.bf16.gmra.mrb[0].mxu0 %v154
    %v202 = vpop.f32.mrb[0].mxu0
    %v203 = vadd.f32 0.0, %v202
    %v204 = vpop.f32.mrb[0].mxu0
    %v205 = vpop.f32.mrb[0].mxu0
    %v206 = vadd.f32 0.0, %v205
    %v207 = vpop.f32.mrb[0].mxu0
    %208 = vdwg.mxu0
    %v211 = vunpack.c.l.b16 %v138
    %v212 = vunpack.c.l.b16 %v139
    %v213 = vpack.c.b16 %v212, %v211
    %v215 = vsel %vm149, %v136, 0
    %v218 = vsel %vm149, %v137, 0
    %v221 = vsel %vm156, %v213, 0
    %223 = vmatprep.subr.bf16.mxu0 0
    %224 = vmatpush1.bf16.msra.mxu0 %v221
    %225 = vmatprep.subr.bf16.mxu0 0
    %226 = vmatpush1.bf16.msra.mxu0 0
    %227 = vmatprep.subr.bf16.mxu0 0
    %228 = vmatpush1.bf16.msra.mxu0 0
    %229 = vmatprep.subr.bf16.mxu0 0
    %230 = vmatpush1.bf16.msra.mxu0 0
    %231 = vmatprep.subr.bf16.mxu0 0
    %232 = vmatpush1.bf16.msra.mxu0 0
    %233 = vmatprep.subr.bf16.mxu0 0
    %234 = vmatpush1.bf16.msra.mxu0 0
    %235 = vmatprep.subr.bf16.mxu0 0
    %236 = vmatpush1.bf16.msra.mxu0 0
    %237 = vmatprep.subr.bf16.mxu0 0
    %238 = vmatpush1.bf16.msra.mxu0 0
    %239 = vmatprep.subr.bf16.mxu0 0
    %240 = vmatpush1.bf16.msra.mxu0 0
    %241 = vmatprep.subr.bf16.mxu0 0
    %242 = vmatpush1.bf16.msra.mxu0 0
    %243 = vmatprep.subr.bf16.mxu0 0
    %244 = vmatpush1.bf16.msra.mxu0 0
    %245 = vmatprep.subr.bf16.mxu0 0
    %246 = vmatpush1.bf16.msra.mxu0 0
    %247 = vmatprep.subr.bf16.mxu0 0
    %248 = vmatpush1.bf16.msra.mxu0 0
    %249 = vmatprep.subr.bf16.mxu0 0
    %250 = vmatpush1.bf16.msra.mxu0 0
    %251 = vmatprep.subr.bf16.mxu0 0
    %252 = vmatpush1.bf16.msra.mxu0 0
    %253 = vmatprep.subr.bf16.mxu0 0
    %254 = vmatpush1.bf16.msra.mxu0 0
    %255 = vmatprep.mubr.bf16.mxu0 0
    %256 = vmatmul.mubr.bf16.gmra.mrb[0].mxu0 %v215
    %v257 = vpop.f32.mrb[0].mxu0
    %v258 = vadd.f32 %v195, %v257
    %v259 = vpop.f32.mrb[0].mxu0
    %v260 = vpop.f32.mrb[0].mxu0
    %v261 = vadd.f32 %v198, %v260
    %v262 = vpop.f32.mrb[0].mxu0
    %263 = vmatprep.mubr.bf16.mxu0 0
    %264 = vmatmul.mubr.bf16.gmra.mrb[0].mxu0 %v218
    %v265 = vpop.f32.mrb[0].mxu0
    %v266 = vadd.f32 %v203, %v265
    %v267 = vpop.f32.mrb[0].mxu0
    %v268 = vpop.f32.mrb[0].mxu0
    %v269 = vadd.f32 %v206, %v268
    %v270 = vpop.f32.mrb[0].mxu0
    %271 = vdwg.mxu0
    %v272 = vpack.c.bf16 %v83, %v82
    %v273 = vpack.c.bf16 %v85, %v84
    %v274 = vld [vmem:[#allocation2 + $0x10] sm:$0xf]
    %v275 = vld [vmem:[#allocation2 + $0x14] sm:$0x1]
    %v278 = vunpack.c.l.b16 %v274
    %v279 = vunpack.c.l.b16 %v275
    %v280 = vpack.c.b16 %v279, %v278
    %v282 = vsel %vm149, %v272, 0
    %v285 = vsel %vm149, %v273, 0
    %v288 = vsel %vm156, %v280, 0
    %290 = vmatprep.subr.bf16.mxu0 0
    %291 = vmatpush1.bf16.msra.mxu0 %v288
    %292 = vmatprep.subr.bf16.mxu0 0
    %293 = vmatpush1.bf16.msra.mxu0 0
    %294 = vmatprep.subr.bf16.mxu0 0
    %295 = vmatpush1.bf16.msra.mxu0 0
    %296 = vmatprep.subr.bf16.mxu0 0
    %297 = vmatpush1.bf16.msra.mxu0 0
    %298 = vmatprep.subr.bf16.mxu0 0
    %299 = vmatpush1.bf16.msra.mxu0 0
    %300 = vmatprep.subr.bf16.mxu0 0
    %301 = vmatpush1.bf16.msra.mxu0 0
    %302 = vmatprep.subr.bf16.mxu0 0
    %303 = vmatpush1.bf16.msra.mxu0 0
    %304 = vmatprep.subr.bf16.mxu0 0
    %305 = vmatpush1.bf16.msra.mxu0 0
    %306 = vmatprep.subr.bf16.mxu0 0
    %307 = vmatpush1.bf16.msra.mxu0 0
    %308 = vmatprep.subr.bf16.mxu0 0
    %309 = vmatpush1.bf16.msra.mxu0 0
    %310 = vmatprep.subr.bf16.mxu0 0
    %311 = vmatpush1.bf16.msra.mxu0 0
    %312 = vmatprep.subr.bf16.mxu0 0
    %313 = vmatpush1.bf16.msra.mxu0 0
    %314 = vmatprep.subr.bf16.mxu0 0
    %315 = vmatpush1.bf16.msra.mxu0 0
    %316 = vmatprep.subr.bf16.mxu0 0
    %317 = vmatpush1.bf16.msra.mxu0 0
    %318 = vmatprep.subr.bf16.mxu0 0
    %319 = vmatpush1.bf16.msra.mxu0 0
    %320 = vmatprep.subr.bf16.mxu0 0
    %321 = vmatpush1.bf16.msra.mxu0 0
    %322 = vmatprep.mubr.bf16.mxu0 0
    %323 = vmatmul.mubr.bf16.gmra.mrb[0].mxu0 %v282
    %v324 = vpop.f32.mrb[0].mxu0
    %v325 = vadd.f32 0.0, %v324
    %v326 = vpop.f32.mrb[0].mxu0
    %v327 = vpop.f32.mrb[0].mxu0
    %v328 = vadd.f32 0.0, %v327
    %v329 = vpop.f32.mrb[0].mxu0
    %330 = vmatprep.mubr.bf16.mxu0 0
    %331 = vmatmul.mubr.bf16.gmra.mrb[0].mxu0 %v285
    %v332 = vpop.f32.mrb[0].mxu0
    %v333 = vadd.f32 0.0, %v332
    %v334 = vpop.f32.mrb[0].mxu0
    %v335 = vpop.f32.mrb[0].mxu0
    %v336 = vadd.f32 0.0, %v335
    %v337 = vpop.f32.mrb[0].mxu0
    %338 = vdwg.mxu0
    %v339 = vadd.f32 %v258, %v325
    %v340 = vadd.f32 %v261, %v328
    %v341 = vadd.f32 %v266, %v333
    %v342 = vadd.f32 %v269, %v336
    %v343 = vld [vmem:[%s2] sm:$0x1]
    %v344 = vlaneseq
    %v345 = vshrl.u32 %v344, 7
    %v346 = vsub.s32 0, %v345
    %v347 = vrot.slane %v343, %v346
    %v348 = vadd.f32 %v339, %v347
    %v349 = vadd.f32 %v340, %v347
    %v350 = vadd.f32 %v341, %v347
    %v351 = vadd.f32 %v342, %v347
    %v352 = vmax.f32 %v348, 0.0
    %v353 = vmax.f32 %v349, 0.0
    %v354 = vmax.f32 %v350, 0.0
    %v355 = vmax.f32 %v351, 0.0
    %v356 = vrot.slane %v352, 6
    %v357 = vrot.slane %v353, 6
    %v358 = vrot.slane %v354, 6
    %v359 = vrot.slane %v355, 6
    %v360 = vsel %vm90, %v358, %v359
    %v361 = vsel %vm90, %v357, %v358
    %v362 = vsel %vm90, %v356, %v357
    %v363 = vsel %vm90, %v359, %v356
    %v364 = vsel %vm103, %v363, 0.0
    %v365 = vsel %vm104, %v362, 0.0
    %v366 = vsel %vm105, %v361, 0.0
    %v367 = vsel %vm106, %v360, 0.0
    %v368 = vrot.slane %v352, 7
    %v369 = vrot.slane %v353, 7
    %v370 = vrot.slane %v354, 7
    %v371 = vrot.slane %v355, 7
    %v372 = vsel %vm115, %v370, %v371
    %v373 = vsel %vm115, %v369, %v370
    %v374 = vsel %vm115, %v368, %v369
    %v375 = vsel %vm115, %v371, %v368
    %v376 = vsel %vm128, %v375, 0.0
    %v377 = vsel %vm129, %v374, 0.0
    %v378 = vsel %vm130, %v373, 0.0
    %v379 = vsel %vm131, %v372, 0.0
    %v380 = vpack.c.bf16 %v365, %v364
    %v381 = vpack.c.bf16 %v367, %v366
    %v382 = vld [vmem:[#allocation2 + $0x18] sm:$0xf]
    %v383 = vld [vmem:[#allocation2 + $0x1c] sm:$0xf]
    %v384 = vpack.c.bf16 %v377, %v376
    %v385 = vpack.c.bf16 %v379, %v378
    %v386 = vld [vmem:[#allocation2 + $0x20] sm:$0xf]
    %v387 = vld [vmem:[#allocation2 + $0x24] sm:$0xf]
    %v390 = vunpack.c.l.b16 %v386
    %v391 = vunpack.c.l.b16 %v387
    %v392 = vpack.c.b16 %v391, %v390
    %vm394 = vcmask 130048
    %v396 = vsel %vm394, %v384, 0
    %v399 = vsel %vm394, %v385, 0
    %401 = vmatprep.subr.bf16.mxu0 0
    %402 = vmatpush1.bf16.msra.mxu0 %v392
    %403 = vmatprep.subr.bf16.mxu0 0
    %404 = vmatpush1.bf16.msra.mxu0 0
    %405 = vmatprep.subr.bf16.mxu0 0
    %406 = vmatpush1.bf16.msra.mxu0 0
    %407 = vmatprep.subr.bf16.mxu0 0
    %408 = vmatpush1.bf16.msra.mxu0 0
    %409 = vmatprep.subr.bf16.mxu0 0
    %410 = vmatpush1.bf16.msra.mxu0 0
    %411 = vmatprep.subr.bf16.mxu0 0
    %412 = vmatpush1.bf16.msra.mxu0 0
    %413 = vmatprep.subr.bf16.mxu0 0
    %414 = vmatpush1.bf16.msra.mxu0 0
    %415 = vmatprep.subr.bf16.mxu0 0
    %416 = vmatpush1.bf16.msra.mxu0 0
    %417 = vmatprep.subr.bf16.mxu0 0
    %418 = vmatpush1.bf16.msra.mxu0 0
    %419 = vmatprep.subr.bf16.mxu0 0
    %420 = vmatpush1.bf16.msra.mxu0 0
    %421 = vmatprep.subr.bf16.mxu0 0
    %422 = vmatpush1.bf16.msra.mxu0 0
    %423 = vmatprep.subr.bf16.mxu0 0
    %424 = vmatpush1.bf16.msra.mxu0 0
    %425 = vmatprep.subr.bf16.mxu0 0
    %426 = vmatpush1.bf16.msra.mxu0 0
    %427 = vmatprep.subr.bf16.mxu0 0
    %428 = vmatpush1.bf16.msra.mxu0 0
    %429 = vmatprep.subr.bf16.mxu0 0
    %430 = vmatpush1.bf16.msra.mxu0 0
    %431 = vmatprep.subr.bf16.mxu0 0
    %432 = vmatpush1.bf16.msra.mxu0 0
    %433 = vmatprep.mubr.bf16.mxu0 0
    %434 = vmatmul.mubr.bf16.gmra.mrb[0].mxu0 %v396
    %v435 = vpop.f32.mrb[0].mxu0
    %v436 = vadd.f32 0.0, %v435
    %v437 = vpop.f32.mrb[0].mxu0
    %v438 = vpop.f32.mrb[0].mxu0
    %v439 = vadd.f32 0.0, %v438
    %v440 = vpop.f32.mrb[0].mxu0
    %441 = vmatprep.mubr.bf16.mxu0 0
    %442 = vmatmul.mubr.bf16.gmra.mrb[0].mxu0 %v399
    %v443 = vpop.f32.mrb[0].mxu0
    %v444 = vadd.f32 0.0, %v443
    %v445 = vpop.f32.mrb[0].mxu0
    %v446 = vpop.f32.mrb[0].mxu0
    %v447 = vadd.f32 0.0, %v446
    %v448 = vpop.f32.mrb[0].mxu0
    %449 = vdwg.mxu0
    %v452 = vunpack.c.l.b16 %v382
    %v453 = vunpack.c.l.b16 %v383
    %v454 = vpack.c.b16 %v453, %v452
    %v457 = vsel %vm394, %v380, 0
    %v460 = vsel %vm394, %v381, 0
    %462 = vmatprep.subr.bf16.mxu0 0
    %463 = vmatpush1.bf16.msra.mxu0 %v454
    %464 = vmatprep.subr.bf16.mxu0 0
    %465 = vmatpush1.bf16.msra.mxu0 0
    %466 = vmatprep.subr.bf16.mxu0 0
    %467 = vmatpush1.bf16.msra.mxu0 0
    %468 = vmatprep.subr.bf16.mxu0 0
    %469 = vmatpush1.bf16.msra.mxu0 0
    %470 = vmatprep.subr.bf16.mxu0 0
    %471 = vmatpush1.bf16.msra.mxu0 0
    %472 = vmatprep.subr.bf16.mxu0 0
    %473 = vmatpush1.bf16.msra.mxu0 0
    %474 = vmatprep.subr.bf16.mxu0 0
    %475 = vmatpush1.bf16.msra.mxu0 0
    %476 = vmatprep.subr.bf16.mxu0 0
    %477 = vmatpush1.bf16.msra.mxu0 0
    %478 = vmatprep.subr.bf16.mxu0 0
    %479 = vmatpush1.bf16.msra.mxu0 0
    %480 = vmatprep.subr.bf16.mxu0 0
    %481 = vmatpush1.bf16.msra.mxu0 0
    %482 = vmatprep.subr.bf16.mxu0 0
    %483 = vmatpush1.bf16.msra.mxu0 0
    %484 = vmatprep.subr.bf16.mxu0 0
    %485 = vmatpush1.bf16.msra.mxu0 0
    %486 = vmatprep.subr.bf16.mxu0 0
    %487 = vmatpush1.bf16.msra.mxu0 0
    %488 = vmatprep.subr.bf16.mxu0 0
    %489 = vmatpush1.bf16.msra.mxu0 0
    %490 = vmatprep.subr.bf16.mxu0 0
    %491 = vmatpush1.bf16.msra.mxu0 0
    %492 = vmatprep.subr.bf16.mxu0 0
    %493 = vmatpush1.bf16.msra.mxu0 0
    %494 = vmatprep.mubr.bf16.mxu0 0
    %495 = vmatmul.mubr.bf16.gmra.mrb[0].mxu0 %v457
    %v496 = vpop.f32.mrb[0].mxu0
    %v497 = vadd.f32 %v436, %v496
    %v498 = vpop.f32.mrb[0].mxu0
    %v499 = vpop.f32.mrb[0].mxu0
    %v500 = vadd.f32 %v439, %v499
    %v501 = vpop.f32.mrb[0].mxu0
    %502 = vmatprep.mubr.bf16.mxu0 0
    %503 = vmatmul.mubr.bf16.gmra.mrb[0].mxu0 %v460
    %v504 = vpop.f32.mrb[0].mxu0
    %v505 = vadd.f32 %v444, %v504
    %v506 = vpop.f32.mrb[0].mxu0
    %v507 = vpop.f32.mrb[0].mxu0
    %v508 = vadd.f32 %v447, %v507
    %v509 = vpop.f32.mrb[0].mxu0
    %510 = vdwg.mxu0
    %v511 = vpack.c.bf16 %v353, %v352
    %v512 = vpack.c.bf16 %v355, %v354
    %v513 = vld [vmem:[#allocation2 + $0x28] sm:$0xf]
    %v514 = vld [vmem:[#allocation2 + $0x2c] sm:$0xf]
    %v517 = vunpack.c.l.b16 %v513
    %v518 = vunpack.c.l.b16 %v514
    %v519 = vpack.c.b16 %v518, %v517
    %v522 = vsel %vm394, %v511, 0
    %v525 = vsel %vm394, %v512, 0
    %527 = vmatprep.subr.bf16.mxu0 0
    %528 = vmatpush1.bf16.msra.mxu0 %v519
    %529 = vmatprep.subr.bf16.mxu0 0
    %530 = vmatpush1.bf16.msra.mxu0 0
    %531 = vmatprep.subr.bf16.mxu0 0
    %532 = vmatpush1.bf16.msra.mxu0 0
    %533 = vmatprep.subr.bf16.mxu0 0
    %534 = vmatpush1.bf16.msra.mxu0 0
    %535 = vmatprep.subr.bf16.mxu0 0
    %536 = vmatpush1.bf16.msra.mxu0 0
    %537 = vmatprep.subr.bf16.mxu0 0
    %538 = vmatpush1.bf16.msra.mxu0 0
    %539 = vmatprep.subr.bf16.mxu0 0
    %540 = vmatpush1.bf16.msra.mxu0 0
    %541 = vmatprep.subr.bf16.mxu0 0
    %542 = vmatpush1.bf16.msra.mxu0 0
    %543 = vmatprep.subr.bf16.mxu0 0
    %544 = vmatpush1.bf16.msra.mxu0 0
    %545 = vmatprep.subr.bf16.mxu0 0
    %546 = vmatpush1.bf16.msra.mxu0 0
    %547 = vmatprep.subr.bf16.mxu0 0
    %548 = vmatpush1.bf16.msra.mxu0 0
    %549 = vmatprep.subr.bf16.mxu0 0
    %550 = vmatpush1.bf16.msra.mxu0 0
    %551 = vmatprep.subr.bf16.mxu0 0
    %552 = vmatpush1.bf16.msra.mxu0 0
    %553 = vmatprep.subr.bf16.mxu0 0
    %554 = vmatpush1.bf16.msra.mxu0 0
    %555 = vmatprep.subr.bf16.mxu0 0
    %556 = vmatpush1.bf16.msra.mxu0 0
    %557 = vmatprep.subr.bf16.mxu0 0
    %558 = vmatpush1.bf16.msra.mxu0 0
    %559 = vmatprep.mubr.bf16.mxu0 0
    %560 = vmatmul.mubr.bf16.gmra.mrb[0].mxu0 %v522
    %v561 = vpop.f32.mrb[0].mxu0
    %v562 = vadd.f32 0.0, %v561
    %v563 = vpop.f32.mrb[0].mxu0
    %v564 = vpop.f32.mrb[0].mxu0
    %v565 = vadd.f32 0.0, %v564
    %v566 = vpop.f32.mrb[0].mxu0
    %567 = vmatprep.mubr.bf16.mxu0 0
    %568 = vmatmul.mubr.bf16.gmra.mrb[0].mxu0 %v525
    %v569 = vpop.f32.mrb[0].mxu0
    %v570 = vadd.f32 0.0, %v569
    %v571 = vpop.f32.mrb[0].mxu0
    %v572 = vpop.f32.mrb[0].mxu0
    %v573 = vadd.f32 0.0, %v572
    %v574 = vpop.f32.mrb[0].mxu0
    %575 = vdwg.mxu0
    %v576 = vadd.f32 %v497, %v562
    %v577 = vadd.f32 %v500, %v565
    %v578 = vadd.f32 %v505, %v570
    %v579 = vadd.f32 %v508, %v573
    %v580 = vld [vmem:[%s2 + $0x1] sm:$0x1]
    %v581 = vlaneseq
    %v582 = vshrl.u32 %v581, 7
    %v583 = vsub.s32 0, %v582
    %v584 = vrot.slane %v580, %v583
    %v585 = vadd.f32 %v576, %v584
    %v586 = vadd.f32 %v577, %v584
    %v587 = vadd.f32 %v578, %v584
    %v588 = vadd.f32 %v579, %v584
    %v589 = vmax.f32 %v585, 0.0
    %v590 = vmax.f32 %v586, 0.0
    %v591 = vmax.f32 %v587, 0.0
    %v592 = vmax.f32 %v588, 0.0
    %v593 = vld [vmem:[#allocation2 + $0x30] sm:$0xf]
    %v594 = vld [vmem:[#allocation2 + $0x34] sm:$0x1]
    %v595 = vld [vmem:[%s2 + $0x2] sm:$0x1]
    %v596 = vlaneseq
    %v597 = vshrl.u32 %v596, 7
    %v598 = vsub.s32 0, %v597
    %v599 = vrot.slane %v595, %v598
    %v602 = vunpack.c.l.b16 %v593
    %v603 = vunpack.c.l.b16 %v594
    %v604 = vpack.c.b16 %v603, %v602
    %v606 = vsel %vm156, %v604, 0
    %608 = vmatprep.subr.bf16.mxu0 0
    %609 = vmatpush1.bf16.msra.mxu0 %v606
    %610 = vmatprep.subr.bf16.mxu0 0
    %611 = vmatpush1.bf16.msra.mxu0 0
    %612 = vmatprep.subr.bf16.mxu0 0
    %613 = vmatpush1.bf16.msra.mxu0 0
    %614 = vmatprep.subr.bf16.mxu0 0
    %615 = vmatpush1.bf16.msra.mxu0 0
    %616 = vmatprep.subr.bf16.mxu0 0
    %617 = vmatpush1.bf16.msra.mxu0 0
    %618 = vmatprep.subr.bf16.mxu0 0
    %619 = vmatpush1.bf16.msra.mxu0 0
    %620 = vmatprep.subr.bf16.mxu0 0
    %621 = vmatpush1.bf16.msra.mxu0 0
    %622 = vmatprep.subr.bf16.mxu0 0
    %623 = vmatpush1.bf16.msra.mxu0 0
    %624 = vmatprep.subr.bf16.mxu0 0
    %625 = vmatpush1.bf16.msra.mxu0 0
    %626 = vmatprep.subr.bf16.mxu0 0
    %627 = vmatpush1.bf16.msra.mxu0 0
    %628 = vmatprep.subr.bf16.mxu0 0
    %629 = vmatpush1.bf16.msra.mxu0 0
    %630 = vmatprep.subr.bf16.mxu0 0
    %631 = vmatpush1.bf16.msra.mxu0 0
    %632 = vmatprep.subr.bf16.mxu0 0
    %633 = vmatpush1.bf16.msra.mxu0 0
    %634 = vmatprep.subr.bf16.mxu0 0
    %635 = vmatpush1.bf16.msra.mxu0 0
    %636 = vmatprep.subr.bf16.mxu0 0
    %637 = vmatpush1.bf16.msra.mxu0 0
    %638 = vmatprep.subr.bf16.mxu0 0
    %639 = vmatpush1.bf16.msra.mxu0 0
    %640 = vmatprep.mubr.bf16.mxu0 0
    %641 = vmatmul.mubr.bf16.gmra.mrb[0].mxu0 %v282
    %v642 = vpop.f32.mrb[0].mxu0
    %v643 = vadd.f32 %v599, %v642
    %v644 = vpop.f32.mrb[0].mxu0
    %v645 = vpop.f32.mrb[0].mxu0
    %v646 = vadd.f32 %v599, %v645
    %v647 = vpop.f32.mrb[0].mxu0
    %648 = vmatprep.mubr.bf16.mxu0 0
    %649 = vmatmul.mubr.bf16.gmra.mrb[0].mxu0 %v285
    %v650 = vpop.f32.mrb[0].mxu0
    %v651 = vadd.f32 %v599, %v650
    %v652 = vpop.f32.mrb[0].mxu0
    %v653 = vpop.f32.mrb[0].mxu0
    %v654 = vadd.f32 %v599, %v653
    %v655 = vpop.f32.mrb[0].mxu0
    %656 = vdwg.mxu0
    %v657 = vadd.f32 %v589, %v643
    %v658 = vadd.f32 %v590, %v646
    %v659 = vadd.f32 %v591, %v651
    %v660 = vadd.f32 %v592, %v654
    %v661 = vmax.f32 %v657, 0.0
    %v662 = vmax.f32 %v658, 0.0
    %v663 = vmax.f32 %v659, 0.0
    %v664 = vmax.f32 %v660, 0.0
    %v665 = vrot.slane %v661, 4
    %v666 = vrot.slane %v662, 4
    %v667 = vrot.slane %v663, 4
    %v668 = vrot.slane %v664, 4
    %vm669 = vcmp.lt.s32.totalorder %v30, 4
    %v670 = vsel %vm669, %v667, %v668
    %v671 = vsel %vm669, %v666, %v667
    %v672 = vsel %vm669, %v665, %v666
    %v673 = vsel %vm669, %v668, %v665
    %vm674 = vcmp.ge.s32.totalorder %v78, 4
    %vm675 = vcmp.ge.s32.totalorder %v79, 4
    %vm676 = vcmp.ge.s32.totalorder %v80, 4
    %vm677 = vcmp.ge.s32.totalorder %v81, 4
    %v678 = vsel %vm674, 1, 0
    %v679 = vsel %vm675, 1, 0
    %v680 = vsel %vm676, 1, 0
    %v681 = vsel %vm677, 1, 0
    %vm682 = vcmp.eq.s32.totalorder %v678, 1
    %vm683 = vcmp.eq.s32.totalorder %v679, 1
    %vm684 = vcmp.eq.s32.totalorder %v680, 1
    %vm685 = vcmp.eq.s32.totalorder %v681, 1
    %v686 = vsel %vm682, %v673, 0.0
    %v687 = vsel %vm683, %v672, 0.0
    %v688 = vsel %vm684, %v671, 0.0
    %v689 = vsel %vm685, %v670, 0.0
    %v690 = vrot.slane %v661, 6
    %v691 = vrot.slane %v662, 6
    %v692 = vrot.slane %v663, 6
    %v693 = vrot.slane %v664, 6
    %v694 = vsel %vm90, %v692, %v693
    %v695 = vsel %vm90, %v691, %v692
    %v696 = vsel %vm90, %v690, %v691
    %v697 = vsel %vm90, %v693, %v690
    %v698 = vsel %vm103, %v697, 0.0
    %v699 = vsel %vm104, %v696, 0.0
    %v700 = vsel %vm105, %v695, 0.0
    %v701 = vsel %vm106, %v694, 0.0
    %v702 = vpack.c.bf16 %v687, %v686
    %v703 = vpack.c.bf16 %v689, %v688
    %v704 = vld [vmem:[#allocation2 + $0x38] sm:$0xf]
    %v705 = vld [vmem:[#allocation2 + $0x3c] sm:$0xf]
    %v706 = vpack.c.bf16 %v699, %v698
    %v707 = vpack.c.bf16 %v701, %v700
    %v708 = vld [vmem:[#allocation2 + $0x40] sm:$0xf]
    %v709 = vld [vmem:[#allocation2 + $0x44] sm:$0xf]
    %v712 = vunpack.c.l.b16 %v708
    %v713 = vunpack.c.l.b16 %v709
    %v714 = vpack.c.b16 %v713, %v712
    %v717 = vsel %vm394, %v706, 0
    %v720 = vsel %vm394, %v707, 0
    %722 = vmatprep.subr.bf16.mxu0 0
    %723 = vmatpush1.bf16.msra.mxu0 %v714
    %724 = vmatprep.subr.bf16.mxu0 0
    %725 = vmatpush1.bf16.msra.mxu0 0
    %726 = vmatprep.subr.bf16.mxu0 0
    %727 = vmatpush1.bf16.msra.mxu0 0
    %728 = vmatprep.subr.bf16.mxu0 0
    %729 = vmatpush1.bf16.msra.mxu0 0
    %730 = vmatprep.subr.bf16.mxu0 0
    %731 = vmatpush1.bf16.msra.mxu0 0
    %732 = vmatprep.subr.bf16.mxu0 0
    %733 = vmatpush1.bf16.msra.mxu0 0
    %734 = vmatprep.subr.bf16.mxu0 0
    %735 = vmatpush1.bf16.msra.mxu0 0
    %736 = vmatprep.subr.bf16.mxu0 0
    %737 = vmatpush1.bf16.msra.mxu0 0
    %738 = vmatprep.subr.bf16.mxu0 0
    %739 = vmatpush1.bf16.msra.mxu0 0
    %740 = vmatprep.subr.bf16.mxu0 0
    %741 = vmatpush1.bf16.msra.mxu0 0
    %742 = vmatprep.subr.bf16.mxu0 0
    %743 = vmatpush1.bf16.msra.mxu0 0
    %744 = vmatprep.subr.bf16.mxu0 0
    %745 = vmatpush1.bf16.msra.mxu0 0
    %746 = vmatprep.subr.bf16.mxu0 0
    %747 = vmatpush1.bf16.msra.mxu0 0
    %748 = vmatprep.subr.bf16.mxu0 0
    %749 = vmatpush1.bf16.msra.mxu0 0
    %750 = vmatprep.subr.bf16.mxu0 0
    %751 = vmatpush1.bf16.msra.mxu0 0
    %752 = vmatprep.subr.bf16.mxu0 0
    %753 = vmatpush1.bf16.msra.mxu0 0
    %754 = vmatprep.mubr.bf16.mxu0 0
    %755 = vmatmul.mubr.bf16.gmra.mrb[0].mxu0 %v717
    %v756 = vpop.f32.mrb[0].mxu0
    %v757 = vadd.f32 0.0, %v756
    %v758 = vpop.f32.mrb[0].mxu0
    %v759 = vpop.f32.mrb[0].mxu0
    %v760 = vadd.f32 0.0, %v759
    %v761 = vpop.f32.mrb[0].mxu0
    %762 = vmatprep.mubr.bf16.mxu0 0
    %763 = vmatmul.mubr.bf16.gmra.mrb[0].mxu0 %v720
    %v764 = vpop.f32.mrb[0].mxu0
    %v765 = vadd.f32 0.0, %v764
    %v766 = vpop.f32.mrb[0].mxu0
    %v767 = vpop.f32.mrb[0].mxu0
    %v768 = vadd.f32 0.0, %v767
    %v769 = vpop.f32.mrb[0].mxu0
    %770 = vdwg.mxu0
    %v773 = vunpack.c.l.b16 %v704
    %v774 = vunpack.c.l.b16 %v705
    %v775 = vpack.c.b16 %v774, %v773
    %v778 = vsel %vm394, %v702, 0
    %v781 = vsel %vm394, %v703, 0
    %783 = vmatprep.subr.bf16.mxu0 0
    %784 = vmatpush1.bf16.msra.mxu0 %v775
    %785 = vmatprep.subr.bf16.mxu0 0
    %786 = vmatpush1.bf16.msra.mxu0 0
    %787 = vmatprep.subr.bf16.mxu0 0
    %788 = vmatpush1.bf16.msra.mxu0 0
    %789 = vmatprep.subr.bf16.mxu0 0
    %790 = vmatpush1.bf16.msra.mxu0 0
    %791 = vmatprep.subr.bf16.mxu0 0
    %792 = vmatpush1.bf16.msra.mxu0 0
    %793 = vmatprep.subr.bf16.mxu0 0
    %794 = vmatpush1.bf16.msra.mxu0 0
    %795 = vmatprep.subr.bf16.mxu0 0
    %796 = vmatpush1.bf16.msra.mxu0 0
    %797 = vmatprep.subr.bf16.mxu0 0
    %798 = vmatpush1.bf16.msra.mxu0 0
    %799 = vmatprep.subr.bf16.mxu0 0
    %800 = vmatpush1.bf16.msra.mxu0 0
    %801 = vmatprep.subr.bf16.mxu0 0
    %802 = vmatpush1.bf16.msra.mxu0 0
    %803 = vmatprep.subr.bf16.mxu0 0
    %804 = vmatpush1.bf16.msra.mxu0 0
    %805 = vmatprep.subr.bf16.mxu0 0
    %806 = vmatpush1.bf16.msra.mxu0 0
    %807 = vmatprep.subr.bf16.mxu0 0
    %808 = vmatpush1.bf16.msra.mxu0 0
    %809 = vmatprep.subr.bf16.mxu0 0
    %810 = vmatpush1.bf16.msra.mxu0 0
    %811 = vmatprep.subr.bf16.mxu0 0
    %812 = vmatpush1.bf16.msra.mxu0 0
    %813 = vmatprep.subr.bf16.mxu0 0
    %814 = vmatpush1.bf16.msra.mxu0 0
    %815 = vmatprep.mubr.bf16.mxu0 0
    %816 = vmatmul.mubr.bf16.gmra.mrb[0].mxu0 %v778
    %v817 = vpop.f32.mrb[0].mxu0
    %v818 = vadd.f32 %v757, %v817
    %v819 = vpop.f32.mrb[0].mxu0
    %v820 = vpop.f32.mrb[0].mxu0
    %v821 = vadd.f32 %v760, %v820
    %v822 = vpop.f32.mrb[0].mxu0
    %823 = vmatprep.mubr.bf16.mxu0 0
    %824 = vmatmul.mubr.bf16.gmra.mrb[0].mxu0 %v781
    %v825 = vpop.f32.mrb[0].mxu0
    %v826 = vadd.f32 %v765, %v825
    %v827 = vpop.f32.mrb[0].mxu0
    %v828 = vpop.f32.mrb[0].mxu0
    %v829 = vadd.f32 %v768, %v828
    %v830 = vpop.f32.mrb[0].mxu0
    %831 = vdwg.mxu0
    %v832 = vpack.c.bf16 %v662, %v661
    %v833 = vpack.c.bf16 %v664, %v663
    %v834 = vld [vmem:[#allocation2 + $0x48] sm:$0xf]
    %v835 = vld [vmem:[#allocation2 + $0x4c] sm:$0xf]
    %v838 = vunpack.c.l.b16 %v834
    %v839 = vunpack.c.l.b16 %v835
    %v840 = vpack.c.b16 %v839, %v838
    %v843 = vsel %vm394, %v832, 0
    %v846 = vsel %vm394, %v833, 0
    %848 = vmatprep.subr.bf16.mxu0 0
    %849 = vmatpush1.bf16.msra.mxu0 %v840
    %850 = vmatprep.subr.bf16.mxu0 0
    %851 = vmatpush1.bf16.msra.mxu0 0
    %852 = vmatprep.subr.bf16.mxu0 0
    %853 = vmatpush1.bf16.msra.mxu0 0
    %854 = vmatprep.subr.bf16.mxu0 0
    %855 = vmatpush1.bf16.msra.mxu0 0
    %856 = vmatprep.subr.bf16.mxu0 0
    %857 = vmatpush1.bf16.msra.mxu0 0
    %858 = vmatprep.subr.bf16.mxu0 0
    %859 = vmatpush1.bf16.msra.mxu0 0
    %860 = vmatprep.subr.bf16.mxu0 0
    %861 = vmatpush1.bf16.msra.mxu0 0
    %862 = vmatprep.subr.bf16.mxu0 0
    %863 = vmatpush1.bf16.msra.mxu0 0
    %864 = vmatprep.subr.bf16.mxu0 0
    %865 = vmatpush1.bf16.msra.mxu0 0
    %866 = vmatprep.subr.bf16.mxu0 0
    %867 = vmatpush1.bf16.msra.mxu0 0
    %868 = vmatprep.subr.bf16.mxu0 0
    %869 = vmatpush1.bf16.msra.mxu0 0
    %870 = vmatprep.subr.bf16.mxu0 0
    %871 = vmatpush1.bf16.msra.mxu0 0
    %872 = vmatprep.subr.bf16.mxu0 0
    %873 = vmatpush1.bf16.msra.mxu0 0
    %874 = vmatprep.subr.bf16.mxu0 0
    %875 = vmatpush1.bf16.msra.mxu0 0
    %876 = vmatprep.subr.bf16.mxu0 0
    %877 = vmatpush1.bf16.msra.mxu0 0
    %878 = vmatprep.subr.bf16.mxu0 0
    %879 = vmatpush1.bf16.msra.mxu0 0
    %880 = vmatprep.mubr.bf16.mxu0 0
    %881 = vmatmul.mubr.bf16.gmra.mrb[0].mxu0 %v843
    %v882 = vpop.f32.mrb[0].mxu0
    %v883 = vadd.f32 0.0, %v882
    %v884 = vpop.f32.mrb[0].mxu0
    %v885 = vpop.f32.mrb[0].mxu0
    %v886 = vadd.f32 0.0, %v885
    %v887 = vpop.f32.mrb[0].mxu0
    %888 = vmatprep.mubr.bf16.mxu0 0
    %889 = vmatmul.mubr.bf16.gmra.mrb[0].mxu0 %v846
    %v890 = vpop.f32.mrb[0].mxu0
    %v891 = vadd.f32 0.0, %v890
    %v892 = vpop.f32.mrb[0].mxu0
    %v893 = vpop.f32.mrb[0].mxu0
    %v894 = vadd.f32 0.0, %v893
    %v895 = vpop.f32.mrb[0].mxu0
    %896 = vdwg.mxu0
    %v897 = vadd.f32 %v818, %v883
    %v898 = vadd.f32 %v821, %v886
    %v899 = vadd.f32 %v826, %v891
    %v900 = vadd.f32 %v829, %v894
    %v901 = vld [vmem:[%s2 + $0x3] sm:$0x1]
    %v902 = vlaneseq
    %v903 = vshrl.u32 %v902, 7
    %v904 = vsub.s32 0, %v903
    %v905 = vrot.slane %v901, %v904
    %v906 = vadd.f32 %v897, %v905
    %v907 = vadd.f32 %v898, %v905
    %v908 = vadd.f32 %v899, %v905
    %v909 = vadd.f32 %v900, %v905
    %v910 = vmax.f32 %v906, 0.0
    %v911 = vmax.f32 %v907, 0.0
    %v912 = vmax.f32 %v908, 0.0
    %v913 = vmax.f32 %v909, 0.0
    %v914 = vrot.slane %v910, 4
    %v915 = vrot.slane %v911, 4
    %v916 = vrot.slane %v912, 4
    %v917 = vrot.slane %v913, 4
    %v918 = vsel %vm669, %v916, %v917
    %v919 = vsel %vm669, %v915, %v916
    %v920 = vsel %vm669, %v914, %v915
    %v921 = vsel %vm669, %v917, %v914
    %v922 = vsel %vm682, %v921, 0.0
    %v923 = vsel %vm683, %v920, 0.0
    %v924 = vsel %vm684, %v919, 0.0
    %v925 = vsel %vm685, %v918, 0.0
    %v926 = vrot.slane %v910, 6
    %v927 = vrot.slane %v911, 6
    %v928 = vrot.slane %v912, 6
    %v929 = vrot.slane %v913, 6
    %v930 = vsel %vm90, %v928, %v929
    %v931 = vsel %vm90, %v927, %v928
    %v932 = vsel %vm90, %v926, %v927
    %v933 = vsel %vm90, %v929, %v926
    %v934 = vsel %vm103, %v933, 0.0
    %v935 = vsel %vm104, %v932, 0.0
    %v936 = vsel %vm105, %v931, 0.0
    %v937 = vsel %vm106, %v930, 0.0
    %v938 = vpack.c.bf16 %v923, %v922
    %v939 = vpack.c.bf16 %v925, %v924
    %v940 = vld [vmem:[#allocation2 + $0x50] sm:$0xf]
    %v941 = vld [vmem:[#allocation2 + $0x54] sm:$0xf]
    %v942 = vld [vmem:[#allocation2 + $0x58] sm:$0xf]
    %v943 = vld [vmem:[#allocation2 + $0x5c] sm:$0xf]
    %v944 = vpack.c.bf16 %v935, %v934
    %v945 = vpack.c.bf16 %v937, %v936
    %v946 = vld [vmem:[#allocation2 + $0x60] sm:$0xf]
    %v947 = vld [vmem:[#allocation2 + $0x64] sm:$0xf]
    %v948 = vld [vmem:[#allocation2 + $0x68] sm:$0xf]
    %v949 = vld [vmem:[#allocation2 + $0x6c] sm:$0xf]
    %v954 = vunpack.c.l.b16 %v946
    %v955 = vunpack.c.l.b16 %v947
    %v956 = vunpack.c.l.b16 %v948
    %v957 = vunpack.c.l.b16 %v949
    %v958 = vpack.c.b16 %v955, %v954
    %v959 = vpack.c.b16 %v957, %v956
    %vm962 = vcmask 261120
    %v964 = vsel %vm962, %v944, 0
    %v967 = vsel %vm962, %v945, 0
    %969 = vmatprep.subr.bf16.mxu0 0
    %970 = vmatpush1.bf16.msra.mxu0 %v958
    %971 = vmatprep.subr.bf16.mxu0 0
    %972 = vmatpush1.bf16.msra.mxu0 %v959
    %973 = vmatprep.subr.bf16.mxu0 0
    %974 = vmatpush1.bf16.msra.mxu0 0
    %975 = vmatprep.subr.bf16.mxu0 0
    %976 = vmatpush1.bf16.msra.mxu0 0
    %977 = vmatprep.subr.bf16.mxu0 0
    %978 = vmatpush1.bf16.msra.mxu0 0
    %979 = vmatprep.subr.bf16.mxu0 0
    %980 = vmatpush1.bf16.msra.mxu0 0
    %981 = vmatprep.subr.bf16.mxu0 0
    %982 = vmatpush1.bf16.msra.mxu0 0
    %983 = vmatprep.subr.bf16.mxu0 0
    %984 = vmatpush1.bf16.msra.mxu0 0
    %985 = vmatprep.subr.bf16.mxu0 0
    %986 = vmatpush1.bf16.msra.mxu0 0
    %987 = vmatprep.subr.bf16.mxu0 0
    %988 = vmatpush1.bf16.msra.mxu0 0
    %989 = vmatprep.subr.bf16.mxu0 0
    %990 = vmatpush1.bf16.msra.mxu0 0
    %991 = vmatprep.subr.bf16.mxu0 0
    %992 = vmatpush1.bf16.msra.mxu0 0
    %993 = vmatprep.subr.bf16.mxu0 0
    %994 = vmatpush1.bf16.msra.mxu0 0
    %995 = vmatprep.subr.bf16.mxu0 0
    %996 = vmatpush1.bf16.msra.mxu0 0
    %997 = vmatprep.subr.bf16.mxu0 0
    %998 = vmatpush1.bf16.msra.mxu0 0
    %999 = vmatprep.subr.bf16.mxu0 0
    %1000 = vmatpush1.bf16.msra.mxu0 0
    %1001 = vmatprep.mubr.bf16.mxu0 0
    %1002 = vmatmul.mubr.bf16.gmra.mrb[0].mxu0 %v964
    %v1003 = vpop.f32.mrb[0].mxu0
    %v1004 = vadd.f32 0.0, %v1003
    %v1005 = vpop.f32.mrb[0].mxu0
    %v1006 = vpop.f32.mrb[0].mxu0
    %v1007 = vadd.f32 0.0, %v1006
    %v1008 = vpop.f32.mrb[0].mxu0
    %1009 = vmatprep.mubr.bf16.mxu0 0
    %1010 = vmatmul.mubr.bf16.gmra.mrb[0].mxu0 %v967
    %v1011 = vpop.f32.mrb[0].mxu0
    %v1012 = vadd.f32 0.0, %v1011
    %v1013 = vpop.f32.mrb[0].mxu0
    %v1014 = vpop.f32.mrb[0].mxu0
    %v1015 = vadd.f32 0.0, %v1014
    %v1016 = vpop.f32.mrb[0].mxu0
    %1017 = vdwg.mxu0
    %v1022 = vunpack.c.l.b16 %v940
    %v1023 = vunpack.c.l.b16 %v941
    %v1024 = vunpack.c.l.b16 %v942
    %v1025 = vunpack.c.l.b16 %v943
    %v1026 = vpack.c.b16 %v1023, %v1022
    %v1027 = vpack.c.b16 %v1025, %v1024
    %v1031 = vsel %vm962, %v938, 0
    %v1034 = vsel %vm962, %v939, 0
    %1036 = vmatprep.subr.bf16.mxu0 0
    %1037 = vmatpush1.bf16.msra.mxu0 %v1026
    %1038 = vmatprep.subr.bf16.mxu0 0
    %1039 = vmatpush1.bf16.msra.mxu0 %v1027
    %1040 = vmatprep.subr.bf16.mxu0 0
    %1041 = vmatpush1.bf16.msra.mxu0 0
    %1042 = vmatprep.subr.bf16.mxu0 0
    %1043 = vmatpush1.bf16.msra.mxu0 0
    %1044 = vmatprep.subr.bf16.mxu0 0
    %1045 = vmatpush1.bf16.msra.mxu0 0
    %1046 = vmatprep.subr.bf16.mxu0 0
    %1047 = vmatpush1.bf16.msra.mxu0 0
    %1048 = vmatprep.subr.bf16.mxu0 0
    %1049 = vmatpush1.bf16.msra.mxu0 0
    %1050 = vmatprep.subr.bf16.mxu0 0
    %1051 = vmatpush1.bf16.msra.mxu0 0
    %1052 = vmatprep.subr.bf16.mxu0 0
    %1053 = vmatpush1.bf16.msra.mxu0 0
    %1054 = vmatprep.subr.bf16.mxu0 0
    %1055 = vmatpush1.bf16.msra.mxu0 0
    %1056 = vmatprep.subr.bf16.mxu0 0
    %1057 = vmatpush1.bf16.msra.mxu0 0
    %1058 = vmatprep.subr.bf16.mxu0 0
    %1059 = vmatpush1.bf16.msra.mxu0 0
    %1060 = vmatprep.subr.bf16.mxu0 0
    %1061 = vmatpush1.bf16.msra.mxu0 0
    %1062 = vmatprep.subr.bf16.mxu0 0
    %1063 = vmatpush1.bf16.msra.mxu0 0
    %1064 = vmatprep.subr.bf16.mxu0 0
    %1065 = vmatpush1.bf16.msra.mxu0 0
    %1066 = vmatprep.subr.bf16.mxu0 0
    %1067 = vmatpush1.bf16.msra.mxu0 0
    %1068 = vmatprep.mubr.bf16.mxu0 0
    %1069 = vmatmul.mubr.bf16.gmra.mrb[0].mxu0 %v1031
    %v1070 = vpop.f32.mrb[0].mxu0
    %v1071 = vadd.f32 %v1004, %v1070
    %v1072 = vpop.f32.mrb[0].mxu0
    %v1073 = vpop.f32.mrb[0].mxu0
    %v1074 = vadd.f32 %v1007, %v1073
    %v1075 = vpop.f32.mrb[0].mxu0
    %1076 = vmatprep.mubr.bf16.mxu0 0
    %1077 = vmatmul.mubr.bf16.gmra.mrb[0].mxu0 %v1034
    %v1078 = vpop.f32.mrb[0].mxu0
    %v1079 = vadd.f32 %v1012, %v1078
    %v1080 = vpop.f32.mrb[0].mxu0
    %v1081 = vpop.f32.mrb[0].mxu0
    %v1082 = vadd.f32 %v1015, %v1081
    %v1083 = vpop.f32.mrb[0].mxu0
    %1084 = vdwg.mxu0
    %v1085 = vpack.c.bf16 %v911, %v910
    %v1086 = vpack.c.bf16 %v913, %v912
    %v1087 = vld [vmem:[#allocation2 + $0x70] sm:$0xf]
    %v1088 = vld [vmem:[#allocation2 + $0x74] sm:$0xf]
    %v1089 = vld [vmem:[#allocation2 + $0x78] sm:$0xf]
    %v1090 = vld [vmem:[#allocation2 + $0x7c] sm:$0xf]
    %v1095 = vunpack.c.l.b16 %v1087
    %v1096 = vunpack.c.l.b16 %v1088
    %v1097 = vunpack.c.l.b16 %v1089
    %v1098 = vunpack.c.l.b16 %v1090
    %v1099 = vpack.c.b16 %v1096, %v1095
    %v1100 = vpack.c.b16 %v1098, %v1097
    %v1104 = vsel %vm962, %v1085, 0
    %v1107 = vsel %vm962, %v1086, 0
    %1109 = vmatprep.subr.bf16.mxu0 0
    %1110 = vmatpush1.bf16.msra.mxu0 %v1099
    %1111 = vmatprep.subr.bf16.mxu0 0
    %1112 = vmatpush1.bf16.msra.mxu0 %v1100
    %1113 = vmatprep.subr.bf16.mxu0 0
    %1114 = vmatpush1.bf16.msra.mxu0 0
    %1115 = vmatprep.subr.bf16.mxu0 0
    %1116 = vmatpush1.bf16.msra.mxu0 0
    %1117 = vmatprep.subr.bf16.mxu0 0
    %1118 = vmatpush1.bf16.msra.mxu0 0
    %1119 = vmatprep.subr.bf16.mxu0 0
    %1120 = vmatpush1.bf16.msra.mxu0 0
    %1121 = vmatprep.subr.bf16.mxu0 0
    %1122 = vmatpush1.bf16.msra.mxu0 0
    %1123 = vmatprep.subr.bf16.mxu0 0
    %1124 = vmatpush1.bf16.msra.mxu0 0
    %1125 = vmatprep.subr.bf16.mxu0 0
    %1126 = vmatpush1.bf16.msra.mxu0 0
    %1127 = vmatprep.subr.bf16.mxu0 0
    %1128 = vmatpush1.bf16.msra.mxu0 0
    %1129 = vmatprep.subr.bf16.mxu0 0
    %1130 = vmatpush1.bf16.msra.mxu0 0
    %1131 = vmatprep.subr.bf16.mxu0 0
    %1132 = vmatpush1.bf16.msra.mxu0 0
    %1133 = vmatprep.subr.bf16.mxu0 0
    %1134 = vmatpush1.bf16.msra.mxu0 0
    %1135 = vmatprep.subr.bf16.mxu0 0
    %1136 = vmatpush1.bf16.msra.mxu0 0
    %1137 = vmatprep.subr.bf16.mxu0 0
    %1138 = vmatpush1.bf16.msra.mxu0 0
    %1139 = vmatprep.subr.bf16.mxu0 0
    %1140 = vmatpush1.bf16.msra.mxu0 0
    %1141 = vmatprep.mubr.bf16.mxu0 0
    %1142 = vmatmul.mubr.bf16.gmra.mrb[0].mxu0 %v1104
    %v1143 = vpop.f32.mrb[0].mxu0
    %v1144 = vadd.f32 0.0, %v1143
    %v1145 = vpop.f32.mrb[0].mxu0
    %v1146 = vpop.f32.mrb[0].mxu0
    %v1147 = vadd.f32 0.0, %v1146
    %v1148 = vpop.f32.mrb[0].mxu0
    %1149 = vmatprep.mubr.bf16.mxu0 0
    %1150 = vmatmul.mubr.bf16.gmra.mrb[0].mxu0 %v1107
    %v1151 = vpop.f32.mrb[0].mxu0
    %v1152 = vadd.f32 0.0, %v1151
    %v1153 = vpop.f32.mrb[0].mxu0
    %v1154 = vpop.f32.mrb[0].mxu0
    %v1155 = vadd.f32 0.0, %v1154
    %v1156 = vpop.f32.mrb[0].mxu0
    %1157 = vdwg.mxu0
    %v1158 = vadd.f32 %v1071, %v1144
    %v1159 = vadd.f32 %v1074, %v1147
    %v1160 = vadd.f32 %v1079, %v1152
    %v1161 = vadd.f32 %v1082, %v1155
    %v1162 = vld [vmem:[%s2 + $0x4] sm:$0x1]
    %v1163 = vlaneseq
    %v1164 = vshrl.u32 %v1163, 7
    %v1165 = vsub.s32 0, %v1164
    %v1166 = vrot.slane %v1162, %v1165
    %v1167 = vadd.f32 %v1158, %v1166
    %v1168 = vadd.f32 %v1159, %v1166
    %v1169 = vadd.f32 %v1160, %v1166
    %v1170 = vadd.f32 %v1161, %v1166
    %v1171 = vmax.f32 %v1167, 0.0
    %v1172 = vmax.f32 %v1168, 0.0
    %v1173 = vmax.f32 %v1169, 0.0
    %v1174 = vmax.f32 %v1170, 0.0
    %v1175 = vld [vmem:[#allocation2 + $0x80] sm:$0xf]
    %v1176 = vld [vmem:[#allocation2 + $0x84] sm:$0xf]
    %v1177 = vld [vmem:[%s2 + $0x5] sm:$0x1]
    %v1178 = vlaneseq
    %v1179 = vshrl.u32 %v1178, 7
    %v1180 = vsub.s32 0, %v1179
    %v1181 = vrot.slane %v1177, %v1180
    %v1184 = vunpack.c.l.b16 %v1175
    %v1185 = vunpack.c.l.b16 %v1176
    %v1186 = vpack.c.b16 %v1185, %v1184
    %1188 = vmatprep.subr.bf16.mxu0 0
    %1189 = vmatpush1.bf16.msra.mxu0 %v1186
    %1190 = vmatprep.subr.bf16.mxu0 0
    %1191 = vmatpush1.bf16.msra.mxu0 0
    %1192 = vmatprep.subr.bf16.mxu0 0
    %1193 = vmatpush1.bf16.msra.mxu0 0
    %1194 = vmatprep.subr.bf16.mxu0 0
    %1195 = vmatpush1.bf16.msra.mxu0 0
    %1196 = vmatprep.subr.bf16.mxu0 0
    %1197 = vmatpush1.bf16.msra.mxu0 0
    %1198 = vmatprep.subr.bf16.mxu0 0
    %1199 = vmatpush1.bf16.msra.mxu0 0
    %1200 = vmatprep.subr.bf16.mxu0 0
    %1201 = vmatpush1.bf16.msra.mxu0 0
    %1202 = vmatprep.subr.bf16.mxu0 0
    %1203 = vmatpush1.bf16.msra.mxu0 0
    %1204 = vmatprep.subr.bf16.mxu0 0
    %1205 = vmatpush1.bf16.msra.mxu0 0
    %1206 = vmatprep.subr.bf16.mxu0 0
    %1207 = vmatpush1.bf16.msra.mxu0 0
    %1208 = vmatprep.subr.bf16.mxu0 0
    %1209 = vmatpush1.bf16.msra.mxu0 0
    %1210 = vmatprep.subr.bf16.mxu0 0
    %1211 = vmatpush1.bf16.msra.mxu0 0
    %1212 = vmatprep.subr.bf16.mxu0 0
    %1213 = vmatpush1.bf16.msra.mxu0 0
    %1214 = vmatprep.subr.bf16.mxu0 0
    %1215 = vmatpush1.bf16.msra.mxu0 0
    %1216 = vmatprep.subr.bf16.mxu0 0
    %1217 = vmatpush1.bf16.msra.mxu0 0
    %1218 = vmatprep.subr.bf16.mxu0 0
    %1219 = vmatpush1.bf16.msra.mxu0 0
    %1220 = vmatprep.mubr.bf16.mxu0 0
    %1221 = vmatmul.mubr.bf16.gmra.mrb[0].mxu0 %v843
    %v1222 = vpop.f32.mrb[0].mxu0
    %v1223 = vadd.f32 %v1181, %v1222
    %v1224 = vpop.f32.mrb[0].mxu0
    %v1225 = vpop.f32.mrb[0].mxu0
    %v1226 = vadd.f32 %v1181, %v1225
    %v1227 = vpop.f32.mrb[0].mxu0
    %1228 = vmatprep.mubr.bf16.mxu0 0
    %1229 = vmatmul.mubr.bf16.gmra.mrb[0].mxu0 %v846
    %v1230 = vpop.f32.mrb[0].mxu0
    %v1231 = vadd.f32 %v1181, %v1230
    %v1232 = vpop.f32.mrb[0].mxu0
    %v1233 = vpop.f32.mrb[0].mxu0
    %v1234 = vadd.f32 %v1181, %v1233
    %v1235 = vpop.f32.mrb[0].mxu0
    %1236 = vdwg.mxu0
    %v1237 = vadd.f32 %v1171, %v1223
    %v1238 = vadd.f32 %v1172, %v1226
    %v1239 = vadd.f32 %v1173, %v1231
    %v1240 = vadd.f32 %v1174, %v1234
    %v1241 = vmax.f32 %v1237, 0.0
    %v1242 = vmax.f32 %v1238, 0.0
    %v1243 = vmax.f32 %v1239, 0.0
    %v1244 = vmax.f32 %v1240, 0.0
    %vm1245 = vcmp.ge.s32.totalorder %v78, 8
    %vm1246 = vcmp.ge.s32.totalorder %v79, 8
    %vm1247 = vcmp.ge.s32.totalorder %v80, 8
    %vm1248 = vcmp.ge.s32.totalorder %v81, 8
    %v1249 = vsel %vm1245, 1, 0
    %v1250 = vsel %vm1246, 1, 0
    %v1251 = vsel %vm1247, 1, 0
    %v1252 = vsel %vm1248, 1, 0
    %vm1253 = vcmp.eq.s32.totalorder %v1249, 1
    %vm1254 = vcmp.eq.s32.totalorder %v1250, 1
    %vm1255 = vcmp.eq.s32.totalorder %v1251, 1
    %vm1256 = vcmp.eq.s32.totalorder %v1252, 1
    %v1257 = vsel %vm1253, %v1244, 0.0
    %v1258 = vsel %vm1254, %v1241, 0.0
    %v1259 = vsel %vm1255, %v1242, 0.0
    %v1260 = vsel %vm1256, %v1243, 0.0
    %v1261 = vrot.slane %v1241, 4
    %v1262 = vrot.slane %v1242, 4
    %v1263 = vrot.slane %v1243, 4
    %v1264 = vrot.slane %v1244, 4
    %v1265 = vsel %vm669, %v1263, %v1264
    %v1266 = vsel %vm669, %v1262, %v1263
    %v1267 = vsel %vm669, %v1261, %v1262
    %v1268 = vsel %vm669, %v1264, %v1261
    %v1269 = vsel %vm682, %v1268, 0.0
    %v1270 = vsel %vm683, %v1267, 0.0
    %v1271 = vsel %vm684, %v1266, 0.0
    %v1272 = vsel %vm685, %v1265, 0.0
    %v1273 = vpack.c.bf16 %v1258, %v1257
    %v1274 = vpack.c.bf16 %v1260, %v1259
    %v1275 = vld [vmem:[#allocation2 + $0x88] sm:$0xf]
    %v1276 = vld [vmem:[#allocation2 + $0x8c] sm:$0xf]
    %v1277 = vld [vmem:[#allocation2 + $0x90] sm:$0xf]
    %v1278 = vld [vmem:[#allocation2 + $0x94] sm:$0xf]
    %v1279 = vpack.c.bf16 %v1270, %v1269
    %v1280 = vpack.c.bf16 %v1272, %v1271
    %v1281 = vld [vmem:[#allocation2 + $0x98] sm:$0xf]
    %v1282 = vld [vmem:[#allocation2 + $0x9c] sm:$0xf]
    %v1283 = vld [vmem:[#allocation2 + $0xa0] sm:$0xf]
    %v1284 = vld [vmem:[#allocation2 + $0xa4] sm:$0xf]
    %v1289 = vunpack.c.l.b16 %v1281
    %v1290 = vunpack.c.l.b16 %v1282
    %v1291 = vunpack.c.l.b16 %v1283
    %v1292 = vunpack.c.l.b16 %v1284
    %v1293 = vpack.c.b16 %v1290, %v1289
    %v1294 = vpack.c.b16 %v1292, %v1291
    %v1298 = vsel %vm962, %v1279, 0
    %v1301 = vsel %vm962, %v1280, 0
    %1303 = vmatprep.subr.bf16.mxu0 0
    %1304 = vmatpush1.bf16.msra.mxu0 %v1293
    %1305 = vmatprep.subr.bf16.mxu0 0
    %1306 = vmatpush1.bf16.msra.mxu0 %v1294
    %1307 = vmatprep.subr.bf16.mxu0 0
    %1308 = vmatpush1.bf16.msra.mxu0 0
    %1309 = vmatprep.subr.bf16.mxu0 0
    %1310 = vmatpush1.bf16.msra.mxu0 0
    %1311 = vmatprep.subr.bf16.mxu0 0
    %1312 = vmatpush1.bf16.msra.mxu0 0
    %1313 = vmatprep.subr.bf16.mxu0 0
    %1314 = vmatpush1.bf16.msra.mxu0 0
    %1315 = vmatprep.subr.bf16.mxu0 0
    %1316 = vmatpush1.bf16.msra.mxu0 0
    %1317 = vmatprep.subr.bf16.mxu0 0
    %1318 = vmatpush1.bf16.msra.mxu0 0
    %1319 = vmatprep.subr.bf16.mxu0 0
    %1320 = vmatpush1.bf16.msra.mxu0 0
    %1321 = vmatprep.subr.bf16.mxu0 0
    %1322 = vmatpush1.bf16.msra.mxu0 0
    %1323 = vmatprep.subr.bf16.mxu0 0
    %1324 = vmatpush1.bf16.msra.mxu0 0
    %1325 = vmatprep.subr.bf16.mxu0 0
    %1326 = vmatpush1.bf16.msra.mxu0 0
    %1327 = vmatprep.subr.bf16.mxu0 0
    %1328 = vmatpush1.bf16.msra.mxu0 0
    %1329 = vmatprep.subr.bf16.mxu0 0
    %1330 = vmatpush1.bf16.msra.mxu0 0
    %1331 = vmatprep.subr.bf16.mxu0 0
    %1332 = vmatpush1.bf16.msra.mxu0 0
    %1333 = vmatprep.subr.bf16.mxu0 0
    %1334 = vmatpush1.bf16.msra.mxu0 0
    %1335 = vmatprep.mubr.bf16.mxu0 0
    %1336 = vmatmul.mubr.bf16.gmra.mrb[0].mxu0 %v1298
    %v1337 = vpop.f32.mrb[0].mxu0
    %v1338 = vadd.f32 0.0, %v1337
    %v1339 = vpop.f32.mrb[0].mxu0
    %v1340 = vpop.f32.mrb[0].mxu0
    %v1341 = vadd.f32 0.0, %v1340
    %v1342 = vpop.f32.mrb[0].mxu0
    %1343 = vmatprep.mubr.bf16.mxu0 0
    %1344 = vmatmul.mubr.bf16.gmra.mrb[0].mxu0 %v1301
    %v1345 = vpop.f32.mrb[0].mxu0
    %v1346 = vadd.f32 0.0, %v1345
    %v1347 = vpop.f32.mrb[0].mxu0
    %v1348 = vpop.f32.mrb[0].mxu0
    %v1349 = vadd.f32 0.0, %v1348
    %v1350 = vpop.f32.mrb[0].mxu0
    %1351 = vdwg.mxu0
    %v1356 = vunpack.c.l.b16 %v1275
    %v1357 = vunpack.c.l.b16 %v1276
    %v1358 = vunpack.c.l.b16 %v1277
    %v1359 = vunpack.c.l.b16 %v1278
    %v1360 = vpack.c.b16 %v1357, %v1356
    %v1361 = vpack.c.b16 %v1359, %v1358
    %v1365 = vsel %vm962, %v1273, 0
    %v1368 = vsel %vm962, %v1274, 0
    %1370 = vmatprep.subr.bf16.mxu0 0
    %1371 = vmatpush1.bf16.msra.mxu0 %v1360
    %1372 = vmatprep.subr.bf16.mxu0 0
    %1373 = vmatpush1.bf16.msra.mxu0 %v1361
    %1374 = vmatprep.subr.bf16.mxu0 0
    %1375 = vmatpush1.bf16.msra.mxu0 0
    %1376 = vmatprep.subr.bf16.mxu0 0
    %1377 = vmatpush1.bf16.msra.mxu0 0
    %1378 = vmatprep.subr.bf16.mxu0 0
    %1379 = vmatpush1.bf16.msra.mxu0 0
    %1380 = vmatprep.subr.bf16.mxu0 0
    %1381 = vmatpush1.bf16.msra.mxu0 0
    %1382 = vmatprep.subr.bf16.mxu0 0
    %1383 = vmatpush1.bf16.msra.mxu0 0
    %1384 = vmatprep.subr.bf16.mxu0 0
    %1385 = vmatpush1.bf16.msra.mxu0 0
    %1386 = vmatprep.subr.bf16.mxu0 0
    %1387 = vmatpush1.bf16.msra.mxu0 0
    %1388 = vmatprep.subr.bf16.mxu0 0
    %1389 = vmatpush1.bf16.msra.mxu0 0
    %1390 = vmatprep.subr.bf16.mxu0 0
    %1391 = vmatpush1.bf16.msra.mxu0 0
    %1392 = vmatprep.subr.bf16.mxu0 0
    %1393 = vmatpush1.bf16.msra.mxu0 0
    %1394 = vmatprep.subr.bf16.mxu0 0
    %1395 = vmatpush1.bf16.msra.mxu0 0
    %1396 = vmatprep.subr.bf16.mxu0 0
    %1397 = vmatpush1.bf16.msra.mxu0 0
    %1398 = vmatprep.subr.bf16.mxu0 0
    %1399 = vmatpush1.bf16.msra.mxu0 0
    %1400 = vmatprep.subr.bf16.mxu0 0
    %1401 = vmatpush1.bf16.msra.mxu0 0
    %1402 = vmatprep.mubr.bf16.mxu0 0
    %1403 = vmatmul.mubr.bf16.gmra.mrb[0].mxu0 %v1365
    %v1404 = vpop.f32.mrb[0].mxu0
    %v1405 = vadd.f32 %v1338, %v1404
    %v1406 = vpop.f32.mrb[0].mxu0
    %v1407 = vpop.f32.mrb[0].mxu0
    %v1408 = vadd.f32 %v1341, %v1407
    %v1409 = vpop.f32.mrb[0].mxu0
    %1410 = vmatprep.mubr.bf16.mxu0 0
    %1411 = vmatmul.mubr.bf16.gmra.mrb[0].mxu0 %v1368
    %v1412 = vpop.f32.mrb[0].mxu0
    %v1413 = vadd.f32 %v1346, %v1412
    %v1414 = vpop.f32.mrb[0].mxu0
    %v1415 = vpop.f32.mrb[0].mxu0
    %v1416 = vadd.f32 %v1349, %v1415
    %v1417 = vpop.f32.mrb[0].mxu0
    %1418 = vdwg.mxu0
    %v1419 = vpack.c.bf16 %v1242, %v1241
    %v1420 = vpack.c.bf16 %v1244, %v1243
    %v1421 = vld [vmem:[#allocation2 + $0xa8] sm:$0xf]
    %v1422 = vld [vmem:[#allocation2 + $0xac] sm:$0xf]
    %v1423 = vld [vmem:[#allocation2 + $0xb0] sm:$0xf]
    %v1424 = vld [vmem:[#allocation2 + $0xb4] sm:$0xf]
    %v1429 = vunpack.c.l.b16 %v1421
    %v1430 = vunpack.c.l.b16 %v1422
    %v1431 = vunpack.c.l.b16 %v1423
    %v1432 = vunpack.c.l.b16 %v1424
    %v1433 = vpack.c.b16 %v1430, %v1429
    %v1434 = vpack.c.b16 %v1432, %v1431
    %v1438 = vsel %vm962, %v1419, 0
    %v1441 = vsel %vm962, %v1420, 0
    %1443 = vmatprep.subr.bf16.mxu0 0
    %1444 = vmatpush1.bf16.msra.mxu0 %v1433
    %1445 = vmatprep.subr.bf16.mxu0 0
    %1446 = vmatpush1.bf16.msra.mxu0 %v1434
    %1447 = vmatprep.subr.bf16.mxu0 0
    %1448 = vmatpush1.bf16.msra.mxu0 0
    %1449 = vmatprep.subr.bf16.mxu0 0
    %1450 = vmatpush1.bf16.msra.mxu0 0
    %1451 = vmatprep.subr.bf16.mxu0 0
    %1452 = vmatpush1.bf16.msra.mxu0 0
    %1453 = vmatprep.subr.bf16.mxu0 0
    %1454 = vmatpush1.bf16.msra.mxu0 0
    %1455 = vmatprep.subr.bf16.mxu0 0
    %1456 = vmatpush1.bf16.msra.mxu0 0
    %1457 = vmatprep.subr.bf16.mxu0 0
    %1458 = vmatpush1.bf16.msra.mxu0 0
    %1459 = vmatprep.subr.bf16.mxu0 0
    %1460 = vmatpush1.bf16.msra.mxu0 0
    %1461 = vmatprep.subr.bf16.mxu0 0
    %1462 = vmatpush1.bf16.msra.mxu0 0
    %1463 = vmatprep.subr.bf16.mxu0 0
    %1464 = vmatpush1.bf16.msra.mxu0 0
    %1465 = vmatprep.subr.bf16.mxu0 0
    %1466 = vmatpush1.bf16.msra.mxu0 0
    %1467 = vmatprep.subr.bf16.mxu0 0
    %1468 = vmatpush1.bf16.msra.mxu0 0
    %1469 = vmatprep.subr.bf16.mxu0 0
    %1470 = vmatpush1.bf16.msra.mxu0 0
    %1471 = vmatprep.subr.bf16.mxu0 0
    %1472 = vmatpush1.bf16.msra.mxu0 0
    %1473 = vmatprep.subr.bf16.mxu0 0
    %1474 = vmatpush1.bf16.msra.mxu0 0
    %1475 = vmatprep.mubr.bf16.mxu0 0
    %1476 = vmatmul.mubr.bf16.gmra.mrb[0].mxu0 %v1438
    %v1477 = vpop.f32.mrb[0].mxu0
    %v1478 = vadd.f32 0.0, %v1477
    %v1479 = vpop.f32.mrb[0].mxu0
    %v1480 = vpop.f32.mrb[0].mxu0
    %v1481 = vadd.f32 0.0, %v1480
    %v1482 = vpop.f32.mrb[0].mxu0
    %1483 = vmatprep.mubr.bf16.mxu0 0
    %1484 = vmatmul.mubr.bf16.gmra.mrb[0].mxu0 %v1441
    %v1485 = vpop.f32.mrb[0].mxu0
    %v1486 = vadd.f32 0.0, %v1485
    %v1487 = vpop.f32.mrb[0].mxu0
    %v1488 = vpop.f32.mrb[0].mxu0
    %v1489 = vadd.f32 0.0, %v1488
    %v1490 = vpop.f32.mrb[0].mxu0
    %1491 = vdwg.mxu0
    %v1492 = vadd.f32 %v1405, %v1478
    %v1493 = vadd.f32 %v1408, %v1481
    %v1494 = vadd.f32 %v1413, %v1486
    %v1495 = vadd.f32 %v1416, %v1489
    %v1496 = vld [vmem:[%s2 + $0x6] sm:$0x1]
    %v1497 = vlaneseq
    %v1498 = vshrl.u32 %v1497, 7
    %v1499 = vsub.s32 0, %v1498
    %v1500 = vrot.slane %v1496, %v1499
    %v1501 = vadd.f32 %v1492, %v1500
    %v1502 = vadd.f32 %v1493, %v1500
    %v1503 = vadd.f32 %v1494, %v1500
    %v1504 = vadd.f32 %v1495, %v1500
    %v1505 = vmax.f32 %v1501, 0.0
    %v1506 = vmax.f32 %v1502, 0.0
    %v1507 = vmax.f32 %v1503, 0.0
    %v1508 = vmax.f32 %v1504, 0.0
    %v1509 = vsel %vm1253, %v1508, 0.0
    %v1510 = vsel %vm1254, %v1505, 0.0
    %v1511 = vsel %vm1255, %v1506, 0.0
    %v1512 = vsel %vm1256, %v1507, 0.0
    %v1513 = vrot.slane %v1505, 4
    %v1514 = vrot.slane %v1506, 4
    %v1515 = vrot.slane %v1507, 4
    %v1516 = vrot.slane %v1508, 4
    %v1517 = vsel %vm669, %v1515, %v1516
    %v1518 = vsel %vm669, %v1514, %v1515
    %v1519 = vsel %vm669, %v1513, %v1514
    %v1520 = vsel %vm669, %v1516, %v1513
    %v1521 = vsel %vm682, %v1520, 0.0
    %v1522 = vsel %vm683, %v1519, 0.0
    %v1523 = vsel %vm684, %v1518, 0.0
    %v1524 = vsel %vm685, %v1517, 0.0
    %v1525 = vpack.c.bf16 %v1510, %v1509
    %v1526 = vpack.c.bf16 %v1512, %v1511
    %v1527 = vld [vmem:[#allocation2 + $0xb8] sm:$0xf]
    %v1528 = vld [vmem:[#allocation2 + $0xbc] sm:$0xf]
    %v1529 = vld [vmem:[#allocation2 + $0xc0] sm:$0xf]
    %v1530 = vld [vmem:[#allocation2 + $0xc4] sm:$0xf]
    %v1531 = vld [vmem:[#allocation2 + $0xc8] sm:$0xf]
    %v1532 = vld [vmem:[#allocation2 + $0xcc] sm:$0xf]
    %v1533 = vld [vmem:[#allocation2 + $0xd0] sm:$0xf]
    %v1534 = vld [vmem:[#allocation2 + $0xd4] sm:$0xf]
    %v1535 = vpack.c.bf16 %v1522, %v1521
    %v1536 = vpack.c.bf16 %v1524, %v1523
    %v1537 = vld [vmem:[#allocation2 + $0xd8] sm:$0xf]
    %v1538 = vld [vmem:[#allocation2 + $0xdc] sm:$0xf]
    %v1539 = vld [vmem:[#allocation2 + $0xe0] sm:$0xf]
    %v1540 = vld [vmem:[#allocation2 + $0xe4] sm:$0xf]
    %v1541 = vld [vmem:[#allocation2 + $0xe8] sm:$0xf]
    %v1542 = vld [vmem:[#allocation2 + $0xec] sm:$0xf]
    %v1543 = vld [vmem:[#allocation2 + $0xf0] sm:$0xf]
    %v1544 = vld [vmem:[#allocation2 + $0xf4] sm:$0xf]
    %v1553 = vunpack.c.l.b16 %v1537
    %v1554 = vunpack.c.l.b16 %v1538
    %v1555 = vunpack.c.l.b16 %v1539
    %v1556 = vunpack.c.l.b16 %v1540
    %v1557 = vunpack.c.l.b16 %v1541
    %v1558 = vunpack.c.l.b16 %v1542
    %v1559 = vunpack.c.l.b16 %v1543
    %v1560 = vunpack.c.l.b16 %v1544
    %v1561 = vpack.c.b16 %v1554, %v1553
    %v1562 = vpack.c.b16 %v1556, %v1555
    %v1563 = vpack.c.b16 %v1558, %v1557
    %v1564 = vpack.c.b16 %v1560, %v1559
    %vm1569 = vcmask 523264
    %v1571 = vsel %vm1569, %v1535, 0
    %v1574 = vsel %vm1569, %v1536, 0
    %1576 = vmatprep.subr.bf16.mxu0 0
    %1577 = vmatpush1.bf16.msra.mxu0 %v1561
    %1578 = vmatprep.subr.bf16.mxu0 0
    %1579 = vmatpush1.bf16.msra.mxu0 %v1562
    %1580 = vmatprep.subr.bf16.mxu0 0
    %1581 = vmatpush1.bf16.msra.mxu0 %v1563
    %1582 = vmatprep.subr.bf16.mxu0 0
    %1583 = vmatpush1.bf16.msra.mxu0 %v1564
    %1584 = vmatprep.subr.bf16.mxu0 0
    %1585 = vmatpush1.bf16.msra.mxu0 0
    %1586 = vmatprep.subr.bf16.mxu0 0
    %1587 = vmatpush1.bf16.msra.mxu0 0
    %1588 = vmatprep.subr.bf16.mxu0 0
    %1589 = vmatpush1.bf16.msra.mxu0 0
    %1590 = vmatprep.subr.bf16.mxu0 0
    %1591 = vmatpush1.bf16.msra.mxu0 0
    %1592 = vmatprep.subr.bf16.mxu0 0
    %1593 = vmatpush1.bf16.msra.mxu0 0
    %1594 = vmatprep.subr.bf16.mxu0 0
    %1595 = vmatpush1.bf16.msra.mxu0 0
    %1596 = vmatprep.subr.bf16.mxu0 0
    %1597 = vmatpush1.bf16.msra.mxu0 0
    %1598 = vmatprep.subr.bf16.mxu0 0
    %1599 = vmatpush1.bf16.msra.mxu0 0
    %1600 = vmatprep.subr.bf16.mxu0 0
    %1601 = vmatpush1.bf16.msra.mxu0 0
    %1602 = vmatprep.subr.bf16.mxu0 0
    %1603 = vmatpush1.bf16.msra.mxu0 0
    %1604 = vmatprep.subr.bf16.mxu0 0
    %1605 = vmatpush1.bf16.msra.mxu0 0
    %1606 = vmatprep.subr.bf16.mxu0 0
    %1607 = vmatpush1.bf16.msra.mxu0 0
    %1608 = vmatprep.mubr.bf16.mxu0 0
    %1609 = vmatmul.mubr.bf16.gmra.mrb[0].mxu0 %v1571
    %v1610 = vpop.f32.mrb[0].mxu0
    %v1611 = vadd.f32 0.0, %v1610
    %v1612 = vpop.f32.mrb[0].mxu0
    %v1613 = vpop.f32.mrb[0].mxu0
    %v1614 = vadd.f32 0.0, %v1613
    %v1615 = vpop.f32.mrb[0].mxu0
    %1616 = vmatprep.mubr.bf16.mxu0 0
    %1617 = vmatmul.mubr.bf16.gmra.mrb[0].mxu0 %v1574
    %v1618 = vpop.f32.mrb[0].mxu0
    %v1619 = vadd.f32 0.0, %v1618
    %v1620 = vpop.f32.mrb[0].mxu0
    %v1621 = vpop.f32.mrb[0].mxu0
    %v1622 = vadd.f32 0.0, %v1621
    %v1623 = vpop.f32.mrb[0].mxu0
    %1624 = vdwg.mxu0
    %v1633 = vunpack.c.l.b16 %v1527
    %v1634 = vunpack.c.l.b16 %v1528
    %v1635 = vunpack.c.l.b16 %v1529
    %v1636 = vunpack.c.l.b16 %v1530
    %v1637 = vunpack.c.l.b16 %v1531
    %v1638 = vunpack.c.l.b16 %v1532
    %v1639 = vunpack.c.l.b16 %v1533
    %v1640 = vunpack.c.l.b16 %v1534
    %v1641 = vpack.c.b16 %v1634, %v1633
    %v1642 = vpack.c.b16 %v1636, %v1635
    %v1643 = vpack.c.b16 %v1638, %v1637
    %v1644 = vpack.c.b16 %v1640, %v1639
    %v1650 = vsel %vm1569, %v1525, 0
    %v1653 = vsel %vm1569, %v1526, 0
    %1655 = vmatprep.subr.bf16.mxu0 0
    %1656 = vmatpush1.bf16.msra.mxu0 %v1641
    %1657 = vmatprep.subr.bf16.mxu0 0
    %1658 = vmatpush1.bf16.msra.mxu0 %v1642
    %1659 = vmatprep.subr.bf16.mxu0 0
    %1660 = vmatpush1.bf16.msra.mxu0 %v1643
    %1661 = vmatprep.subr.bf16.mxu0 0
    %1662 = vmatpush1.bf16.msra.mxu0 %v1644
    %1663 = vmatprep.subr.bf16.mxu0 0
    %1664 = vmatpush1.bf16.msra.mxu0 0
    %1665 = vmatprep.subr.bf16.mxu0 0
    %1666 = vmatpush1.bf16.msra.mxu0 0
    %1667 = vmatprep.subr.bf16.mxu0 0
    %1668 = vmatpush1.bf16.msra.mxu0 0
    %1669 = vmatprep.subr.bf16.mxu0 0
    %1670 = vmatpush1.bf16.msra.mxu0 0
    %1671 = vmatprep.subr.bf16.mxu0 0
    %1672 = vmatpush1.bf16.msra.mxu0 0
    %1673 = vmatprep.subr.bf16.mxu0 0
    %1674 = vmatpush1.bf16.msra.mxu0 0
    %1675 = vmatprep.subr.bf16.mxu0 0
    %1676 = vmatpush1.bf16.msra.mxu0 0
    %1677 = vmatprep.subr.bf16.mxu0 0
    %1678 = vmatpush1.bf16.msra.mxu0 0
    %1679 = vmatprep.subr.bf16.mxu0 0
    %1680 = vmatpush1.bf16.msra.mxu0 0
    %1681 = vmatprep.subr.bf16.mxu0 0
    %1682 = vmatpush1.bf16.msra.mxu0 0
    %1683 = vmatprep.subr.bf16.mxu0 0
    %1684 = vmatpush1.bf16.msra.mxu0 0
    %1685 = vmatprep.subr.bf16.mxu0 0
    %1686 = vmatpush1.bf16.msra.mxu0 0
    %1687 = vmatprep.mubr.bf16.mxu0 0
    %1688 = vmatmul.mubr.bf16.gmra.mrb[0].mxu0 %v1650
    %v1689 = vpop.f32.mrb[0].mxu0
    %v1690 = vadd.f32 %v1611, %v1689
    %v1691 = vpop.f32.mrb[0].mxu0
    %v1692 = vpop.f32.mrb[0].mxu0
    %v1693 = vadd.f32 %v1614, %v1692
    %v1694 = vpop.f32.mrb[0].mxu0
    %1695 = vmatprep.mubr.bf16.mxu0 0
    %1696 = vmatmul.mubr.bf16.gmra.mrb[0].mxu0 %v1653
    %v1697 = vpop.f32.mrb[0].mxu0
    %v1698 = vadd.f32 %v1619, %v1697
    %v1699 = vpop.f32.mrb[0].mxu0
    %v1700 = vpop.f32.mrb[0].mxu0
    %v1701 = vadd.f32 %v1622, %v1700
    %v1702 = vpop.f32.mrb[0].mxu0
    %1703 = vdwg.mxu0
    %v1704 = vpack.c.bf16 %v1506, %v1505
    %v1705 = vpack.c.bf16 %v1508, %v1507
    %v1706 = vld [vmem:[#allocation2 + $0xf8] sm:$0xf]
    %v1707 = vld [vmem:[#allocation2 + $0xfc] sm:$0xf]
    %v1708 = vld [vmem:[#allocation2 + $0x100] sm:$0xf]
    %v1709 = vld [vmem:[#allocation2 + $0x104] sm:$0xf]
    %v1710 = vld [vmem:[#allocation2 + $0x108] sm:$0xf]
    %v1711 = vld [vmem:[#allocation2 + $0x10c] sm:$0xf]
    %v1712 = vld [vmem:[#allocation2 + $0x110] sm:$0xf]
    %v1713 = vld [vmem:[#allocation2 + $0x114] sm:$0xf]
    %v1722 = vunpack.c.l.b16 %v1706
    %v1723 = vunpack.c.l.b16 %v1707
    %v1724 = vunpack.c.l.b16 %v1708
    %v1725 = vunpack.c.l.b16 %v1709
    %v1726 = vunpack.c.l.b16 %v1710
    %v1727 = vunpack.c.l.b16 %v1711
    %v1728 = vunpack.c.l.b16 %v1712
    %v1729 = vunpack.c.l.b16 %v1713
    %v1730 = vpack.c.b16 %v1723, %v1722
    %v1731 = vpack.c.b16 %v1725, %v1724
    %v1732 = vpack.c.b16 %v1727, %v1726
    %v1733 = vpack.c.b16 %v1729, %v1728
    %v1739 = vsel %vm1569, %v1704, 0
    %v1742 = vsel %vm1569, %v1705, 0
    %1744 = vmatprep.subr.bf16.mxu0 0
    %1745 = vmatpush1.bf16.msra.mxu0 %v1730
    %1746 = vmatprep.subr.bf16.mxu0 0
    %1747 = vmatpush1.bf16.msra.mxu0 %v1731
    %1748 = vmatprep.subr.bf16.mxu0 0
    %1749 = vmatpush1.bf16.msra.mxu0 %v1732
    %1750 = vmatprep.subr.bf16.mxu0 0
    %1751 = vmatpush1.bf16.msra.mxu0 %v1733
    %1752 = vmatprep.subr.bf16.mxu0 0
    %1753 = vmatpush1.bf16.msra.mxu0 0
    %1754 = vmatprep.subr.bf16.mxu0 0
    %1755 = vmatpush1.bf16.msra.mxu0 0
    %1756 = vmatprep.subr.bf16.mxu0 0
    %1757 = vmatpush1.bf16.msra.mxu0 0
    %1758 = vmatprep.subr.bf16.mxu0 0
    %1759 = vmatpush1.bf16.msra.mxu0 0
    %1760 = vmatprep.subr.bf16.mxu0 0
    %1761 = vmatpush1.bf16.msra.mxu0 0
    %1762 = vmatprep.subr.bf16.mxu0 0
    %1763 = vmatpush1.bf16.msra.mxu0 0
    %1764 = vmatprep.subr.bf16.mxu0 0
    %1765 = vmatpush1.bf16.msra.mxu0 0
    %1766 = vmatprep.subr.bf16.mxu0 0
    %1767 = vmatpush1.bf16.msra.mxu0 0
    %1768 = vmatprep.subr.bf16.mxu0 0
    %1769 = vmatpush1.bf16.msra.mxu0 0
    %1770 = vmatprep.subr.bf16.mxu0 0
    %1771 = vmatpush1.bf16.msra.mxu0 0
    %1772 = vmatprep.subr.bf16.mxu0 0
    %1773 = vmatpush1.bf16.msra.mxu0 0
    %1774 = vmatprep.subr.bf16.mxu0 0
    %1775 = vmatpush1.bf16.msra.mxu0 0
    %1776 = vmatprep.mubr.bf16.mxu0 0
    %1777 = vmatmul.mubr.bf16.gmra.mrb[0].mxu0 %v1739
    %v1778 = vpop.f32.mrb[0].mxu0
    %v1779 = vadd.f32 0.0, %v1778
    %v1780 = vpop.f32.mrb[0].mxu0
    %v1781 = vpop.f32.mrb[0].mxu0
    %v1782 = vadd.f32 0.0, %v1781
    %v1783 = vpop.f32.mrb[0].mxu0
    %1784 = vmatprep.mubr.bf16.mxu0 0
    %1785 = vmatmul.mubr.bf16.gmra.mrb[0].mxu0 %v1742
    %v1786 = vpop.f32.mrb[0].mxu0
    %v1787 = vadd.f32 0.0, %v1786
    %v1788 = vpop.f32.mrb[0].mxu0
    %v1789 = vpop.f32.mrb[0].mxu0
    %v1790 = vadd.f32 0.0, %v1789
    %v1791 = vpop.f32.mrb[0].mxu0
    %1792 = vdwg.mxu0
    %v1793 = vadd.f32 %v1690, %v1779
    %v1794 = vadd.f32 %v1693, %v1782
    %v1795 = vadd.f32 %v1698, %v1787
    %v1796 = vadd.f32 %v1701, %v1790
    %v1797 = vld [vmem:[%s2 + $0x7] sm:$0x1]
    %v1798 = vlaneseq
    %v1799 = vshrl.u32 %v1798, 7
    %v1800 = vsub.s32 0, %v1799
    %v1801 = vrot.slane %v1797, %v1800
    %v1802 = vadd.f32 %v1793, %v1801
    %v1803 = vadd.f32 %v1794, %v1801
    %v1804 = vadd.f32 %v1795, %v1801
    %v1805 = vadd.f32 %v1796, %v1801
    %v1806 = vmax.f32 %v1802, 0.0
    %v1807 = vmax.f32 %v1803, 0.0
    %v1808 = vmax.f32 %v1804, 0.0
    %v1809 = vmax.f32 %v1805, 0.0
    %v1810 = vld [vmem:[#allocation2 + $0x118] sm:$0xf]
    %v1811 = vld [vmem:[#allocation2 + $0x11c] sm:$0xf]
    %v1812 = vld [vmem:[#allocation2 + $0x120] sm:$0xf]
    %v1813 = vld [vmem:[#allocation2 + $0x124] sm:$0xf]
    %v1814 = vld [vmem:[%s2 + $0x8] sm:$0x1]
    %v1815 = vlaneseq
    %v1816 = vshrl.u32 %v1815, 7
    %v1817 = vsub.s32 0, %v1816
    %v1818 = vrot.slane %v1814, %v1817
    %v1823 = vunpack.c.l.b16 %v1810
    %v1824 = vunpack.c.l.b16 %v1811
    %v1825 = vunpack.c.l.b16 %v1812
    %v1826 = vunpack.c.l.b16 %v1813
    %v1827 = vpack.c.b16 %v1824, %v1823
    %v1828 = vpack.c.b16 %v1826, %v1825
    %1831 = vmatprep.subr.bf16.mxu0 0
    %1832 = vmatpush1.bf16.msra.mxu0 %v1827
    %1833 = vmatprep.subr.bf16.mxu0 0
    %1834 = vmatpush1.bf16.msra.mxu0 %v1828
    %1835 = vmatprep.subr.bf16.mxu0 0
    %1836 = vmatpush1.bf16.msra.mxu0 0
    %1837 = vmatprep.subr.bf16.mxu0 0
    %1838 = vmatpush1.bf16.msra.mxu0 0
    %1839 = vmatprep.subr.bf16.mxu0 0
    %1840 = vmatpush1.bf16.msra.mxu0 0
    %1841 = vmatprep.subr.bf16.mxu0 0
    %1842 = vmatpush1.bf16.msra.mxu0 0
    %1843 = vmatprep.subr.bf16.mxu0 0
    %1844 = vmatpush1.bf16.msra.mxu0 0
    %1845 = vmatprep.subr.bf16.mxu0 0
    %1846 = vmatpush1.bf16.msra.mxu0 0
    %1847 = vmatprep.subr.bf16.mxu0 0
    %1848 = vmatpush1.bf16.msra.mxu0 0
    %1849 = vmatprep.subr.bf16.mxu0 0
    %1850 = vmatpush1.bf16.msra.mxu0 0
    %1851 = vmatprep.subr.bf16.mxu0 0
    %1852 = vmatpush1.bf16.msra.mxu0 0
    %1853 = vmatprep.subr.bf16.mxu0 0
    %1854 = vmatpush1.bf16.msra.mxu0 0
    %1855 = vmatprep.subr.bf16.mxu0 0
    %1856 = vmatpush1.bf16.msra.mxu0 0
    %1857 = vmatprep.subr.bf16.mxu0 0
    %1858 = vmatpush1.bf16.msra.mxu0 0
    %1859 = vmatprep.subr.bf16.mxu0 0
    %1860 = vmatpush1.bf16.msra.mxu0 0
    %1861 = vmatprep.subr.bf16.mxu0 0
    %1862 = vmatpush1.bf16.msra.mxu0 0
    %1863 = vmatprep.mubr.bf16.mxu0 0
    %1864 = vmatmul.mubr.bf16.gmra.mrb[0].mxu0 %v1438
    %v1865 = vpop.f32.mrb[0].mxu0
    %v1866 = vadd.f32 %v1818, %v1865
    %v1867 = vpop.f32.mrb[0].mxu0
    %v1868 = vpop.f32.mrb[0].mxu0
    %v1869 = vadd.f32 %v1818, %v1868
    %v1870 = vpop.f32.mrb[0].mxu0
    %1871 = vmatprep.mubr.bf16.mxu0 0
    %1872 = vmatmul.mubr.bf16.gmra.mrb[0].mxu0 %v1441
    %v1873 = vpop.f32.mrb[0].mxu0
    %v1874 = vadd.f32 %v1818, %v1873
    %v1875 = vpop.f32.mrb[0].mxu0
    %v1876 = vpop.f32.mrb[0].mxu0
    %v1877 = vadd.f32 %v1818, %v1876
    %v1878 = vpop.f32.mrb[0].mxu0
    %1879 = vdwg.mxu0
    %v1880 = vadd.f32 %v1806, %v1866
    %v1881 = vadd.f32 %v1807, %v1869
    %v1882 = vadd.f32 %v1808, %v1874
    %v1883 = vadd.f32 %v1809, %v1877
    %v1884 = vmax.f32 %v1880, 0.0
    %v1885 = vmax.f32 %v1881, 0.0
    %v1886 = vmax.f32 %v1882, 0.0
    %v1887 = vmax.f32 %v1883, 0.0
    %vm1888 = vcmp.ge.s32.totalorder %v30, 16
    %vm1889 = vcmp.ge.s32.totalorder %v31, 16
    %vm1890 = vcmp.ge.s32.totalorder %v32, 16
    %vm1891 = vcmp.ge.s32.totalorder %v33, 16
    %v1892 = vsel %vm1888, 1, 0
    %v1893 = vsel %vm1889, 1, 0
    %v1894 = vsel %vm1890, 1, 0
    %v1895 = vsel %vm1891, 1, 0
    %vm1896 = vcmp.eq.s32.totalorder %v1892, 1
    %vm1897 = vcmp.eq.s32.totalorder %v1893, 1
    %vm1898 = vcmp.eq.s32.totalorder %v1894, 1
    %vm1899 = vcmp.eq.s32.totalorder %v1895, 1
    %v1900 = vlaneseq
    %v1901 = vshrl.u32 %v1900, 7
    %v1902 = vsub.s32 0, %v1901
    %v1903 = vrot.slane %v1886, %v1902
    %v1904 = vlaneseq
    %v1905 = vshrl.u32 %v1904, 7
    %v1906 = vsub.s32 0, %v1905
    %v1907 = vrot.slane %v1884, %v1906
    %v1908 = vsel %vm1896, %v1903, %v1907
    %v1909 = vsel %vm1897, %v1903, %v1907
    %v1910 = vsel %vm1898, %v1903, %v1907
    %v1911 = vsel %vm1899, %v1903, %v1907
    %v1912 = vlaneseq
    %v1913 = vshrl.u32 %v1912, 7
    %v1914 = vsub.s32 7, %v1913
    %v1915 = vrot.slane %v1887, %v1914
    %v1916 = vlaneseq
    %v1917 = vshrl.u32 %v1916, 7
    %v1918 = vsub.s32 7, %v1917
    %v1919 = vrot.slane %v1885, %v1918
    %v1920 = vsel %vm1896, %v1915, %v1919
    %v1921 = vsel %vm1897, %v1915, %v1919
    %v1922 = vsel %vm1898, %v1915, %v1919
    %v1923 = vsel %vm1899, %v1915, %v1919
    %v1924 = vrot.slane %v1884, 5
    %v1925 = vrot.slane %v1885, 5
    %v1926 = vrot.slane %v1886, 5
    %v1927 = vrot.slane %v1887, 5
    %vm1928 = vcmp.lt.s32.totalorder %v30, 3
    %v1929 = vsel %vm1928, %v1926, %v1927
    %v1930 = vsel %vm1928, %v1925, %v1926
    %v1931 = vsel %vm1928, %v1924, %v1925
    %v1932 = vsel %vm1928, %v1927, %v1924
    %vm1933 = vcmp.ge.s32.totalorder %v78, 3
    %vm1934 = vcmp.ge.s32.totalorder %v79, 3
    %vm1935 = vcmp.ge.s32.totalorder %v80, 3
    %vm1936 = vcmp.ge.s32.totalorder %v81, 3
    %v1937 = vsel %vm1933, 1, 0
    %v1938 = vsel %vm1934, 1, 0
    %v1939 = vsel %vm1935, 1, 0
    %v1940 = vsel %vm1936, 1, 0
    %vm1941 = vcmp.eq.s32.totalorder %v1937, 1
    %vm1942 = vcmp.eq.s32.totalorder %v1938, 1
    %vm1943 = vcmp.eq.s32.totalorder %v1939, 1
    %vm1944 = vcmp.eq.s32.totalorder %v1940, 1
    %v1945 = vsel %vm1941, %v1932, %v1908
    %v1946 = vsel %vm1942, %v1931, %v1909
    %v1947 = vsel %vm1943, %v1930, %v1910
    %v1948 = vsel %vm1944, %v1929, %v1911
    %v1949 = vrot.slane %v1884, 6
    %v1950 = vrot.slane %v1885, 6
    %v1951 = vrot.slane %v1886, 6
    %v1952 = vrot.slane %v1887, 6
    %v1953 = vsel %vm90, %v1951, %v1952
    %v1954 = vsel %vm90, %v1950, %v1951
    %v1955 = vsel %vm90, %v1949, %v1950
    %v1956 = vsel %vm90, %v1952, %v1949
    %v1957 = vsel %vm103, %v1956, %v1908
    %v1958 = vsel %vm104, %v1955, %v1909
    %v1959 = vsel %vm105, %v1954, %v1910
    %v1960 = vsel %vm106, %v1953, %v1911
    %v1961 = vrot.slane %v1884, 7
    %v1962 = vrot.slane %v1885, 7
    %v1963 = vrot.slane %v1886, 7
    %v1964 = vrot.slane %v1887, 7
    %v1965 = vsel %vm115, %v1963, %v1964
    %v1966 = vsel %vm115, %v1962, %v1963
    %v1967 = vsel %vm115, %v1961, %v1962
    %v1968 = vsel %vm115, %v1964, %v1961
    %v1969 = vsel %vm128, %v1968, %v1908
    %v1970 = vsel %vm129, %v1967, %v1909
    %v1971 = vsel %vm130, %v1966, %v1910
    %v1972 = vsel %vm131, %v1965, %v1911
    %v1973 = vrot.slane %v1884, 1
    %v1974 = vrot.slane %v1885, 1
    %v1975 = vrot.slane %v1886, 1
    %v1976 = vrot.slane %v1887, 1
    %vm1977 = vcmp.lt.s32.totalorder %v30, 7
    %v1978 = vsel %vm1977, %v1975, %v1976
    %v1979 = vsel %vm1977, %v1974, %v1975
    %v1980 = vsel %vm1977, %v1973, %v1974
    %v1981 = vsel %vm1977, %v1976, %v1973
    %vm1982 = vcmp.lt.s32.totalorder %v78, 15
    %vm1983 = vcmp.lt.s32.totalorder %v79, 15
    %vm1984 = vcmp.lt.s32.totalorder %v80, 15
    %vm1985 = vcmp.lt.s32.totalorder %v81, 15
    %v1986 = vsel %vm1982, 1, 0
    %v1987 = vsel %vm1983, 1, 0
    %v1988 = vsel %vm1984, 1, 0
    %v1989 = vsel %vm1985, 1, 0
    %vm1990 = vcmp.eq.s32.totalorder %v1986, 1
    %vm1991 = vcmp.eq.s32.totalorder %v1987, 1
    %vm1992 = vcmp.eq.s32.totalorder %v1988, 1
    %vm1993 = vcmp.eq.s32.totalorder %v1989, 1
    %v1994 = vsel %vm1990, %v1980, %v1920
    %v1995 = vsel %vm1991, %v1979, %v1921
    %v1996 = vsel %vm1992, %v1978, %v1922
    %v1997 = vsel %vm1993, %v1981, %v1923
    %v1998 = vrot.slane %v1884, 2
    %v1999 = vrot.slane %v1885, 2
    %v2000 = vrot.slane %v1886, 2
    %v2001 = vrot.slane %v1887, 2
    %vm2002 = vcmp.lt.s32.totalorder %v30, 6
    %v2003 = vsel %vm2002, %v2000, %v2001
    %v2004 = vsel %vm2002, %v1999, %v2000
    %v2005 = vsel %vm2002, %v1998, %v1999
    %v2006 = vsel %vm2002, %v2001, %v1998
    %vm2007 = vcmp.lt.s32.totalorder %v78, 14
    %vm2008 = vcmp.lt.s32.totalorder %v79, 14
    %vm2009 = vcmp.lt.s32.totalorder %v80, 14
    %vm2010 = vcmp.lt.s32.totalorder %v81, 14
    %v2011 = vsel %vm2007, 1, 0
    %v2012 = vsel %vm2008, 1, 0
    %v2013 = vsel %vm2009, 1, 0
    %v2014 = vsel %vm2010, 1, 0
    %vm2015 = vcmp.eq.s32.totalorder %v2011, 1
    %vm2016 = vcmp.eq.s32.totalorder %v2012, 1
    %vm2017 = vcmp.eq.s32.totalorder %v2013, 1
    %vm2018 = vcmp.eq.s32.totalorder %v2014, 1
    %v2019 = vsel %vm2015, %v2005, %v1920
    %v2020 = vsel %vm2016, %v2004, %v1921
    %v2021 = vsel %vm2017, %v2003, %v1922
    %v2022 = vsel %vm2018, %v2006, %v1923
    %v2023 = vrot.slane %v1884, 3
    %v2024 = vrot.slane %v1885, 3
    %v2025 = vrot.slane %v1886, 3
    %v2026 = vrot.slane %v1887, 3
    %vm2027 = vcmp.lt.s32.totalorder %v30, 5
    %v2028 = vsel %vm2027, %v2025, %v2026
    %v2029 = vsel %vm2027, %v2024, %v2025
    %v2030 = vsel %vm2027, %v2023, %v2024
    %v2031 = vsel %vm2027, %v2026, %v2023
    %vm2032 = vcmp.lt.s32.totalorder %v78, 13
    %vm2033 = vcmp.lt.s32.totalorder %v79, 13
    %vm2034 = vcmp.lt.s32.totalorder %v80, 13
    %vm2035 = vcmp.lt.s32.totalorder %v81, 13
    %v2036 = vsel %vm2032, 1, 0
    %v2037 = vsel %vm2033, 1, 0
    %v2038 = vsel %vm2034, 1, 0
    %v2039 = vsel %vm2035, 1, 0
    %vm2040 = vcmp.eq.s32.totalorder %v2036, 1
    %vm2041 = vcmp.eq.s32.totalorder %v2037, 1
    %vm2042 = vcmp.eq.s32.totalorder %v2038, 1
    %vm2043 = vcmp.eq.s32.totalorder %v2039, 1
    %v2044 = vsel %vm2040, %v2030, %v1920
    %v2045 = vsel %vm2041, %v2029, %v1921
    %v2046 = vsel %vm2042, %v2028, %v1922
    %v2047 = vsel %vm2043, %v2031, %v1923
    %v2048 = vpack.c.bf16 %v1946, %v1945
    %v2049 = vpack.c.bf16 %v1948, %v1947
    %v2050 = vld [vmem:[#allocation2 + $0x128] sm:$0xf]
    %v2051 = vld [vmem:[#allocation2 + $0x12c] sm:$0xf]
    %v2052 = vld [vmem:[#allocation2 + $0x130] sm:$0xf]
    %v2053 = vld [vmem:[#allocation2 + $0x134] sm:$0xf]
    %v2054 = vld [vmem:[#allocation2 + $0x138] sm:$0xf]
    %v2055 = vld [vmem:[#allocation2 + $0x13c] sm:$0xf]
    %v2056 = vld [vmem:[#allocation2 + $0x140] sm:$0xf]
    %v2057 = vld [vmem:[#allocation2 + $0x144] sm:$0xf]
    %v2058 = vpack.c.bf16 %v1958, %v1957
    %v2059 = vpack.c.bf16 %v1960, %v1959
    %v2060 = vld [vmem:[#allocation2 + $0x148] sm:$0xf]
    %v2061 = vld [vmem:[#allocation2 + $0x14c] sm:$0xf]
    %v2062 = vld [vmem:[#allocation2 + $0x150] sm:$0xf]
    %v2063 = vld [vmem:[#allocation2 + $0x154] sm:$0xf]
    %v2064 = vld [vmem:[#allocation2 + $0x158] sm:$0xf]
    %v2065 = vld [vmem:[#allocation2 + $0x15c] sm:$0xf]
    %v2066 = vld [vmem:[#allocation2 + $0x160] sm:$0xf]
    %v2067 = vld [vmem:[#allocation2 + $0x164] sm:$0xf]
    %v2076 = vunpack.c.l.b16 %v2060
    %v2077 = vunpack.c.l.b16 %v2061
    %v2078 = vunpack.c.l.b16 %v2062
    %v2079 = vunpack.c.l.b16 %v2063
    %v2080 = vunpack.c.l.b16 %v2064
    %v2081 = vunpack.c.l.b16 %v2065
    %v2082 = vunpack.c.l.b16 %v2066
    %v2083 = vunpack.c.l.b16 %v2067
    %v2084 = vpack.c.b16 %v2077, %v2076
    %v2085 = vpack.c.b16 %v2079, %v2078
    %v2086 = vpack.c.b16 %v2081, %v2080
    %v2087 = vpack.c.b16 %v2083, %v2082
    %v2093 = vsel %vm1569, %v2058, 0
    %v2096 = vsel %vm1569, %v2059, 0
    %2098 = vmatprep.subr.bf16.mxu0 0
    %2099 = vmatpush1.bf16.msra.mxu0 %v2084
    %2100 = vmatprep.subr.bf16.mxu0 0
    %2101 = vmatpush1.bf16.msra.mxu0 %v2085
    %2102 = vmatprep.subr.bf16.mxu0 0
    %2103 = vmatpush1.bf16.msra.mxu0 %v2086
    %2104 = vmatprep.subr.bf16.mxu0 0
    %2105 = vmatpush1.bf16.msra.mxu0 %v2087
    %2106 = vmatprep.subr.bf16.mxu0 0
    %2107 = vmatpush1.bf16.msra.mxu0 0
    %2108 = vmatprep.subr.bf16.mxu0 0
    %2109 = vmatpush1.bf16.msra.mxu0 0
    %2110 = vmatprep.subr.bf16.mxu0 0
    %2111 = vmatpush1.bf16.msra.mxu0 0
    %2112 = vmatprep.subr.bf16.mxu0 0
    %2113 = vmatpush1.bf16.msra.mxu0 0
    %2114 = vmatprep.subr.bf16.mxu0 0
    %2115 = vmatpush1.bf16.msra.mxu0 0
    %2116 = vmatprep.subr.bf16.mxu0 0
    %2117 = vmatpush1.bf16.msra.mxu0 0
    %2118 = vmatprep.subr.bf16.mxu0 0
    %2119 = vmatpush1.bf16.msra.mxu0 0
    %2120 = vmatprep.subr.bf16.mxu0 0
    %2121 = vmatpush1.bf16.msra.mxu0 0
    %2122 = vmatprep.subr.bf16.mxu0 0
    %2123 = vmatpush1.bf16.msra.mxu0 0
    %2124 = vmatprep.subr.bf16.mxu0 0
    %2125 = vmatpush1.bf16.msra.mxu0 0
    %2126 = vmatprep.subr.bf16.mxu0 0
    %2127 = vmatpush1.bf16.msra.mxu0 0
    %2128 = vmatprep.subr.bf16.mxu0 0
    %2129 = vmatpush1.bf16.msra.mxu0 0
    %2130 = vmatprep.mubr.bf16.mxu0 0
    %2131 = vmatmul.mubr.bf16.gmra.mrb[0].mxu0 %v2093
    %v2132 = vpop.f32.mrb[0].mxu0
    %v2133 = vadd.f32 0.0, %v2132
    %v2134 = vpop.f32.mrb[0].mxu0
    %v2135 = vpop.f32.mrb[0].mxu0
    %v2136 = vadd.f32 0.0, %v2135
    %v2137 = vpop.f32.mrb[0].mxu0
    %2138 = vmatprep.mubr.bf16.mxu0 0
    %2139 = vmatmul.mubr.bf16.gmra.mrb[0].mxu0 %v2096
    %v2140 = vpop.f32.mrb[0].mxu0
    %v2141 = vadd.f32 0.0, %v2140
    %v2142 = vpop.f32.mrb[0].mxu0
    %v2143 = vpop.f32.mrb[0].mxu0
    %v2144 = vadd.f32 0.0, %v2143
    %v2145 = vpop.f32.mrb[0].mxu0
    %2146 = vdwg.mxu0
    %v2155 = vunpack.c.l.b16 %v2050
    %v2156 = vunpack.c.l.b16 %v2051
    %v2157 = vunpack.c.l.b16 %v2052
    %v2158 = vunpack.c.l.b16 %v2053
    %v2159 = vunpack.c.l.b16 %v2054
    %v2160 = vunpack.c.l.b16 %v2055
    %v2161 = vunpack.c.l.b16 %v2056
    %v2162 = vunpack.c.l.b16 %v2057
    %v2163 = vpack.c.b16 %v2156, %v2155
    %v2164 = vpack.c.b16 %v2158, %v2157
    %v2165 = vpack.c.b16 %v2160, %v2159
    %v2166 = vpack.c.b16 %v2162, %v2161
    %v2172 = vsel %vm1569, %v2048, 0
    %v2175 = vsel %vm1569, %v2049, 0
    %2177 = vmatprep.subr.bf16.mxu0 0
    %2178 = vmatpush1.bf16.msra.mxu0 %v2163
    %2179 = vmatprep.subr.bf16.mxu0 0
    %2180 = vmatpush1.bf16.msra.mxu0 %v2164
    %2181 = vmatprep.subr.bf16.mxu0 0
    %2182 = vmatpush1.bf16.msra.mxu0 %v2165
    %2183 = vmatprep.subr.bf16.mxu0 0
    %2184 = vmatpush1.bf16.msra.mxu0 %v2166
    %2185 = vmatprep.subr.bf16.mxu0 0
    %2186 = vmatpush1.bf16.msra.mxu0 0
    %2187 = vmatprep.subr.bf16.mxu0 0
    %2188 = vmatpush1.bf16.msra.mxu0 0
    %2189 = vmatprep.subr.bf16.mxu0 0
    %2190 = vmatpush1.bf16.msra.mxu0 0
    %2191 = vmatprep.subr.bf16.mxu0 0
    %2192 = vmatpush1.bf16.msra.mxu0 0
    %2193 = vmatprep.subr.bf16.mxu0 0
    %2194 = vmatpush1.bf16.msra.mxu0 0
    %2195 = vmatprep.subr.bf16.mxu0 0
    %2196 = vmatpush1.bf16.msra.mxu0 0
    %2197 = vmatprep.subr.bf16.mxu0 0
    %2198 = vmatpush1.bf16.msra.mxu0 0
    %2199 = vmatprep.subr.bf16.mxu0 0
    %2200 = vmatpush1.bf16.msra.mxu0 0
    %2201 = vmatprep.subr.bf16.mxu0 0
    %2202 = vmatpush1.bf16.msra.mxu0 0
    %2203 = vmatprep.subr.bf16.mxu0 0
    %2204 = vmatpush1.bf16.msra.mxu0 0
    %2205 = vmatprep.subr.bf16.mxu0 0
    %2206 = vmatpush1.bf16.msra.mxu0 0
    %2207 = vmatprep.subr.bf16.mxu0 0
    %2208 = vmatpush1.bf16.msra.mxu0 0
    %2209 = vmatprep.mubr.bf16.mxu0 0
    %2210 = vmatmul.mubr.bf16.gmra.mrb[0].mxu0 %v2172
    %v2211 = vpop.f32.mrb[0].mxu0
    %v2212 = vadd.f32 %v2133, %v2211
    %v2213 = vpop.f32.mrb[0].mxu0
    %v2214 = vpop.f32.mrb[0].mxu0
    %v2215 = vadd.f32 %v2136, %v2214
    %v2216 = vpop.f32.mrb[0].mxu0
    %2217 = vmatprep.mubr.bf16.mxu0 0
    %2218 = vmatmul.mubr.bf16.gmra.mrb[0].mxu0 %v2175
    %v2219 = vpop.f32.mrb[0].mxu0
    %v2220 = vadd.f32 %v2141, %v2219
    %v2221 = vpop.f32.mrb[0].mxu0
    %v2222 = vpop.f32.mrb[0].mxu0
    %v2223 = vadd.f32 %v2144, %v2222
    %v2224 = vpop.f32.mrb[0].mxu0
    %2225 = vdwg.mxu0
    %v2226 = vpack.c.bf16 %v1970, %v1969
    %v2227 = vpack.c.bf16 %v1972, %v1971
    %v2228 = vld [vmem:[#allocation2 + $0x168] sm:$0xf]
    %v2229 = vld [vmem:[#allocation2 + $0x16c] sm:$0xf]
    %v2230 = vld [vmem:[#allocation2 + $0x170] sm:$0xf]
    %v2231 = vld [vmem:[#allocation2 + $0x174] sm:$0xf]
    %v2232 = vld [vmem:[#allocation2 + $0x178] sm:$0xf]
    %v2233 = vld [vmem:[#allocation2 + $0x17c] sm:$0xf]
    %v2234 = vld [vmem:[#allocation2 + $0x180] sm:$0xf]
    %v2235 = vld [vmem:[#allocation2 + $0x184] sm:$0xf]
    %v2244 = vunpack.c.l.b16 %v2228
    %v2245 = vunpack.c.l.b16 %v2229
    %v2246 = vunpack.c.l.b16 %v2230
    %v2247 = vunpack.c.l.b16 %v2231
    %v2248 = vunpack.c.l.b16 %v2232
    %v2249 = vunpack.c.l.b16 %v2233
    %v2250 = vunpack.c.l.b16 %v2234
    %v2251 = vunpack.c.l.b16 %v2235
    %v2252 = vpack.c.b16 %v2245, %v2244
    %v2253 = vpack.c.b16 %v2247, %v2246
    %v2254 = vpack.c.b16 %v2249, %v2248
    %v2255 = vpack.c.b16 %v2251, %v2250
    %v2261 = vsel %vm1569, %v2226, 0
    %v2264 = vsel %vm1569, %v2227, 0
    %2266 = vmatprep.subr.bf16.mxu0 0
    %2267 = vmatpush1.bf16.msra.mxu0 %v2252
    %2268 = vmatprep.subr.bf16.mxu0 0
    %2269 = vmatpush1.bf16.msra.mxu0 %v2253
    %2270 = vmatprep.subr.bf16.mxu0 0
    %2271 = vmatpush1.bf16.msra.mxu0 %v2254
    %2272 = vmatprep.subr.bf16.mxu0 0
    %2273 = vmatpush1.bf16.msra.mxu0 %v2255
    %2274 = vmatprep.subr.bf16.mxu0 0
    %2275 = vmatpush1.bf16.msra.mxu0 0
    %2276 = vmatprep.subr.bf16.mxu0 0
    %2277 = vmatpush1.bf16.msra.mxu0 0
    %2278 = vmatprep.subr.bf16.mxu0 0
    %2279 = vmatpush1.bf16.msra.mxu0 0
    %2280 = vmatprep.subr.bf16.mxu0 0
    %2281 = vmatpush1.bf16.msra.mxu0 0
    %2282 = vmatprep.subr.bf16.mxu0 0
    %2283 = vmatpush1.bf16.msra.mxu0 0
    %2284 = vmatprep.subr.bf16.mxu0 0
    %2285 = vmatpush1.bf16.msra.mxu0 0
    %2286 = vmatprep.subr.bf16.mxu0 0
    %2287 = vmatpush1.bf16.msra.mxu0 0
    %2288 = vmatprep.subr.bf16.mxu0 0
    %2289 = vmatpush1.bf16.msra.mxu0 0
    %2290 = vmatprep.subr.bf16.mxu0 0
    %2291 = vmatpush1.bf16.msra.mxu0 0
    %2292 = vmatprep.subr.bf16.mxu0 0
    %2293 = vmatpush1.bf16.msra.mxu0 0
    %2294 = vmatprep.subr.bf16.mxu0 0
    %2295 = vmatpush1.bf16.msra.mxu0 0
    %2296 = vmatprep.subr.bf16.mxu0 0
    %2297 = vmatpush1.bf16.msra.mxu0 0
    %2298 = vmatprep.mubr.bf16.mxu0 0
    %2299 = vmatmul.mubr.bf16.gmra.mrb[0].mxu0 %v2261
    %v2300 = vpop.f32.mrb[0].mxu0
    %v2301 = vadd.f32 0.0, %v2300
    %v2302 = vpop.f32.mrb[0].mxu0
    %v2303 = vpop.f32.mrb[0].mxu0
    %v2304 = vadd.f32 0.0, %v2303
    %v2305 = vpop.f32.mrb[0].mxu0
    %2306 = vmatprep.mubr.bf16.mxu0 0
    %2307 = vmatmul.mubr.bf16.gmra.mrb[0].mxu0 %v2264
    %v2308 = vpop.f32.mrb[0].mxu0
    %v2309 = vadd.f32 0.0, %v2308
    %v2310 = vpop.f32.mrb[0].mxu0
    %v2311 = vpop.f32.mrb[0].mxu0
    %v2312 = vadd.f32 0.0, %v2311
    %v2313 = vpop.f32.mrb[0].mxu0
    %2314 = vdwg.mxu0
    %v2315 = vadd.f32 %v2212, %v2301
    %v2316 = vadd.f32 %v2215, %v2304
    %v2317 = vadd.f32 %v2220, %v2309
    %v2318 = vadd.f32 %v2223, %v2312
    %v2319 = vpack.c.bf16 %v1885, %v1884
    %v2320 = vpack.c.bf16 %v1887, %v1886
    %v2321 = vld [vmem:[#allocation2 + $0x188] sm:$0xf]
    %v2322 = vld [vmem:[#allocation2 + $0x18c] sm:$0xf]
    %v2323 = vld [vmem:[#allocation2 + $0x190] sm:$0xf]
    %v2324 = vld [vmem:[#allocation2 + $0x194] sm:$0xf]
    %v2325 = vld [vmem:[#allocation2 + $0x198] sm:$0xf]
    %v2326 = vld [vmem:[#allocation2 + $0x19c] sm:$0xf]
    %v2327 = vld [vmem:[#allocation2 + $0x1a0] sm:$0xf]
    %v2328 = vld [vmem:[#allocation2 + $0x1a4] sm:$0xf]
    %v2337 = vunpack.c.l.b16 %v2321
    %v2338 = vunpack.c.l.b16 %v2322
    %v2339 = vunpack.c.l.b16 %v2323
    %v2340 = vunpack.c.l.b16 %v2324
    %v2341 = vunpack.c.l.b16 %v2325
    %v2342 = vunpack.c.l.b16 %v2326
    %v2343 = vunpack.c.l.b16 %v2327
    %v2344 = vunpack.c.l.b16 %v2328
    %v2345 = vpack.c.b16 %v2338, %v2337
    %v2346 = vpack.c.b16 %v2340, %v2339
    %v2347 = vpack.c.b16 %v2342, %v2341
    %v2348 = vpack.c.b16 %v2344, %v2343
    %v2354 = vsel %vm1569, %v2319, 0
    %v2357 = vsel %vm1569, %v2320, 0
    %2359 = vmatprep.subr.bf16.mxu0 0
    %2360 = vmatpush1.bf16.msra.mxu0 %v2345
    %2361 = vmatprep.subr.bf16.mxu0 0
    %2362 = vmatpush1.bf16.msra.mxu0 %v2346
    %2363 = vmatprep.subr.bf16.mxu0 0
    %2364 = vmatpush1.bf16.msra.mxu0 %v2347
    %2365 = vmatprep.subr.bf16.mxu0 0
    %2366 = vmatpush1.bf16.msra.mxu0 %v2348
    %2367 = vmatprep.subr.bf16.mxu0 0
    %2368 = vmatpush1.bf16.msra.mxu0 0
    %2369 = vmatprep.subr.bf16.mxu0 0
    %2370 = vmatpush1.bf16.msra.mxu0 0
    %2371 = vmatprep.subr.bf16.mxu0 0
    %2372 = vmatpush1.bf16.msra.mxu0 0
    %2373 = vmatprep.subr.bf16.mxu0 0
    %2374 = vmatpush1.bf16.msra.mxu0 0
    %2375 = vmatprep.subr.bf16.mxu0 0
    %2376 = vmatpush1.bf16.msra.mxu0 0
    %2377 = vmatprep.subr.bf16.mxu0 0
    %2378 = vmatpush1.bf16.msra.mxu0 0
    %2379 = vmatprep.subr.bf16.mxu0 0
    %2380 = vmatpush1.bf16.msra.mxu0 0
    %2381 = vmatprep.subr.bf16.mxu0 0
    %2382 = vmatpush1.bf16.msra.mxu0 0
    %2383 = vmatprep.subr.bf16.mxu0 0
    %2384 = vmatpush1.bf16.msra.mxu0 0
    %2385 = vmatprep.subr.bf16.mxu0 0
    %2386 = vmatpush1.bf16.msra.mxu0 0
    %2387 = vmatprep.subr.bf16.mxu0 0
    %2388 = vmatpush1.bf16.msra.mxu0 0
    %2389 = vmatprep.subr.bf16.mxu0 0
    %2390 = vmatpush1.bf16.msra.mxu0 0
    %2391 = vmatprep.mubr.bf16.mxu0 0
    %2392 = vmatmul.mubr.bf16.gmra.mrb[0].mxu0 %v2354
    %v2393 = vpop.f32.mrb[0].mxu0
    %v2394 = vadd.f32 0.0, %v2393
    %v2395 = vpop.f32.mrb[0].mxu0
    %v2396 = vpop.f32.mrb[0].mxu0
    %v2397 = vadd.f32 0.0, %v2396
    %v2398 = vpop.f32.mrb[0].mxu0
    %2399 = vmatprep.mubr.bf16.mxu0 0
    %2400 = vmatmul.mubr.bf16.gmra.mrb[0].mxu0 %v2357
    %v2401 = vpop.f32.mrb[0].mxu0
    %v2402 = vadd.f32 0.0, %v2401
    %v2403 = vpop.f32.mrb[0].mxu0
    %v2404 = vpop.f32.mrb[0].mxu0
    %v2405 = vadd.f32 0.0, %v2404
    %v2406 = vpop.f32.mrb[0].mxu0
    %2407 = vdwg.mxu0
    %v2408 = vadd.f32 %v2315, %v2394
    %v2409 = vadd.f32 %v2316, %v2397
    %v2410 = vadd.f32 %v2317, %v2402
    %v2411 = vadd.f32 %v2318, %v2405
    %v2412 = vpack.c.bf16 %v1995, %v1994
    %v2413 = vpack.c.bf16 %v1997, %v1996
    %v2414 = vld [vmem:[#allocation2 + $0x1a8] sm:$0xf]
    %v2415 = vld [vmem:[#allocation2 + $0x1ac] sm:$0xf]
    %v2416 = vld [vmem:[#allocation2 + $0x1b0] sm:$0xf]
    %v2417 = vld [vmem:[#allocation2 + $0x1b4] sm:$0xf]
    %v2418 = vld [vmem:[#allocation2 + $0x1b8] sm:$0xf]
    %v2419 = vld [vmem:[#allocation2 + $0x1bc] sm:$0xf]
    %v2420 = vld [vmem:[#allocation2 + $0x1c0] sm:$0xf]
    %v2421 = vld [vmem:[#allocation2 + $0x1c4] sm:$0xf]
    %v2430 = vunpack.c.l.b16 %v2414
    %v2431 = vunpack.c.l.b16 %v2415
    %v2432 = vunpack.c.l.b16 %v2416
    %v2433 = vunpack.c.l.b16 %v2417
    %v2434 = vunpack.c.l.b16 %v2418
    %v2435 = vunpack.c.l.b16 %v2419
    %v2436 = vunpack.c.l.b16 %v2420
    %v2437 = vunpack.c.l.b16 %v2421
    %v2438 = vpack.c.b16 %v2431, %v2430
    %v2439 = vpack.c.b16 %v2433, %v2432
    %v2440 = vpack.c.b16 %v2435, %v2434
    %v2441 = vpack.c.b16 %v2437, %v2436
    %v2447 = vsel %vm1569, %v2412, 0
    %v2450 = vsel %vm1569, %v2413, 0
    %2452 = vmatprep.subr.bf16.mxu0 0
    %2453 = vmatpush1.bf16.msra.mxu0 %v2438
    %2454 = vmatprep.subr.bf16.mxu0 0
    %2455 = vmatpush1.bf16.msra.mxu0 %v2439
    %2456 = vmatprep.subr.bf16.mxu0 0
    %2457 = vmatpush1.bf16.msra.mxu0 %v2440
    %2458 = vmatprep.subr.bf16.mxu0 0
    %2459 = vmatpush1.bf16.msra.mxu0 %v2441
    %2460 = vmatprep.subr.bf16.mxu0 0
    %2461 = vmatpush1.bf16.msra.mxu0 0
    %2462 = vmatprep.subr.bf16.mxu0 0
    %2463 = vmatpush1.bf16.msra.mxu0 0
    %2464 = vmatprep.subr.bf16.mxu0 0
    %2465 = vmatpush1.bf16.msra.mxu0 0
    %2466 = vmatprep.subr.bf16.mxu0 0
    %2467 = vmatpush1.bf16.msra.mxu0 0
    %2468 = vmatprep.subr.bf16.mxu0 0
    %2469 = vmatpush1.bf16.msra.mxu0 0
    %2470 = vmatprep.subr.bf16.mxu0 0
    %2471 = vmatpush1.bf16.msra.mxu0 0
    %2472 = vmatprep.subr.bf16.mxu0 0
    %2473 = vmatpush1.bf16.msra.mxu0 0
    %2474 = vmatprep.subr.bf16.mxu0 0
    %2475 = vmatpush1.bf16.msra.mxu0 0
    %2476 = vmatprep.subr.bf16.mxu0 0
    %2477 = vmatpush1.bf16.msra.mxu0 0
    %2478 = vmatprep.subr.bf16.mxu0 0
    %2479 = vmatpush1.bf16.msra.mxu0 0
    %2480 = vmatprep.subr.bf16.mxu0 0
    %2481 = vmatpush1.bf16.msra.mxu0 0
    %2482 = vmatprep.subr.bf16.mxu0 0
    %2483 = vmatpush1.bf16.msra.mxu0 0
    %2484 = vmatprep.mubr.bf16.mxu0 0
    %2485 = vmatmul.mubr.bf16.gmra.mrb[0].mxu0 %v2447
    %v2486 = vpop.f32.mrb[0].mxu0
    %v2487 = vadd.f32 0.0, %v2486
    %v2488 = vpop.f32.mrb[0].mxu0
    %v2489 = vpop.f32.mrb[0].mxu0
    %v2490 = vadd.f32 0.0, %v2489
    %v2491 = vpop.f32.mrb[0].mxu0
    %2492 = vmatprep.mubr.bf16.mxu0 0
    %2493 = vmatmul.mubr.bf16.gmra.mrb[0].mxu0 %v2450
    %v2494 = vpop.f32.mrb[0].mxu0
    %v2495 = vadd.f32 0.0, %v2494
    %v2496 = vpop.f32.mrb[0].mxu0
    %v2497 = vpop.f32.mrb[0].mxu0
    %v2498 = vadd.f32 0.0, %v2497
    %v2499 = vpop.f32.mrb[0].mxu0
    %2500 = vdwg.mxu0
    %v2501 = vadd.f32 %v2408, %v2487
    %v2502 = vadd.f32 %v2409, %v2490
    %v2503 = vadd.f32 %v2410, %v2495
    %v2504 = vadd.f32 %v2411, %v2498
    %v2505 = vpack.c.bf16 %v2020, %v2019
    %v2506 = vpack.c.bf16 %v2022, %v2021
    %v2507 = vld [vmem:[#allocation2 + $0x1c8] sm:$0xf]
    %v2508 = vld [vmem:[#allocation2 + $0x1cc] sm:$0xf]
    %v2509 = vld [vmem:[#allocation2 + $0x1d0] sm:$0xf]
    %v2510 = vld [vmem:[#allocation2 + $0x1d4] sm:$0xf]
    %v2511 = vld [vmem:[#allocation2 + $0x1d8] sm:$0xf]
    %v2512 = vld [vmem:[#allocation2 + $0x1dc] sm:$0xf]
    %v2513 = vld [vmem:[#allocation2 + $0x1e0] sm:$0xf]
    %v2514 = vld [vmem:[#allocation2 + $0x1e4] sm:$0xf]
    %v2523 = vunpack.c.l.b16 %v2507
    %v2524 = vunpack.c.l.b16 %v2508
    %v2525 = vunpack.c.l.b16 %v2509
    %v2526 = vunpack.c.l.b16 %v2510
    %v2527 = vunpack.c.l.b16 %v2511
    %v2528 = vunpack.c.l.b16 %v2512
    %v2529 = vunpack.c.l.b16 %v2513
    %v2530 = vunpack.c.l.b16 %v2514
    %v2531 = vpack.c.b16 %v2524, %v2523
    %v2532 = vpack.c.b16 %v2526, %v2525
    %v2533 = vpack.c.b16 %v2528, %v2527
    %v2534 = vpack.c.b16 %v2530, %v2529
    %v2540 = vsel %vm1569, %v2505, 0
    %v2543 = vsel %vm1569, %v2506, 0
    %2545 = vmatprep.subr.bf16.mxu0 0
    %2546 = vmatpush1.bf16.msra.mxu0 %v2531
    %2547 = vmatprep.subr.bf16.mxu0 0
    %2548 = vmatpush1.bf16.msra.mxu0 %v2532
    %2549 = vmatprep.subr.bf16.mxu0 0
    %2550 = vmatpush1.bf16.msra.mxu0 %v2533
    %2551 = vmatprep.subr.bf16.mxu0 0
    %2552 = vmatpush1.bf16.msra.mxu0 %v2534
    %2553 = vmatprep.subr.bf16.mxu0 0
    %2554 = vmatpush1.bf16.msra.mxu0 0
    %2555 = vmatprep.subr.bf16.mxu0 0
    %2556 = vmatpush1.bf16.msra.mxu0 0
    %2557 = vmatprep.subr.bf16.mxu0 0
    %2558 = vmatpush1.bf16.msra.mxu0 0
    %2559 = vmatprep.subr.bf16.mxu0 0
    %2560 = vmatpush1.bf16.msra.mxu0 0
    %2561 = vmatprep.subr.bf16.mxu0 0
    %2562 = vmatpush1.bf16.msra.mxu0 0
    %2563 = vmatprep.subr.bf16.mxu0 0
    %2564 = vmatpush1.bf16.msra.mxu0 0
    %2565 = vmatprep.subr.bf16.mxu0 0
    %2566 = vmatpush1.bf16.msra.mxu0 0
    %2567 = vmatprep.subr.bf16.mxu0 0
    %2568 = vmatpush1.bf16.msra.mxu0 0
    %2569 = vmatprep.subr.bf16.mxu0 0
    %2570 = vmatpush1.bf16.msra.mxu0 0
    %2571 = vmatprep.subr.bf16.mxu0 0
    %2572 = vmatpush1.bf16.msra.mxu0 0
    %2573 = vmatprep.subr.bf16.mxu0 0
    %2574 = vmatpush1.bf16.msra.mxu0 0
    %2575 = vmatprep.subr.bf16.mxu0 0
    %2576 = vmatpush1.bf16.msra.mxu0 0
    %2577 = vmatprep.mubr.bf16.mxu0 0
    %2578 = vmatmul.mubr.bf16.gmra.mrb[0].mxu0 %v2540
    %v2579 = vpop.f32.mrb[0].mxu0
    %v2580 = vadd.f32 0.0, %v2579
    %v2581 = vpop.f32.mrb[0].mxu0
    %v2582 = vpop.f32.mrb[0].mxu0
    %v2583 = vadd.f32 0.0, %v2582
    %v2584 = vpop.f32.mrb[0].mxu0
    %2585 = vmatprep.mubr.bf16.mxu0 0
    %2586 = vmatmul.mubr.bf16.gmra.mrb[0].mxu0 %v2543
    %v2587 = vpop.f32.mrb[0].mxu0
    %v2588 = vadd.f32 0.0, %v2587
    %v2589 = vpop.f32.mrb[0].mxu0
    %v2590 = vpop.f32.mrb[0].mxu0
    %v2591 = vadd.f32 0.0, %v2590
    %v2592 = vpop.f32.mrb[0].mxu0
    %2593 = vdwg.mxu0
    %v2594 = vadd.f32 %v2501, %v2580
    %v2595 = vadd.f32 %v2502, %v2583
    %v2596 = vadd.f32 %v2503, %v2588
    %v2597 = vadd.f32 %v2504, %v2591
    %v2598 = vpack.c.bf16 %v2045, %v2044
    %v2599 = vpack.c.bf16 %v2047, %v2046
    %v2600 = vld [vmem:[#allocation2 + $0x1e8] sm:$0xf]
    %v2601 = vld [vmem:[#allocation2 + $0x1ec] sm:$0xf]
    %v2602 = vld [vmem:[#allocation2 + $0x1f0] sm:$0xf]
    %v2603 = vld [vmem:[#allocation2 + $0x1f4] sm:$0xf]
    %v2604 = vld [vmem:[#allocation2 + $0x1f8] sm:$0xf]
    %v2605 = vld [vmem:[#allocation2 + $0x1fc] sm:$0xf]
    %v2606 = vld [vmem:[#allocation2 + $0x200] sm:$0xf]
    %v2607 = vld [vmem:[#allocation2 + $0x204] sm:$0xf]
    %v2616 = vunpack.c.l.b16 %v2600
    %v2617 = vunpack.c.l.b16 %v2601
    %v2618 = vunpack.c.l.b16 %v2602
    %v2619 = vunpack.c.l.b16 %v2603
    %v2620 = vunpack.c.l.b16 %v2604
    %v2621 = vunpack.c.l.b16 %v2605
    %v2622 = vunpack.c.l.b16 %v2606
    %v2623 = vunpack.c.l.b16 %v2607
    %v2624 = vpack.c.b16 %v2617, %v2616
    %v2625 = vpack.c.b16 %v2619, %v2618
    %v2626 = vpack.c.b16 %v2621, %v2620
    %v2627 = vpack.c.b16 %v2623, %v2622
    %v2633 = vsel %vm1569, %v2598, 0
    %v2636 = vsel %vm1569, %v2599, 0
    %2638 = vmatprep.subr.bf16.mxu0 0
    %2639 = vmatpush1.bf16.msra.mxu0 %v2624
    %2640 = vmatprep.subr.bf16.mxu0 0
    %2641 = vmatpush1.bf16.msra.mxu0 %v2625
    %2642 = vmatprep.subr.bf16.mxu0 0
    %2643 = vmatpush1.bf16.msra.mxu0 %v2626
    %2644 = vmatprep.subr.bf16.mxu0 0
    %2645 = vmatpush1.bf16.msra.mxu0 %v2627
    %2646 = vmatprep.subr.bf16.mxu0 0
    %2647 = vmatpush1.bf16.msra.mxu0 0
    %2648 = vmatprep.subr.bf16.mxu0 0
    %2649 = vmatpush1.bf16.msra.mxu0 0
    %2650 = vmatprep.subr.bf16.mxu0 0
    %2651 = vmatpush1.bf16.msra.mxu0 0
    %2652 = vmatprep.subr.bf16.mxu0 0
    %2653 = vmatpush1.bf16.msra.mxu0 0
    %2654 = vmatprep.subr.bf16.mxu0 0
    %2655 = vmatpush1.bf16.msra.mxu0 0
    %2656 = vmatprep.subr.bf16.mxu0 0
    %2657 = vmatpush1.bf16.msra.mxu0 0
    %2658 = vmatprep.subr.bf16.mxu0 0
    %2659 = vmatpush1.bf16.msra.mxu0 0
    %2660 = vmatprep.subr.bf16.mxu0 0
    %2661 = vmatpush1.bf16.msra.mxu0 0
    %2662 = vmatprep.subr.bf16.mxu0 0
    %2663 = vmatpush1.bf16.msra.mxu0 0
    %2664 = vmatprep.subr.bf16.mxu0 0
    %2665 = vmatpush1.bf16.msra.mxu0 0
    %2666 = vmatprep.subr.bf16.mxu0 0
    %2667 = vmatpush1.bf16.msra.mxu0 0
    %2668 = vmatprep.subr.bf16.mxu0 0
    %2669 = vmatpush1.bf16.msra.mxu0 0
    %2670 = vmatprep.mubr.bf16.mxu0 0
    %2671 = vmatmul.mubr.bf16.gmra.mrb[0].mxu0 %v2633
    %v2672 = vpop.f32.mrb[0].mxu0
    %v2673 = vadd.f32 0.0, %v2672
    %v2674 = vpop.f32.mrb[0].mxu0
    %v2675 = vpop.f32.mrb[0].mxu0
    %v2676 = vadd.f32 0.0, %v2675
    %v2677 = vpop.f32.mrb[0].mxu0
    %2678 = vmatprep.mubr.bf16.mxu0 0
    %2679 = vmatmul.mubr.bf16.gmra.mrb[0].mxu0 %v2636
    %v2680 = vpop.f32.mrb[0].mxu0
    %v2681 = vadd.f32 0.0, %v2680
    %v2682 = vpop.f32.mrb[0].mxu0
    %v2683 = vpop.f32.mrb[0].mxu0
    %v2684 = vadd.f32 0.0, %v2683
    %v2685 = vpop.f32.mrb[0].mxu0
    %2686 = vdwg.mxu0
    %v2687 = vadd.f32 %v2594, %v2673
    %v2688 = vadd.f32 %v2595, %v2676
    %v2689 = vadd.f32 %v2596, %v2681
    %v2690 = vadd.f32 %v2597, %v2684
    %v2691 = vld [vmem:[%s2 + $0x9] sm:$0x1]
    %v2692 = vlaneseq
    %v2693 = vshrl.u32 %v2692, 7
    %v2694 = vsub.s32 0, %v2693
    %v2695 = vrot.slane %v2691, %v2694
    %v2696 = vadd.f32 %v2687, %v2695
    %v2697 = vadd.f32 %v2688, %v2695
    %v2698 = vadd.f32 %v2689, %v2695
    %v2699 = vadd.f32 %v2690, %v2695
    %vm2700 = vcmp.gt.f32.partialorder %v2696, 0.0
    %vm2701 = vcmp.gt.f32.partialorder %v2697, 0.0
    %vm2702 = vcmp.gt.f32.partialorder %v2698, 0.0
    %vm2703 = vcmp.gt.f32.partialorder %v2699, 0.0
    %v2704 = vmul.f32 %v2696, 0.01
    %v2705 = vmul.f32 %v2697, 0.01
    %v2706 = vmul.f32 %v2698, 0.01
    %v2707 = vmul.f32 %v2699, 0.01
    %v2708 = vsel %vm2700, %v2696, %v2704
    %v2709 = vsel %vm2701, %v2697, %v2705
    %v2710 = vsel %vm2702, %v2698, %v2706
    %v2711 = vsel %vm2703, %v2699, %v2707
    %v2712 = vrot.slane %v2708, 6
    %v2713 = vrot.slane %v2709, 6
    %v2714 = vrot.slane %v2710, 6
    %v2715 = vrot.slane %v2711, 6
    %v2716 = vsel %vm90, %v2714, %v2715
    %v2717 = vsel %vm90, %v2713, %v2714
    %v2718 = vsel %vm90, %v2712, %v2713
    %v2719 = vsel %vm90, %v2715, %v2712
    %v2720 = vsel %vm103, %v2719, 0.0
    %v2721 = vsel %vm104, %v2718, 0.0
    %v2722 = vsel %vm105, %v2717, 0.0
    %v2723 = vsel %vm106, %v2716, 0.0
    %v2724 = vrot.slane %v2708, 7
    %v2725 = vrot.slane %v2709, 7
    %v2726 = vrot.slane %v2710, 7
    %v2727 = vrot.slane %v2711, 7
    %v2728 = vsel %vm115, %v2726, %v2727
    %v2729 = vsel %vm115, %v2725, %v2726
    %v2730 = vsel %vm115, %v2724, %v2725
    %v2731 = vsel %vm115, %v2727, %v2724
    %v2732 = vsel %vm128, %v2731, 0.0
    %v2733 = vsel %vm129, %v2730, 0.0
    %v2734 = vsel %vm130, %v2729, 0.0
    %v2735 = vsel %vm131, %v2728, 0.0
    %v2736 = vrot.slane %v2708, 1
    %v2737 = vrot.slane %v2709, 1
    %v2738 = vrot.slane %v2710, 1
    %v2739 = vrot.slane %v2711, 1
    %v2740 = vsel %vm1977, %v2738, %v2739
    %v2741 = vsel %vm1977, %v2737, %v2738
    %v2742 = vsel %vm1977, %v2736, %v2737
    %v2743 = vsel %vm1977, %v2739, %v2736
    %v2744 = vsel %vm1990, %v2742, 0.0
    %v2745 = vsel %vm1991, %v2741, 0.0
    %v2746 = vsel %vm1992, %v2740, 0.0
    %v2747 = vsel %vm1993, %v2743, 0.0
    %v2748 = vrot.slane %v2708, 2
    %v2749 = vrot.slane %v2709, 2
    %v2750 = vrot.slane %v2710, 2
    %v2751 = vrot.slane %v2711, 2
    %v2752 = vsel %vm2002, %v2750, %v2751
    %v2753 = vsel %vm2002, %v2749, %v2750
    %v2754 = vsel %vm2002, %v2748, %v2749
    %v2755 = vsel %vm2002, %v2751, %v2748
    %v2756 = vsel %vm2015, %v2754, 0.0
    %v2757 = vsel %vm2016, %v2753, 0.0
    %v2758 = vsel %vm2017, %v2752, 0.0
    %v2759 = vsel %vm2018, %v2755, 0.0
    %v2760 = vpack.c.bf16 %v2721, %v2720
    %v2761 = vpack.c.bf16 %v2733, %v2732
    %v2762 = vpack.c.bf16 %v2709, %v2708
    %v2763 = vpack.c.bf16 %v2745, %v2744
    %v2764 = vpack.c.bf16 %v2757, %v2756
    %v2765 = vpack.c.bf16 %v2723, %v2722
    %v2766 = vpack.c.bf16 %v2735, %v2734
    %v2767 = vpack.c.bf16 %v2711, %v2710
    %v2768 = vpack.c.bf16 %v2747, %v2746
    %v2769 = vpack.c.bf16 %v2759, %v2758
    %v2770 = vld [vmem:[#allocation2 + $0x208] sm:$0xf]
    %v2771 = vld [vmem:[#allocation2 + $0x20c] sm:$0xf]
    %v2772 = vld [vmem:[#allocation2 + $0x210] sm:$0xf]
    %v2773 = vld [vmem:[#allocation2 + $0x214] sm:$0xf]
    %v2774 = vld [vmem:[#allocation2 + $0x218] sm:$0xf]
    %v2775 = vld [vmem:[#allocation2 + $0x21c] sm:$0xf]
    %v2776 = vld [vmem:[#allocation2 + $0x220] sm:$0xf]
    %v2777 = vld [vmem:[#allocation2 + $0x224] sm:$0xf]
    %v2778 = vld [vmem:[#allocation2 + $0x228] sm:$0xf]
    %v2779 = vld [vmem:[#allocation2 + $0x22c] sm:$0xf]
    %v2780 = vld [vmem:[#allocation2 + $0x230] sm:$0xf]
    %v2781 = vld [vmem:[#allocation2 + $0x234] sm:$0xf]
    %v2782 = vld [vmem:[#allocation2 + $0x238] sm:$0xf]
    %v2783 = vld [vmem:[#allocation2 + $0x23c] sm:$0xf]
    %v2784 = vld [vmem:[#allocation2 + $0x240] sm:$0xf]
    %v2785 = vld [vmem:[#allocation2 + $0x244] sm:$0xf]
    %v2786 = vld [vmem:[#allocation2 + $0x248] sm:$0xf]
    %v2787 = vld [vmem:[#allocation2 + $0x24c] sm:$0xf]
    %v2788 = vld [vmem:[#allocation2 + $0x250] sm:$0xf]
    %v2789 = vld [vmem:[#allocation2 + $0x254] sm:$0xf]
    %v2790 = vld [vmem:[#allocation2 + $0x258] sm:$0xf]
    %v2791 = vld [vmem:[#allocation2 + $0x25c] sm:$0xf]
    %v2792 = vld [vmem:[#allocation2 + $0x260] sm:$0xf]
    %v2793 = vld [vmem:[#allocation2 + $0x264] sm:$0xf]
    %v2794 = vld [vmem:[#allocation2 + $0x268] sm:$0xf]
    %v2795 = vld [vmem:[#allocation2 + $0x26c] sm:$0xf]
    %v2796 = vld [vmem:[#allocation2 + $0x270] sm:$0xf]
    %v2797 = vld [vmem:[#allocation2 + $0x274] sm:$0xf]
    %v2798 = vld [vmem:[#allocation2 + $0x278] sm:$0xf]
    %v2799 = vld [vmem:[#allocation2 + $0x27c] sm:$0xf]
    %v2800 = vld [vmem:[#allocation2 + $0x280] sm:$0xf]
    %v2801 = vld [vmem:[#allocation2 + $0x284] sm:$0xf]
    %v2802 = vld [vmem:[#allocation2 + $0x288] sm:$0xf]
    %v2803 = vld [vmem:[#allocation2 + $0x28c] sm:$0xf]
    %v2804 = vld [vmem:[#allocation2 + $0x290] sm:$0xf]
    %v2805 = vld [vmem:[#allocation2 + $0x294] sm:$0xf]
    %v2806 = vld [vmem:[#allocation2 + $0x298] sm:$0xf]
    %v2807 = vld [vmem:[#allocation2 + $0x29c] sm:$0xf]
    %v2808 = vld [vmem:[#allocation2 + $0x2a0] sm:$0xf]
    %v2809 = vld [vmem:[#allocation2 + $0x2a4] sm:$0xf]
    %v2810 = vld [vmem:[#allocation2 + $0x2a8] sm:$0xf]
    %v2811 = vld [vmem:[#allocation2 + $0x2ac] sm:$0xf]
    %v2812 = vld [vmem:[#allocation2 + $0x2b0] sm:$0xf]
    %v2813 = vld [vmem:[#allocation2 + $0x2b4] sm:$0xf]
    %v2814 = vld [vmem:[#allocation2 + $0x2b8] sm:$0xf]
    %v2815 = vld [vmem:[#allocation2 + $0x2bc] sm:$0xf]
    %v2816 = vld [vmem:[#allocation2 + $0x2c0] sm:$0xf]
    %v2817 = vld [vmem:[#allocation2 + $0x2c4] sm:$0xf]
    %v2818 = vld [vmem:[#allocation2 + $0x2c8] sm:$0xf]
    %v2819 = vld [vmem:[#allocation2 + $0x2cc] sm:$0xf]
    %v2820 = vld [vmem:[#allocation2 + $0x2d0] sm:$0xf]
    %v2821 = vld [vmem:[#allocation2 + $0x2d4] sm:$0xf]
    %v2822 = vld [vmem:[#allocation2 + $0x2d8] sm:$0xf]
    %v2823 = vld [vmem:[#allocation2 + $0x2dc] sm:$0xf]
    %v2824 = vld [vmem:[#allocation2 + $0x2e0] sm:$0xf]
    %v2825 = vld [vmem:[#allocation2 + $0x2e4] sm:$0xf]
    %v2826 = vld [vmem:[#allocation2 + $0x2e8] sm:$0xf]
    %v2827 = vld [vmem:[#allocation2 + $0x2ec] sm:$0xf]
    %v2828 = vld [vmem:[#allocation2 + $0x2f0] sm:$0xf]
    %v2829 = vld [vmem:[#allocation2 + $0x2f4] sm:$0xf]
    %v2830 = vld [vmem:[#allocation2 + $0x2f8] sm:$0xf]
    %v2831 = vld [vmem:[#allocation2 + $0x2fc] sm:$0xf]
    %v2832 = vld [vmem:[#allocation2 + $0x300] sm:$0xf]
    %v2833 = vld [vmem:[#allocation2 + $0x304] sm:$0xf]
    %v2834 = vld [vmem:[#allocation2 + $0x308] sm:$0xf]
    %v2835 = vld [vmem:[#allocation2 + $0x30c] sm:$0xf]
    %v2836 = vld [vmem:[#allocation2 + $0x310] sm:$0xf]
    %v2837 = vld [vmem:[#allocation2 + $0x314] sm:$0xf]
    %v2838 = vld [vmem:[#allocation2 + $0x318] sm:$0xf]
    %v2839 = vld [vmem:[#allocation2 + $0x31c] sm:$0xf]
    %v2840 = vld [vmem:[#allocation2 + $0x320] sm:$0xf]
    %v2841 = vld [vmem:[#allocation2 + $0x324] sm:$0xf]
    %v2842 = vld [vmem:[#allocation2 + $0x328] sm:$0xf]
    %v2843 = vld [vmem:[#allocation2 + $0x32c] sm:$0xf]
    %v2844 = vld [vmem:[#allocation2 + $0x330] sm:$0xf]
    %v2845 = vld [vmem:[#allocation2 + $0x334] sm:$0xf]
    %v2846 = vld [vmem:[#allocation2 + $0x338] sm:$0xf]
    %v2847 = vld [vmem:[#allocation2 + $0x33c] sm:$0xf]
    %v2848 = vld [vmem:[#allocation2 + $0x340] sm:$0xf]
    %v2849 = vld [vmem:[#allocation2 + $0x344] sm:$0xf]
    %v2850 = vld [vmem:[%s2 + $0xa] sm:$0x1]
    %v2851 = vlaneseq
    %v2852 = vshrl.u32 %v2851, 7
    %v2853 = vsub.s32 0, %v2852
    %v2854 = vrot.slane %v2850, %v2853
    %v2935 = vunpack.c.l.b16 %v2770
    %v2936 = vunpack.c.l.b16 %v2771
    %v2937 = vunpack.c.l.b16 %v2772
    %v2938 = vunpack.c.l.b16 %v2773
    %v2939 = vunpack.c.l.b16 %v2774
    %v2940 = vunpack.c.l.b16 %v2775
    %v2941 = vunpack.c.l.b16 %v2776
    %v2942 = vunpack.c.l.b16 %v2777
    %v2943 = vunpack.c.l.b16 %v2778
    %v2944 = vunpack.c.l.b16 %v2779
    %v2945 = vunpack.c.l.b16 %v2780
    %v2946 = vunpack.c.l.b16 %v2781
    %v2947 = vunpack.c.l.b16 %v2782
    %v2948 = vunpack.c.l.b16 %v2783
    %v2949 = vunpack.c.l.b16 %v2784
    %v2950 = vunpack.c.l.b16 %v2785
    %v2951 = vunpack.c.l.b16 %v2786
    %v2952 = vunpack.c.l.b16 %v2787
    %v2953 = vunpack.c.l.b16 %v2788
    %v2954 = vunpack.c.l.b16 %v2789
    %v2955 = vunpack.c.l.b16 %v2790
    %v2956 = vunpack.c.l.b16 %v2791
    %v2957 = vunpack.c.l.b16 %v2792
    %v2958 = vunpack.c.l.b16 %v2793
    %v2959 = vunpack.c.l.b16 %v2794
    %v2960 = vunpack.c.l.b16 %v2795
    %v2961 = vunpack.c.l.b16 %v2796
    %v2962 = vunpack.c.l.b16 %v2797
    %v2963 = vunpack.c.l.b16 %v2798
    %v2964 = vunpack.c.l.b16 %v2799
    %v2965 = vunpack.c.l.b16 %v2800
    %v2966 = vunpack.c.l.b16 %v2801
    %v2967 = vunpack.c.l.b16 %v2802
    %v2968 = vunpack.c.l.b16 %v2803
    %v2969 = vunpack.c.l.b16 %v2804
    %v2970 = vunpack.c.l.b16 %v2805
    %v2971 = vunpack.c.l.b16 %v2806
    %v2972 = vunpack.c.l.b16 %v2807
    %v2973 = vunpack.c.l.b16 %v2808
    %v2974 = vunpack.c.l.b16 %v2809
    %v2975 = vunpack.c.l.b16 %v2810
    %v2976 = vunpack.c.l.b16 %v2811
    %v2977 = vunpack.c.l.b16 %v2812
    %v2978 = vunpack.c.l.b16 %v2813
    %v2979 = vunpack.c.l.b16 %v2814
    %v2980 = vunpack.c.l.b16 %v2815
    %v2981 = vunpack.c.l.b16 %v2816
    %v2982 = vunpack.c.l.b16 %v2817
    %v2983 = vunpack.c.l.b16 %v2818
    %v2984 = vunpack.c.l.b16 %v2819
    %v2985 = vunpack.c.l.b16 %v2820
    %v2986 = vunpack.c.l.b16 %v2821
    %v2987 = vunpack.c.l.b16 %v2822
    %v2988 = vunpack.c.l.b16 %v2823
    %v2989 = vunpack.c.l.b16 %v2824
    %v2990 = vunpack.c.l.b16 %v2825
    %v2991 = vunpack.c.l.b16 %v2826
    %v2992 = vunpack.c.l.b16 %v2827
    %v2993 = vunpack.c.l.b16 %v2828
    %v2994 = vunpack.c.l.b16 %v2829
    %v2995 = vunpack.c.l.b16 %v2830
    %v2996 = vunpack.c.l.b16 %v2831
    %v2997 = vunpack.c.l.b16 %v2832
    %v2998 = vunpack.c.l.b16 %v2833
    %v2999 = vunpack.c.l.b16 %v2834
    %v3000 = vunpack.c.l.b16 %v2835
    %v3001 = vunpack.c.l.b16 %v2836
    %v3002 = vunpack.c.l.b16 %v2837
    %v3003 = vunpack.c.l.b16 %v2838
    %v3004 = vunpack.c.l.b16 %v2839
    %v3005 = vunpack.c.l.b16 %v2840
    %v3006 = vunpack.c.l.b16 %v2841
    %v3007 = vunpack.c.l.b16 %v2842
    %v3008 = vunpack.c.l.b16 %v2843
    %v3009 = vunpack.c.l.b16 %v2844
    %v3010 = vunpack.c.l.b16 %v2845
    %v3011 = vunpack.c.l.b16 %v2846
    %v3012 = vunpack.c.l.b16 %v2847
    %v3013 = vunpack.c.l.b16 %v2848
    %v3014 = vunpack.c.l.b16 %v2849
    %v3015 = vpack.c.b16 %v2936, %v2935
    %v3016 = vpack.c.b16 %v2938, %v2937
    %v3017 = vpack.c.b16 %v2940, %v2939
    %v3018 = vpack.c.b16 %v2942, %v2941
    %v3019 = vpack.c.b16 %v2944, %v2943
    %v3020 = vpack.c.b16 %v2946, %v2945
    %v3021 = vpack.c.b16 %v2948, %v2947
    %v3022 = vpack.c.b16 %v2950, %v2949
    %v3023 = vpack.c.b16 %v2952, %v2951
    %v3024 = vpack.c.b16 %v2954, %v2953
    %v3025 = vpack.c.b16 %v2956, %v2955
    %v3026 = vpack.c.b16 %v2958, %v2957
    %v3027 = vpack.c.b16 %v2960, %v2959
    %v3028 = vpack.c.b16 %v2962, %v2961
    %v3029 = vpack.c.b16 %v2964, %v2963
    %v3030 = vpack.c.b16 %v2966, %v2965
    %v3031 = vpack.c.b16 %v2968, %v2967
    %v3032 = vpack.c.b16 %v2970, %v2969
    %v3033 = vpack.c.b16 %v2972, %v2971
    %v3034 = vpack.c.b16 %v2974, %v2973
    %v3035 = vpack.c.b16 %v2976, %v2975
    %v3036 = vpack.c.b16 %v2978, %v2977
    %v3037 = vpack.c.b16 %v2980, %v2979
    %v3038 = vpack.c.b16 %v2982, %v2981
    %v3039 = vpack.c.b16 %v2984, %v2983
    %v3040 = vpack.c.b16 %v2986, %v2985
    %v3041 = vpack.c.b16 %v2988, %v2987
    %v3042 = vpack.c.b16 %v2990, %v2989
    %v3043 = vpack.c.b16 %v2992, %v2991
    %v3044 = vpack.c.b16 %v2994, %v2993
    %v3045 = vpack.c.b16 %v2996, %v2995
    %v3046 = vpack.c.b16 %v2998, %v2997
    %v3047 = vpack.c.b16 %v3000, %v2999
    %v3048 = vpack.c.b16 %v3002, %v3001
    %v3049 = vpack.c.b16 %v3004, %v3003
    %v3050 = vpack.c.b16 %v3006, %v3005
    %v3051 = vpack.c.b16 %v3008, %v3007
    %v3052 = vpack.c.b16 %v3010, %v3009
    %v3053 = vpack.c.b16 %v3012, %v3011
    %v3054 = vpack.c.b16 %v3014, %v3013
    %3095 = vmatprep.subr.bf16.mxu0 0
    %3096 = vmatpush1.bf16.msra.mxu0 %v3015
    %3097 = vmatprep.subr.bf16.mxu0 0
    %3098 = vmatpush1.bf16.msra.mxu0 %v3016
    %3099 = vmatprep.subr.bf16.mxu0 0
    %3100 = vmatpush1.bf16.msra.mxu0 %v3017
    %3101 = vmatprep.subr.bf16.mxu0 0
    %3102 = vmatpush1.bf16.msra.mxu0 %v3018
    %3103 = vmatprep.subr.bf16.mxu0 0
    %3104 = vmatpush1.bf16.msra.mxu0 %v3019
    %3105 = vmatprep.subr.bf16.mxu0 0
    %3106 = vmatpush1.bf16.msra.mxu0 %v3020
    %3107 = vmatprep.subr.bf16.mxu0 0
    %3108 = vmatpush1.bf16.msra.mxu0 %v3021
    %3109 = vmatprep.subr.bf16.mxu0 0
    %3110 = vmatpush1.bf16.msra.mxu0 %v3022
    %3111 = vmatprep.subr.bf16.mxu0 0
    %3112 = vmatpush1.bf16.msra.mxu0 %v3023
    %3113 = vmatprep.subr.bf16.mxu0 0
    %3114 = vmatpush1.bf16.msra.mxu0 %v3024
    %3115 = vmatprep.subr.bf16.mxu0 0
    %3116 = vmatpush1.bf16.msra.mxu0 %v3025
    %3117 = vmatprep.subr.bf16.mxu0 0
    %3118 = vmatpush1.bf16.msra.mxu0 %v3026
    %3119 = vmatprep.subr.bf16.mxu0 0
    %3120 = vmatpush1.bf16.msra.mxu0 %v3027
    %3121 = vmatprep.subr.bf16.mxu0 0
    %3122 = vmatpush1.bf16.msra.mxu0 %v3028
    %3123 = vmatprep.subr.bf16.mxu0 0
    %3124 = vmatpush1.bf16.msra.mxu0 %v3029
    %3125 = vmatprep.subr.bf16.mxu0 0
    %3126 = vmatpush1.bf16.msra.mxu0 %v3030
    %3127 = vmatprep.mubr.bf16.mxu0 %v2761
    %3128 = vmatmul.mubr.bf16.gmra.mrb[0].mxu0 %v2760
    %v3129 = vpop.f32.mrb[0].mxu0
    %v3130 = vadd.f32 %v2854, %v3129
    %v3131 = vpop.f32.mrb[0].mxu0
    %v3132 = vpop.f32.mrb[0].mxu0
    %v3133 = vadd.f32 %v2854, %v3132
    %v3134 = vpop.f32.mrb[0].mxu0
    %3135 = vmatprep.mubr.bf16.mxu0 %v2766
    %3136 = vmatmul.mubr.bf16.gmra.mrb[0].mxu0 %v2765
    %v3137 = vpop.f32.mrb[0].mxu0
    %v3138 = vadd.f32 %v2854, %v3137
    %v3139 = vpop.f32.mrb[0].mxu0
    %v3140 = vpop.f32.mrb[0].mxu0
    %v3141 = vadd.f32 %v2854, %v3140
    %v3142 = vpop.f32.mrb[0].mxu0
    %3143 = vdwg.mxu0
    %3144 = vmatprep.subr.bf16.mxu0 0
    %3145 = vmatpush1.bf16.msra.mxu0 %v3031
    %3146 = vmatprep.subr.bf16.mxu0 0
    %3147 = vmatpush1.bf16.msra.mxu0 %v3032
    %3148 = vmatprep.subr.bf16.mxu0 0
    %3149 = vmatpush1.bf16.msra.mxu0 %v3033
    %3150 = vmatprep.subr.bf16.mxu0 0
    %3151 = vmatpush1.bf16.msra.mxu0 %v3034
    %3152 = vmatprep.subr.bf16.mxu0 0
    %3153 = vmatpush1.bf16.msra.mxu0 %v3035
    %3154 = vmatprep.subr.bf16.mxu0 0
    %3155 = vmatpush1.bf16.msra.mxu0 %v3036
    %3156 = vmatprep.subr.bf16.mxu0 0
    %3157 = vmatpush1.bf16.msra.mxu0 %v3037
    %3158 = vmatprep.subr.bf16.mxu0 0
    %3159 = vmatpush1.bf16.msra.mxu0 %v3038
    %3160 = vmatprep.subr.bf16.mxu0 0
    %3161 = vmatpush1.bf16.msra.mxu0 %v3039
    %3162 = vmatprep.subr.bf16.mxu0 0
    %3163 = vmatpush1.bf16.msra.mxu0 %v3040
    %3164 = vmatprep.subr.bf16.mxu0 0
    %3165 = vmatpush1.bf16.msra.mxu0 %v3041
    %3166 = vmatprep.subr.bf16.mxu0 0
    %3167 = vmatpush1.bf16.msra.mxu0 %v3042
    %3168 = vmatprep.subr.bf16.mxu0 0
    %3169 = vmatpush1.bf16.msra.mxu0 %v3043
    %3170 = vmatprep.subr.bf16.mxu0 0
    %3171 = vmatpush1.bf16.msra.mxu0 %v3044
    %3172 = vmatprep.subr.bf16.mxu0 0
    %3173 = vmatpush1.bf16.msra.mxu0 %v3045
    %3174 = vmatprep.subr.bf16.mxu0 0
    %3175 = vmatpush1.bf16.msra.mxu0 %v3046
    %3176 = vmatprep.mubr.bf16.mxu0 %v2763
    %3177 = vmatmul.mubr.bf16.gmra.mrb[0].mxu0 %v2762
    %v3178 = vpop.f32.mrb[0].mxu0
    %v3179 = vadd.f32 %v3130, %v3178
    %v3180 = vpop.f32.mrb[0].mxu0
    %v3181 = vpop.f32.mrb[0].mxu0
    %v3182 = vadd.f32 %v3133, %v3181
    %v3183 = vpop.f32.mrb[0].mxu0
    %3184 = vmatprep.mubr.bf16.mxu0 %v2768
    %3185 = vmatmul.mubr.bf16.gmra.mrb[0].mxu0 %v2767
    %v3186 = vpop.f32.mrb[0].mxu0
    %v3187 = vadd.f32 %v3138, %v3186
    %v3188 = vpop.f32.mrb[0].mxu0
    %v3189 = vpop.f32.mrb[0].mxu0
    %v3190 = vadd.f32 %v3141, %v3189
    %v3191 = vpop.f32.mrb[0].mxu0
    %3192 = vdwg.mxu0
    %3193 = vmatprep.subr.bf16.mxu0 0
    %3194 = vmatpush1.bf16.msra.mxu0 %v3047
    %3195 = vmatprep.subr.bf16.mxu0 0
    %3196 = vmatpush1.bf16.msra.mxu0 %v3048
    %3197 = vmatprep.subr.bf16.mxu0 0
    %3198 = vmatpush1.bf16.msra.mxu0 %v3049
    %3199 = vmatprep.subr.bf16.mxu0 0
    %3200 = vmatpush1.bf16.msra.mxu0 %v3050
    %3201 = vmatprep.subr.bf16.mxu0 0
    %3202 = vmatpush1.bf16.msra.mxu0 %v3051
    %3203 = vmatprep.subr.bf16.mxu0 0
    %3204 = vmatpush1.bf16.msra.mxu0 %v3052
    %3205 = vmatprep.subr.bf16.mxu0 0
    %3206 = vmatpush1.bf16.msra.mxu0 %v3053
    %3207 = vmatprep.subr.bf16.mxu0 0
    %3208 = vmatpush1.bf16.msra.mxu0 %v3054
    %3209 = vmatprep.subr.bf16.mxu0 0
    %3210 = vmatpush1.bf16.msra.mxu0 0
    %3211 = vmatprep.subr.bf16.mxu0 0
    %3212 = vmatpush1.bf16.msra.mxu0 0
    %3213 = vmatprep.subr.bf16.mxu0 0
    %3214 = vmatpush1.bf16.msra.mxu0 0
    %3215 = vmatprep.subr.bf16.mxu0 0
    %3216 = vmatpush1.bf16.msra.mxu0 0
    %3217 = vmatprep.subr.bf16.mxu0 0
    %3218 = vmatpush1.bf16.msra.mxu0 0
    %3219 = vmatprep.subr.bf16.mxu0 0
    %3220 = vmatpush1.bf16.msra.mxu0 0
    %3221 = vmatprep.subr.bf16.mxu0 0
    %3222 = vmatpush1.bf16.msra.mxu0 0
    %3223 = vmatprep.subr.bf16.mxu0 0
    %3224 = vmatpush1.bf16.msra.mxu0 0
    %3225 = vmatprep.mubr.bf16.mxu0 0
    %3226 = vmatmul.mubr.bf16.gmra.mrb[0].mxu0 %v2764
    %v3227 = vpop.f32.mrb[0].mxu0
    %v3228 = vadd.f32 %v3179, %v3227
    %v3229 = vpop.f32.mrb[0].mxu0
    %v3230 = vpop.f32.mrb[0].mxu0
    %v3231 = vadd.f32 %v3182, %v3230
    %v3232 = vpop.f32.mrb[0].mxu0
    %3233 = vmatprep.mubr.bf16.mxu0 0
    %3234 = vmatmul.mubr.bf16.gmra.mrb[0].mxu0 %v2769
    %v3235 = vpop.f32.mrb[0].mxu0
    %v3236 = vadd.f32 %v3187, %v3235
    %v3237 = vpop.f32.mrb[0].mxu0
    %v3238 = vpop.f32.mrb[0].mxu0
    %v3239 = vadd.f32 %v3190, %v3238
    %v3240 = vpop.f32.mrb[0].mxu0
    %3241 = vdwg.mxu0
    %vm3242 = vcmp.gt.f32.partialorder %v3228, 0.0
    %vm3243 = vcmp.gt.f32.partialorder %v3231, 0.0
    %vm3244 = vcmp.gt.f32.partialorder %v3236, 0.0
    %vm3245 = vcmp.gt.f32.partialorder %v3239, 0.0
    %v3246 = vmul.f32 %v3228, 0.01
    %v3247 = vmul.f32 %v3231, 0.01
    %v3248 = vmul.f32 %v3236, 0.01
    %v3249 = vmul.f32 %v3239, 0.01
    %v3250 = vsel %vm3242, %v3228, %v3246
    %v3251 = vsel %vm3243, %v3231, %v3247
    %v3252 = vsel %vm3244, %v3236, %v3248
    %v3253 = vsel %vm3245, %v3239, %v3249
    %v3254 = vrot.slane %v3250, 7
    %v3255 = vrot.slane %v3251, 7
    %v3256 = vrot.slane %v3252, 7
    %v3257 = vrot.slane %v3253, 7
    %v3258 = vsel %vm115, %v3256, %v3257
    %v3259 = vsel %vm115, %v3255, %v3256
    %v3260 = vsel %vm115, %v3254, %v3255
    %v3261 = vsel %vm115, %v3257, %v3254
    %v3262 = vsel %vm128, %v3261, 0.0
    %v3263 = vsel %vm129, %v3260, 0.0
    %v3264 = vsel %vm130, %v3259, 0.0
    %v3265 = vsel %vm131, %v3258, 0.0
    %v3266 = vrot.slane %v3250, 1
    %v3267 = vrot.slane %v3251, 1
    %v3268 = vrot.slane %v3252, 1
    %v3269 = vrot.slane %v3253, 1
    %v3270 = vsel %vm1977, %v3268, %v3269
    %v3271 = vsel %vm1977, %v3267, %v3268
    %v3272 = vsel %vm1977, %v3266, %v3267
    %v3273 = vsel %vm1977, %v3269, %v3266
    %v3274 = vsel %vm1990, %v3272, 0.0
    %v3275 = vsel %vm1991, %v3271, 0.0
    %v3276 = vsel %vm1992, %v3270, 0.0
    %v3277 = vsel %vm1993, %v3273, 0.0
    %v3278 = vpack.c.bf16 %v3263, %v3262
    %v3279 = vpack.c.bf16 %v3251, %v3250
    %v3280 = vpack.c.bf16 %v3275, %v3274
    %v3281 = vpack.c.bf16 %v3265, %v3264
    %v3282 = vpack.c.bf16 %v3253, %v3252
    %v3283 = vpack.c.bf16 %v3277, %v3276
    %v3284 = vld [vmem:[#allocation2 + $0x348] sm:$0xf]
    %v3285 = vld [vmem:[#allocation2 + $0x34c] sm:$0xf]
    %v3286 = vld [vmem:[#allocation2 + $0x350] sm:$0xf]
    %v3287 = vld [vmem:[#allocation2 + $0x354] sm:$0xf]
    %v3288 = vld [vmem:[#allocation2 + $0x358] sm:$0xf]
    %v3289 = vld [vmem:[#allocation2 + $0x35c] sm:$0xf]
    %v3290 = vld [vmem:[#allocation2 + $0x360] sm:$0xf]
    %v3291 = vld [vmem:[#allocation2 + $0x364] sm:$0xf]
    %v3292 = vld [vmem:[#allocation2 + $0x368] sm:$0xf]
    %v3293 = vld [vmem:[#allocation2 + $0x36c] sm:$0xf]
    %v3294 = vld [vmem:[#allocation2 + $0x370] sm:$0xf]
    %v3295 = vld [vmem:[#allocation2 + $0x374] sm:$0xf]
    %v3296 = vld [vmem:[#allocation2 + $0x378] sm:$0xf]
    %v3297 = vld [vmem:[#allocation2 + $0x37c] sm:$0xf]
    %v3298 = vld [vmem:[#allocation2 + $0x380] sm:$0xf]
    %v3299 = vld [vmem:[#allocation2 + $0x384] sm:$0xf]
    %v3300 = vld [vmem:[#allocation2 + $0x388] sm:$0xf]
    %v3301 = vld [vmem:[#allocation2 + $0x38c] sm:$0xf]
    %v3302 = vld [vmem:[#allocation2 + $0x390] sm:$0xf]
    %v3303 = vld [vmem:[#allocation2 + $0x394] sm:$0xf]
    %v3304 = vld [vmem:[#allocation2 + $0x398] sm:$0xf]
    %v3305 = vld [vmem:[#allocation2 + $0x39c] sm:$0xf]
    %v3306 = vld [vmem:[#allocation2 + $0x3a0] sm:$0xf]
    %v3307 = vld [vmem:[#allocation2 + $0x3a4] sm:$0xf]
    %v3308 = vld [vmem:[#allocation2 + $0x3a8] sm:$0xf]
    %v3309 = vld [vmem:[#allocation2 + $0x3ac] sm:$0xf]
    %v3310 = vld [vmem:[#allocation2 + $0x3b0] sm:$0xf]
    %v3311 = vld [vmem:[#allocation2 + $0x3b4] sm:$0xf]
    %v3312 = vld [vmem:[#allocation2 + $0x3b8] sm:$0xf]
    %v3313 = vld [vmem:[#allocation2 + $0x3bc] sm:$0xf]
    %v3314 = vld [vmem:[#allocation2 + $0x3c0] sm:$0xf]
    %v3315 = vld [vmem:[#allocation2 + $0x3c4] sm:$0xf]
    %v3316 = vld [vmem:[#allocation2 + $0x3c8] sm:$0xf]
    %v3317 = vld [vmem:[#allocation2 + $0x3cc] sm:$0xf]
    %v3318 = vld [vmem:[#allocation2 + $0x3d0] sm:$0xf]
    %v3319 = vld [vmem:[#allocation2 + $0x3d4] sm:$0xf]
    %v3320 = vld [vmem:[#allocation2 + $0x3d8] sm:$0xf]
    %v3321 = vld [vmem:[#allocation2 + $0x3dc] sm:$0xf]
    %v3322 = vld [vmem:[#allocation2 + $0x3e0] sm:$0xf]
    %v3323 = vld [vmem:[#allocation2 + $0x3e4] sm:$0xf]
    %v3324 = vld [vmem:[#allocation2 + $0x3e8] sm:$0xf]
    %v3325 = vld [vmem:[#allocation2 + $0x3ec] sm:$0xf]
    %v3326 = vld [vmem:[#allocation2 + $0x3f0] sm:$0xf]
    %v3327 = vld [vmem:[#allocation2 + $0x3f4] sm:$0xf]
    %v3328 = vld [vmem:[#allocation2 + $0x3f8] sm:$0xf]
    %v3329 = vld [vmem:[#allocation2 + $0x3fc] sm:$0xf]
    %v3330 = vld [vmem:[#allocation2 + $0x400] sm:$0xf]
    %v3331 = vld [vmem:[#allocation2 + $0x404] sm:$0xf]
    %v3332 = vld [vmem:[%s2 + $0xb] sm:$0x1]
    %v3333 = vlaneseq
    %v3334 = vshrl.u32 %v3333, 7
    %v3335 = vsub.s32 0, %v3334
    %v3336 = vrot.slane %v3332, %v3335
    %v3385 = vunpack.c.l.b16 %v3284
    %v3386 = vunpack.c.l.b16 %v3285
    %v3387 = vunpack.c.l.b16 %v3286
    %v3388 = vunpack.c.l.b16 %v3287
    %v3389 = vunpack.c.l.b16 %v3288
    %v3390 = vunpack.c.l.b16 %v3289
    %v3391 = vunpack.c.l.b16 %v3290
    %v3392 = vunpack.c.l.b16 %v3291
    %v3393 = vunpack.c.l.b16 %v3292
    %v3394 = vunpack.c.l.b16 %v3293
    %v3395 = vunpack.c.l.b16 %v3294
    %v3396 = vunpack.c.l.b16 %v3295
    %v3397 = vunpack.c.l.b16 %v3296
    %v3398 = vunpack.c.l.b16 %v3297
    %v3399 = vunpack.c.l.b16 %v3298
    %v3400 = vunpack.c.l.b16 %v3299
    %v3401 = vunpack.c.l.b16 %v3300
    %v3402 = vunpack.c.l.b16 %v3301
    %v3403 = vunpack.c.l.b16 %v3302
    %v3404 = vunpack.c.l.b16 %v3303
    %v3405 = vunpack.c.l.b16 %v3304
    %v3406 = vunpack.c.l.b16 %v3305
    %v3407 = vunpack.c.l.b16 %v3306
    %v3408 = vunpack.c.l.b16 %v3307
    %v3409 = vunpack.c.l.b16 %v3308
    %v3410 = vunpack.c.l.b16 %v3309
    %v3411 = vunpack.c.l.b16 %v3310
    %v3412 = vunpack.c.l.b16 %v3311
    %v3413 = vunpack.c.l.b16 %v3312
    %v3414 = vunpack.c.l.b16 %v3313
    %v3415 = vunpack.c.l.b16 %v3314
    %v3416 = vunpack.c.l.b16 %v3315
    %v3417 = vunpack.c.l.b16 %v3316
    %v3418 = vunpack.c.l.b16 %v3317
    %v3419 = vunpack.c.l.b16 %v3318
    %v3420 = vunpack.c.l.b16 %v3319
    %v3421 = vunpack.c.l.b16 %v3320
    %v3422 = vunpack.c.l.b16 %v3321
    %v3423 = vunpack.c.l.b16 %v3322
    %v3424 = vunpack.c.l.b16 %v3323
    %v3425 = vunpack.c.l.b16 %v3324
    %v3426 = vunpack.c.l.b16 %v3325
    %v3427 = vunpack.c.l.b16 %v3326
    %v3428 = vunpack.c.l.b16 %v3327
    %v3429 = vunpack.c.l.b16 %v3328
    %v3430 = vunpack.c.l.b16 %v3329
    %v3431 = vunpack.c.l.b16 %v3330
    %v3432 = vunpack.c.l.b16 %v3331
    %v3433 = vpack.c.b16 %v3386, %v3385
    %v3434 = vpack.c.b16 %v3388, %v3387
    %v3435 = vpack.c.b16 %v3390, %v3389
    %v3436 = vpack.c.b16 %v3392, %v3391
    %v3437 = vpack.c.b16 %v3394, %v3393
    %v3438 = vpack.c.b16 %v3396, %v3395
    %v3439 = vpack.c.b16 %v3398, %v3397
    %v3440 = vpack.c.b16 %v3400, %v3399
    %v3441 = vpack.c.b16 %v3402, %v3401
    %v3442 = vpack.c.b16 %v3404, %v3403
    %v3443 = vpack.c.b16 %v3406, %v3405
    %v3444 = vpack.c.b16 %v3408, %v3407
    %v3445 = vpack.c.b16 %v3410, %v3409
    %v3446 = vpack.c.b16 %v3412, %v3411
    %v3447 = vpack.c.b16 %v3414, %v3413
    %v3448 = vpack.c.b16 %v3416, %v3415
    %v3449 = vpack.c.b16 %v3418, %v3417
    %v3450 = vpack.c.b16 %v3420, %v3419
    %v3451 = vpack.c.b16 %v3422, %v3421
    %v3452 = vpack.c.b16 %v3424, %v3423
    %v3453 = vpack.c.b16 %v3426, %v3425
    %v3454 = vpack.c.b16 %v3428, %v3427
    %v3455 = vpack.c.b16 %v3430, %v3429
    %v3456 = vpack.c.b16 %v3432, %v3431
    %3481 = vmatprep.subr.bf16.mxu0 0
    %3482 = vmatpush1.bf16.msra.mxu0 %v3433
    %3483 = vmatprep.subr.bf16.mxu0 0
    %3484 = vmatpush1.bf16.msra.mxu0 %v3434
    %3485 = vmatprep.subr.bf16.mxu0 0
    %3486 = vmatpush1.bf16.msra.mxu0 %v3435
    %3487 = vmatprep.subr.bf16.mxu0 0
    %3488 = vmatpush1.bf16.msra.mxu0 %v3436
    %3489 = vmatprep.subr.bf16.mxu0 0
    %3490 = vmatpush1.bf16.msra.mxu0 %v3437
    %3491 = vmatprep.subr.bf16.mxu0 0
    %3492 = vmatpush1.bf16.msra.mxu0 %v3438
    %3493 = vmatprep.subr.bf16.mxu0 0
    %3494 = vmatpush1.bf16.msra.mxu0 %v3439
    %3495 = vmatprep.subr.bf16.mxu0 0
    %3496 = vmatpush1.bf16.msra.mxu0 %v3440
    %3497 = vmatprep.subr.bf16.mxu0 0
    %3498 = vmatpush1.bf16.msra.mxu0 %v3441
    %3499 = vmatprep.subr.bf16.mxu0 0
    %3500 = vmatpush1.bf16.msra.mxu0 %v3442
    %3501 = vmatprep.subr.bf16.mxu0 0
    %3502 = vmatpush1.bf16.msra.mxu0 %v3443
    %3503 = vmatprep.subr.bf16.mxu0 0
    %3504 = vmatpush1.bf16.msra.mxu0 %v3444
    %3505 = vmatprep.subr.bf16.mxu0 0
    %3506 = vmatpush1.bf16.msra.mxu0 %v3445
    %3507 = vmatprep.subr.bf16.mxu0 0
    %3508 = vmatpush1.bf16.msra.mxu0 %v3446
    %3509 = vmatprep.subr.bf16.mxu0 0
    %3510 = vmatpush1.bf16.msra.mxu0 %v3447
    %3511 = vmatprep.subr.bf16.mxu0 0
    %3512 = vmatpush1.bf16.msra.mxu0 %v3448
    %3513 = vmatprep.mubr.bf16.mxu0 %v3279
    %3514 = vmatmul.mubr.bf16.gmra.mrb[0].mxu0 %v3278
    %v3515 = vpop.f32.mrb[0].mxu0
    %v3516 = vadd.f32 %v3336, %v3515
    %v3517 = vpop.f32.mrb[0].mxu0
    %v3518 = vpop.f32.mrb[0].mxu0
    %v3519 = vadd.f32 %v3336, %v3518
    %v3520 = vpop.f32.mrb[0].mxu0
    %3521 = vmatprep.mubr.bf16.mxu0 %v3282
    %3522 = vmatmul.mubr.bf16.gmra.mrb[0].mxu0 %v3281
    %v3523 = vpop.f32.mrb[0].mxu0
    %v3524 = vadd.f32 %v3336, %v3523
    %v3525 = vpop.f32.mrb[0].mxu0
    %v3526 = vpop.f32.mrb[0].mxu0
    %v3527 = vadd.f32 %v3336, %v3526
    %v3528 = vpop.f32.mrb[0].mxu0
    %3529 = vdwg.mxu0
    %3530 = vmatprep.subr.bf16.mxu0 0
    %3531 = vmatpush1.bf16.msra.mxu0 %v3449
    %3532 = vmatprep.subr.bf16.mxu0 0
    %3533 = vmatpush1.bf16.msra.mxu0 %v3450
    %3534 = vmatprep.subr.bf16.mxu0 0
    %3535 = vmatpush1.bf16.msra.mxu0 %v3451
    %3536 = vmatprep.subr.bf16.mxu0 0
    %3537 = vmatpush1.bf16.msra.mxu0 %v3452
    %3538 = vmatprep.subr.bf16.mxu0 0
    %3539 = vmatpush1.bf16.msra.mxu0 %v3453
    %3540 = vmatprep.subr.bf16.mxu0 0
    %3541 = vmatpush1.bf16.msra.mxu0 %v3454
    %3542 = vmatprep.subr.bf16.mxu0 0
    %3543 = vmatpush1.bf16.msra.mxu0 %v3455
    %3544 = vmatprep.subr.bf16.mxu0 0
    %3545 = vmatpush1.bf16.msra.mxu0 %v3456
    %3546 = vmatprep.subr.bf16.mxu0 0
    %3547 = vmatpush1.bf16.msra.mxu0 0
    %3548 = vmatprep.subr.bf16.mxu0 0
    %3549 = vmatpush1.bf16.msra.mxu0 0
    %3550 = vmatprep.subr.bf16.mxu0 0
    %3551 = vmatpush1.bf16.msra.mxu0 0
    %3552 = vmatprep.subr.bf16.mxu0 0
    %3553 = vmatpush1.bf16.msra.mxu0 0
    %3554 = vmatprep.subr.bf16.mxu0 0
    %3555 = vmatpush1.bf16.msra.mxu0 0
    %3556 = vmatprep.subr.bf16.mxu0 0
    %3557 = vmatpush1.bf16.msra.mxu0 0
    %3558 = vmatprep.subr.bf16.mxu0 0
    %3559 = vmatpush1.bf16.msra.mxu0 0
    %3560 = vmatprep.subr.bf16.mxu0 0
    %3561 = vmatpush1.bf16.msra.mxu0 0
    %3562 = vmatprep.mubr.bf16.mxu0 0
    %3563 = vmatmul.mubr.bf16.gmra.mrb[0].mxu0 %v3280
    %v3564 = vpop.f32.mrb[0].mxu0
    %v3565 = vadd.f32 %v3516, %v3564
    %v3566 = vpop.f32.mrb[0].mxu0
    %v3567 = vpop.f32.mrb[0].mxu0
    %v3568 = vadd.f32 %v3519, %v3567
    %v3569 = vpop.f32.mrb[0].mxu0
    %3570 = vmatprep.mubr.bf16.mxu0 0
    %3571 = vmatmul.mubr.bf16.gmra.mrb[0].mxu0 %v3283
    %v3572 = vpop.f32.mrb[0].mxu0
    %v3573 = vadd.f32 %v3524, %v3572
    %v3574 = vpop.f32.mrb[0].mxu0
    %v3575 = vpop.f32.mrb[0].mxu0
    %v3576 = vadd.f32 %v3527, %v3575
    %v3577 = vpop.f32.mrb[0].mxu0
    %3578 = vdwg.mxu0
    %vm3579 = vcmp.gt.f32.partialorder %v3565, 0.0
    %vm3580 = vcmp.gt.f32.partialorder %v3568, 0.0
    %vm3581 = vcmp.gt.f32.partialorder %v3573, 0.0
    %vm3582 = vcmp.gt.f32.partialorder %v3576, 0.0
    %v3583 = vmul.f32 %v3565, 0.01
    %v3584 = vmul.f32 %v3568, 0.01
    %v3585 = vmul.f32 %v3573, 0.01
    %v3586 = vmul.f32 %v3576, 0.01
    %v3587 = vsel %vm3579, %v3565, %v3583
    %v3588 = vsel %vm3580, %v3568, %v3584
    %v3589 = vsel %vm3581, %v3573, %v3585
    %v3590 = vsel %vm3582, %v3576, %v3586
    %v3591 = vpack.c.bf16 %v3588, %v3587
    %v3592 = vpack.c.bf16 %v3590, %v3589
    %v3593 = vld [vmem:[#allocation2 + $0x408] sm:$0xf]
    %v3594 = vld [vmem:[#allocation2 + $0x40c] sm:$0xf]
    %v3595 = vld [vmem:[#allocation2 + $0x410] sm:$0xf]
    %v3596 = vld [vmem:[#allocation2 + $0x414] sm:$0xf]
    %v3597 = vld [vmem:[#allocation2 + $0x418] sm:$0xf]
    %v3598 = vld [vmem:[#allocation2 + $0x41c] sm:$0xf]
    %v3599 = vld [vmem:[#allocation2 + $0x420] sm:$0xf]
    %v3600 = vld [vmem:[#allocation2 + $0x424] sm:$0xf]
    %v3601 = vld [vmem:[#allocation2 + $0x428] sm:$0xf]
    %v3602 = vld [vmem:[#allocation2 + $0x42c] sm:$0xf]
    %v3603 = vld [vmem:[#allocation2 + $0x430] sm:$0xf]
    %v3604 = vld [vmem:[#allocation2 + $0x434] sm:$0xf]
    %v3605 = vld [vmem:[#allocation2 + $0x438] sm:$0xf]
    %v3606 = vld [vmem:[#allocation2 + $0x43c] sm:$0xf]
    %v3607 = vld [vmem:[#allocation2 + $0x440] sm:$0xf]
    %v3608 = vld [vmem:[#allocation2 + $0x444] sm:$0xf]
    %v3609 = vld [vmem:[%s2 + $0xc] sm:$0x1]
    %v3610 = vlaneseq
    %v3611 = vshrl.u32 %v3610, 7
    %v3612 = vsub.s32 0, %v3611
    %v3613 = vrot.slane %v3609, %v3612
    %v3630 = vunpack.c.l.b16 %v3593
    %v3631 = vunpack.c.l.b16 %v3594
    %v3632 = vunpack.c.l.b16 %v3595
    %v3633 = vunpack.c.l.b16 %v3596
    %v3634 = vunpack.c.l.b16 %v3597
    %v3635 = vunpack.c.l.b16 %v3598
    %v3636 = vunpack.c.l.b16 %v3599
    %v3637 = vunpack.c.l.b16 %v3600
    %v3638 = vunpack.c.l.b16 %v3601
    %v3639 = vunpack.c.l.b16 %v3602
    %v3640 = vunpack.c.l.b16 %v3603
    %v3641 = vunpack.c.l.b16 %v3604
    %v3642 = vunpack.c.l.b16 %v3605
    %v3643 = vunpack.c.l.b16 %v3606
    %v3644 = vunpack.c.l.b16 %v3607
    %v3645 = vunpack.c.l.b16 %v3608
    %v3646 = vpack.c.b16 %v3631, %v3630
    %v3647 = vpack.c.b16 %v3633, %v3632
    %v3648 = vpack.c.b16 %v3635, %v3634
    %v3649 = vpack.c.b16 %v3637, %v3636
    %v3650 = vpack.c.b16 %v3639, %v3638
    %v3651 = vpack.c.b16 %v3641, %v3640
    %v3652 = vpack.c.b16 %v3643, %v3642
    %v3653 = vpack.c.b16 %v3645, %v3644
    %3662 = vmatprep.subr.bf16.mxu0 0
    %3663 = vmatpush1.bf16.msra.mxu0 %v3646
    %3664 = vmatprep.subr.bf16.mxu0 0
    %3665 = vmatpush1.bf16.msra.mxu0 %v3647
    %3666 = vmatprep.subr.bf16.mxu0 0
    %3667 = vmatpush1.bf16.msra.mxu0 %v3648
    %3668 = vmatprep.subr.bf16.mxu0 0
    %3669 = vmatpush1.bf16.msra.mxu0 %v3649
    %3670 = vmatprep.subr.bf16.mxu0 0
    %3671 = vmatpush1.bf16.msra.mxu0 %v3650
    %3672 = vmatprep.subr.bf16.mxu0 0
    %3673 = vmatpush1.bf16.msra.mxu0 %v3651
    %3674 = vmatprep.subr.bf16.mxu0 0
    %3675 = vmatpush1.bf16.msra.mxu0 %v3652
    %3676 = vmatprep.subr.bf16.mxu0 0
    %3677 = vmatpush1.bf16.msra.mxu0 %v3653
    %3678 = vmatprep.subr.bf16.mxu0 0
    %3679 = vmatpush1.bf16.msra.mxu0 0
    %3680 = vmatprep.subr.bf16.mxu0 0
    %3681 = vmatpush1.bf16.msra.mxu0 0
    %3682 = vmatprep.subr.bf16.mxu0 0
    %3683 = vmatpush1.bf16.msra.mxu0 0
    %3684 = vmatprep.subr.bf16.mxu0 0
    %3685 = vmatpush1.bf16.msra.mxu0 0
    %3686 = vmatprep.subr.bf16.mxu0 0
    %3687 = vmatpush1.bf16.msra.mxu0 0
    %3688 = vmatprep.subr.bf16.mxu0 0
    %3689 = vmatpush1.bf16.msra.mxu0 0
    %3690 = vmatprep.subr.bf16.mxu0 0
    %3691 = vmatpush1.bf16.msra.mxu0 0
    %3692 = vmatprep.subr.bf16.mxu0 0
    %3693 = vmatpush1.bf16.msra.mxu0 0
    %3694 = vmatprep.mubr.bf16.mxu0 0
    %3695 = vmatmul.mubr.bf16.gmra.mrb[0].mxu0 %v3591
    %v3696 = vpop.f32.mrb[0].mxu0
    %v3697 = vadd.f32 %v3613, %v3696
    %v3698 = vpop.f32.mrb[0].mxu0
    %v3699 = vpop.f32.mrb[0].mxu0
    %v3700 = vadd.f32 %v3613, %v3699
    %v3701 = vpop.f32.mrb[0].mxu0
    %3702 = vmatprep.mubr.bf16.mxu0 0
    %3703 = vmatmul.mubr.bf16.gmra.mrb[0].mxu0 %v3592
    %v3704 = vpop.f32.mrb[0].mxu0
    %v3705 = vadd.f32 %v3613, %v3704
    %v3706 = vpop.f32.mrb[0].mxu0
    %v3707 = vpop.f32.mrb[0].mxu0
    %v3708 = vadd.f32 %v3613, %v3707
    %v3709 = vpop.f32.mrb[0].mxu0
    %3710 = vdwg.mxu0
    %vm3711 = vcmp.gt.f32.partialorder %v3697, 0.0
    %vm3712 = vcmp.gt.f32.partialorder %v3700, 0.0
    %vm3713 = vcmp.gt.f32.partialorder %v3705, 0.0
    %vm3714 = vcmp.gt.f32.partialorder %v3708, 0.0
    %v3715 = vmul.f32 %v3697, 0.01
    %v3716 = vmul.f32 %v3700, 0.01
    %v3717 = vmul.f32 %v3705, 0.01
    %v3718 = vmul.f32 %v3708, 0.01
    %v3719 = vsel %vm3711, %v3697, %v3715
    %v3720 = vsel %vm3712, %v3700, %v3716
    %v3721 = vsel %vm3713, %v3705, %v3717
    %v3722 = vsel %vm3714, %v3708, %v3718
    %v3723 = vpack.c.bf16 %v3720, %v3719
    %v3724 = vpack.c.bf16 %v3722, %v3721
    %v3725 = vld [vmem:[#allocation2 + $0x448] sm:$0xf]
    %v3726 = vld [vmem:[#allocation2 + $0x44c] sm:$0xf]
    %v3727 = vld [vmem:[#allocation2 + $0x450] sm:$0xf]
    %v3728 = vld [vmem:[#allocation2 + $0x454] sm:$0xf]
    %v3729 = vld [vmem:[#allocation2 + $0x458] sm:$0xf]
    %v3730 = vld [vmem:[#allocation2 + $0x45c] sm:$0xf]
    %v3731 = vld [vmem:[#allocation2 + $0x460] sm:$0xf]
    %v3732 = vld [vmem:[#allocation2 + $0x464] sm:$0xf]
    %v3733 = vld [vmem:[%s2 + $0xd] sm:$0x1]
    %v3734 = vlaneseq
    %v3735 = vshrl.u32 %v3734, 7
    %v3736 = vsub.s32 0, %v3735
    %v3737 = vrot.slane %v3733, %v3736
    %v3746 = vunpack.c.l.b16 %v3725
    %v3747 = vunpack.c.l.b16 %v3726
    %v3748 = vunpack.c.l.b16 %v3727
    %v3749 = vunpack.c.l.b16 %v3728
    %v3750 = vunpack.c.l.b16 %v3729
    %v3751 = vunpack.c.l.b16 %v3730
    %v3752 = vunpack.c.l.b16 %v3731
    %v3753 = vunpack.c.l.b16 %v3732
    %v3754 = vpack.c.b16 %v3747, %v3746
    %v3755 = vpack.c.b16 %v3749, %v3748
    %v3756 = vpack.c.b16 %v3751, %v3750
    %v3757 = vpack.c.b16 %v3753, %v3752
    %v3763 = vsel %vm1569, %v3723, 0
    %v3766 = vsel %vm1569, %v3724, 0
    %3768 = vmatprep.subr.bf16.mxu0 0
    %3769 = vmatpush1.bf16.msra.mxu0 %v3754
    %3770 = vmatprep.subr.bf16.mxu0 0
    %3771 = vmatpush1.bf16.msra.mxu0 %v3755
    %3772 = vmatprep.subr.bf16.mxu0 0
    %3773 = vmatpush1.bf16.msra.mxu0 %v3756
    %3774 = vmatprep.subr.bf16.mxu0 0
    %3775 = vmatpush1.bf16.msra.mxu0 %v3757
    %3776 = vmatprep.subr.bf16.mxu0 0
    %3777 = vmatpush1.bf16.msra.mxu0 0
    %3778 = vmatprep.subr.bf16.mxu0 0
    %3779 = vmatpush1.bf16.msra.mxu0 0
    %3780 = vmatprep.subr.bf16.mxu0 0
    %3781 = vmatpush1.bf16.msra.mxu0 0
    %3782 = vmatprep.subr.bf16.mxu0 0
    %3783 = vmatpush1.bf16.msra.mxu0 0
    %3784 = vmatprep.subr.bf16.mxu0 0
    %3785 = vmatpush1.bf16.msra.mxu0 0
    %3786 = vmatprep.subr.bf16.mxu0 0
    %3787 = vmatpush1.bf16.msra.mxu0 0
    %3788 = vmatprep.subr.bf16.mxu0 0
    %3789 = vmatpush1.bf16.msra.mxu0 0
    %3790 = vmatprep.subr.bf16.mxu0 0
    %3791 = vmatpush1.bf16.msra.mxu0 0
    %3792 = vmatprep.subr.bf16.mxu0 0
    %3793 = vmatpush1.bf16.msra.mxu0 0
    %3794 = vmatprep.subr.bf16.mxu0 0
    %3795 = vmatpush1.bf16.msra.mxu0 0
    %3796 = vmatprep.subr.bf16.mxu0 0
    %3797 = vmatpush1.bf16.msra.mxu0 0
    %3798 = vmatprep.subr.bf16.mxu0 0
    %3799 = vmatpush1.bf16.msra.mxu0 0
    %3800 = vmatprep.mubr.bf16.mxu0 0
    %3801 = vmatmul.mubr.bf16.gmra.mrb[0].mxu0 %v3763
    %v3802 = vpop.f32.mrb[0].mxu0
    %v3803 = vadd.f32 %v3737, %v3802
    %v3804 = vpop.f32.mrb[0].mxu0
    %v3805 = vpop.f32.mrb[0].mxu0
    %v3806 = vadd.f32 %v3737, %v3805
    %v3807 = vpop.f32.mrb[0].mxu0
    %3808 = vmatprep.mubr.bf16.mxu0 0
    %3809 = vmatmul.mubr.bf16.gmra.mrb[0].mxu0 %v3766
    %v3810 = vpop.f32.mrb[0].mxu0
    %v3811 = vadd.f32 %v3737, %v3810
    %v3812 = vpop.f32.mrb[0].mxu0
    %v3813 = vpop.f32.mrb[0].mxu0
    %v3814 = vadd.f32 %v3737, %v3813
    %v3815 = vpop.f32.mrb[0].mxu0
    %3816 = vdwg.mxu0
    %vm3817 = vcmp.gt.f32.partialorder %v3803, 0.0
    %vm3818 = vcmp.gt.f32.partialorder %v3806, 0.0
    %vm3819 = vcmp.gt.f32.partialorder %v3811, 0.0
    %vm3820 = vcmp.gt.f32.partialorder %v3814, 0.0
    %v3821 = vmul.f32 %v3803, 0.01
    %v3822 = vmul.f32 %v3806, 0.01
    %v3823 = vmul.f32 %v3811, 0.01
    %v3824 = vmul.f32 %v3814, 0.01
    %v3825 = vsel %vm3817, %v3803, %v3821
    %v3826 = vsel %vm3818, %v3806, %v3822
    %v3827 = vsel %vm3819, %v3811, %v3823
    %v3828 = vsel %vm3820, %v3814, %v3824
    %v3829 = vpack.c.bf16 %v3826, %v3825
    %v3830 = vpack.c.bf16 %v3828, %v3827
    %v3831 = vld [vmem:[#allocation2 + $0x468] sm:$0xf]
    %v3832 = vld [vmem:[#allocation2 + $0x46c] sm:$0xf]
    %v3833 = vld [vmem:[#allocation2 + $0x470] sm:$0xf]
    %v3834 = vld [vmem:[#allocation2 + $0x474] sm:$0xf]
    %v3835 = vld [vmem:[%s2 + $0xe] sm:$0x1]
    %v3836 = vlaneseq
    %v3837 = vshrl.u32 %v3836, 7
    %v3838 = vsub.s32 0, %v3837
    %v3839 = vrot.slane %v3835, %v3838
    %v3844 = vunpack.c.l.b16 %v3831
    %v3845 = vunpack.c.l.b16 %v3832
    %v3846 = vunpack.c.l.b16 %v3833
    %v3847 = vunpack.c.l.b16 %v3834
    %v3848 = vpack.c.b16 %v3845, %v3844
    %v3849 = vpack.c.b16 %v3847, %v3846
    %v3853 = vsel %vm962, %v3829, 0
    %v3856 = vsel %vm962, %v3830, 0
    %3858 = vmatprep.subr.bf16.mxu0 0
    %3859 = vmatpush1.bf16.msra.mxu0 %v3848
    %3860 = vmatprep.subr.bf16.mxu0 0
    %3861 = vmatpush1.bf16.msra.mxu0 %v3849
    %3862 = vmatprep.subr.bf16.mxu0 0
    %3863 = vmatpush1.bf16.msra.mxu0 0
    %3864 = vmatprep.subr.bf16.mxu0 0
    %3865 = vmatpush1.bf16.msra.mxu0 0
    %3866 = vmatprep.subr.bf16.mxu0 0
    %3867 = vmatpush1.bf16.msra.mxu0 0
    %3868 = vmatprep.subr.bf16.mxu0 0
    %3869 = vmatpush1.bf16.msra.mxu0 0
    %3870 = vmatprep.subr.bf16.mxu0 0
    %3871 = vmatpush1.bf16.msra.mxu0 0
    %3872 = vmatprep.subr.bf16.mxu0 0
    %3873 = vmatpush1.bf16.msra.mxu0 0
    %3874 = vmatprep.subr.bf16.mxu0 0
    %3875 = vmatpush1.bf16.msra.mxu0 0
    %3876 = vmatprep.subr.bf16.mxu0 0
    %3877 = vmatpush1.bf16.msra.mxu0 0
    %3878 = vmatprep.subr.bf16.mxu0 0
    %3879 = vmatpush1.bf16.msra.mxu0 0
    %3880 = vmatprep.subr.bf16.mxu0 0
    %3881 = vmatpush1.bf16.msra.mxu0 0
    %3882 = vmatprep.subr.bf16.mxu0 0
    %3883 = vmatpush1.bf16.msra.mxu0 0
    %3884 = vmatprep.subr.bf16.mxu0 0
    %3885 = vmatpush1.bf16.msra.mxu0 0
    %3886 = vmatprep.subr.bf16.mxu0 0
    %3887 = vmatpush1.bf16.msra.mxu0 0
    %3888 = vmatprep.subr.bf16.mxu0 0
    %3889 = vmatpush1.bf16.msra.mxu0 0
    %3890 = vmatprep.mubr.bf16.mxu0 0
    %3891 = vmatmul.mubr.bf16.gmra.mrb[0].mxu0 %v3853
    %v3892 = vpop.f32.mrb[0].mxu0
    %v3893 = vadd.f32 %v3839, %v3892
    %v3894 = vpop.f32.mrb[0].mxu0
    %v3895 = vpop.f32.mrb[0].mxu0
    %v3896 = vadd.f32 %v3839, %v3895
    %v3897 = vpop.f32.mrb[0].mxu0
    %3898 = vmatprep.mubr.bf16.mxu0 0
    %3899 = vmatmul.mubr.bf16.gmra.mrb[0].mxu0 %v3856
    %v3900 = vpop.f32.mrb[0].mxu0
    %v3901 = vadd.f32 %v3839, %v3900
    %v3902 = vpop.f32.mrb[0].mxu0
    %v3903 = vpop.f32.mrb[0].mxu0
    %v3904 = vadd.f32 %v3839, %v3903
    %v3905 = vpop.f32.mrb[0].mxu0
    %3906 = vdwg.mxu0
    %v3907 = vxor.u32 %v3893, 2147483648
    %v3908 = vxor.u32 %v3896, 2147483648
    %v3909 = vxor.u32 %v3901, 2147483648
    %v3910 = vxor.u32 %v3904, 2147483648
    %v3911 = vmul.f32 %v3907, 1.442695
    %v3912 = vpow.pop %v3911
    %v3913 = vmul.f32 %v3908, 1.442695
    %v3914 = vpow.pop %v3913
    %v3915 = vmul.f32 %v3909, 1.442695
    %v3916 = vpow.pop %v3915
    %v3917 = vmul.f32 %v3910, 1.442695
    %v3918 = vpow.pop %v3917
    %v3919 = vadd.f32 %v3912, 1.0
    %v3920 = vadd.f32 %v3914, 1.0
    %v3921 = vadd.f32 %v3916, 1.0
    %v3922 = vadd.f32 %v3918, 1.0
    %v3923 = vrcp.pop %v3919
    %v3924 = vmul.f32 1.0, %v3923
    %v3925 = vrcp.pop %v3920
    %v3926 = vmul.f32 1.0, %v3925
    %v3927 = vrcp.pop %v3921
    %v3928 = vmul.f32 1.0, %v3927
    %v3929 = vrcp.pop %v3922
    %v3930 = vmul.f32 1.0, %v3929
    %vm3931 = vcmask 7168
    %3932 = vst.msk [vmem:[%s3] sm:$0xff] %vm3931, %v3924
    %3933 = vst.msk [vmem:[%s3 + $0x8] sm:$0xff] %vm3931, %v3926
    %3934 = vst.msk [vmem:[%s3 + $0x10] sm:$0xff] %vm3931, %v3928
    %3935 = vst.msk [vmem:[%s3 + $0x18] sm:$0xff] %vm3931, %v3930
    // Predicated region
    $region18: #{forward.1} parent=1 // pred_check
      _
    $region19: #{forward.1} parent=1 // pred_check_branch
      %3937 = sbr.rel (0) target = $region21
    $region20: #{forward.1} parent=1 // pred_region
      _
    $region21: #{forward.1} parent=1 // pred_fallthru
      _
    // Predicated region
    $region22: #{forward.1} parent=1 // pred_check
      _
    $region23: #{forward.1} parent=1 // pred_check_branch
      %3939 = sbr.rel (0) target = $region25
    $region24: #{forward.1} parent=1 // pred_region
      _
    $region25: #{forward.1} parent=1 // pred_fallthru
      _
    %3940 = vsyncpa [#allocation3], 1

</llo_original>
